<compile_context>
chip_gen: v7x
topology: tpu7x:2x2x1
jax: 0.10.0
libtpu: 0.0.40
codegen_flags: <defaults>
</compile_context>

<pallas_src>
import math

import numpy as np

import jax
import jax.numpy as jnp
from jax import lax
from jax.experimental import pallas as pl
from jax.experimental.pallas import tpu as pltpu


def _make_lstm_kernel(T, BT, D, H, Op, L, unroll):
    """Kernel for fixed (T, batch_tile, D, H, padded_output, num_layers)."""

    def kernel(*refs):
        idx = 0
        x_ref = refs[idx]; idx += 1           # (T, BT, D)
        mask_ref = refs[idx]; idx += 1        # (T, BT, 1)
        layers = []
        for _ in range(L):
            layers.append((refs[idx], refs[idx + 1], refs[idx + 2]))
            idx += 3                          # w_ih^T (Din,4H), w_hh^T (H,4H), bias (1,4H)
        w_out_ref = refs[idx]; idx += 1       # (H, Op)
        b_out_ref = refs[idx]; idx += 1       # (1, Op)
        out_ref = refs[idx]; idx += 1         # (T, BT, Op)
        gx_scr = refs[idx]; idx += 1          # (T*BT, 4H) hoisted input projection
        seq_scr = refs[idx]; idx += 1         # (T*BT, H)  per-layer output sequence

        x_flat = x_ref[...].reshape(T * BT, D)          # (T*BT, D)

        for l in range(L):
            w_ih_ref, w_hh_ref, b_ref = layers[l]
            w_hh = w_hh_ref[...]                        # (H, 4H)

            # ---- hoisted, non-recurrent input projection + bias fold ----
            layer_in = x_flat if l == 0 else seq_scr[...]
            gx_scr[...] = (jnp.dot(layer_in, w_ih_ref[...],
                                   preferred_element_type=jnp.float32)
                           + b_ref[...])                # (T*BT, 4H)

            # ---- serial recurrence: only h @ W_hh stays on the chain ----
            def step(t, carry, w_hh=w_hh):
                h, c = carry
                row = pl.multiple_of(t * BT, BT)
                gates = (gx_scr[pl.ds(row, BT), :]
                         + jnp.dot(h, w_hh, preferred_element_type=jnp.float32))
                # gate order is [i, f, o, g] (repacked in the wrapper)
                sig = jax.nn.sigmoid(gates[:, :3 * H])
                g_g = jnp.tanh(gates[:, 3 * H:])
                i_g = sig[:, :H]
                f_g = sig[:, H:2 * H]
                o_g = sig[:, 2 * H:3 * H]
                c_new = f_g * c + i_g * g_g
                h_new = o_g * jnp.tanh(c_new)
                seq_scr[pl.ds(row, BT), :] = h_new
                return (h_new, c_new)

            h0 = jnp.zeros((BT, H), jnp.float32)
            c0 = jnp.zeros((BT, H), jnp.float32)
            lax.fori_loop(0, T, step, (h0, c0), unroll=unroll)

        # ---- mask padded steps (pad_packed_sequence) + fused Linear head ----
        masked = seq_scr[...] * mask_ref[...].reshape(T * BT, 1)     # (T*BT, H)
        out = (jnp.dot(masked, w_out_ref[...],
                       preferred_element_type=jnp.float32)
               + b_out_ref[...])                                     # (T*BT, Op)
        out_ref[...] = out.reshape(T, BT, Op)

    return kernel


def _reorder_gates(w):
    """PyTorch packs gates [i, f, g, o] along axis 0; repack to [i, f, o, g]."""
    i, f, g, o = jnp.split(w, 4, axis=0)
    return jnp.concatenate([i, f, o, g], axis=0)


def _pick_batch_tile(B, T, D, H, Op):
    """Largest sublane-aligned batch tile (<=128) whose per-tile VMEM stays bounded."""
    bt = min(128, ((B + 7) // 8) * 8)
    bt = max(8, (bt // 8) * 8)

    def footprint(bt):
        # double-buffered x/mask/out blocks + resident scratches (f32)
        blocks = 2 * 4 * (T * bt * D + T * bt + T * bt * Op)
        scratch = 4 * (T * bt * 4 * H + T * bt * H)
        return blocks + scratch

    while bt > 8 and footprint(bt) > 24 * 1024 * 1024:
        bt -= 8
    return bt


def lstm_pred_forward(x, lengths, params):
    """x: (B, T, input_size) f32 (batch_first), lengths: (B,) int32 sorted descending."""
    B, T, D = x.shape
    H = params["hidden_dim"]
    L = params["hidden_layers"]
    O = params["output_size"]

    Op = ((O + 127) // 128) * 128                          # lane-dense output
    BT = _pick_batch_tile(B, T, D, H, Op)                  # sublane-aligned batch tile
    Bp = ((B + BT - 1) // BT) * BT                         # batch padded to tile
    nb = Bp // BT

    x_tm = jnp.transpose(x, (1, 0, 2)).astype(jnp.float32)  # (T, B, D) time-major
    lengths_p = lengths.astype(jnp.int32)
    if Bp != B:
        x_tm = jnp.pad(x_tm, ((0, 0), (0, Bp - B), (0, 0)))
        lengths_p = jnp.pad(lengths_p, (0, Bp - B))          # pad rows -> length 0
    mask = (jnp.arange(T, dtype=jnp.int32)[:, None]
            < lengths_p[None, :]).astype(jnp.float32)[:, :, None]   # (T, Bp, 1)

    inputs = [x_tm, mask]
    in_specs = [
        pl.BlockSpec((T, BT, D), lambda b: (0, b, 0)),
        pl.BlockSpec((T, BT, 1), lambda b: (0, b, 0)),
    ]

    dins = []
    for l in range(L):
        w_ih, w_hh, b_ih, b_hh = params["layers"][l]
        din = w_ih.shape[1]
        dins.append(din)
        w_ih_t = jnp.transpose(_reorder_gates(w_ih))          # (Din, 4H)
        w_hh_t = jnp.transpose(_reorder_gates(w_hh))          # (H, 4H)
        bias = _reorder_gates(b_ih + b_hh)[None, :]            # (1, 4H)
        inputs += [w_ih_t, w_hh_t, bias]
        in_specs += [
            pl.BlockSpec((din, 4 * H), lambda b: (0, 0)),
            pl.BlockSpec((H, 4 * H), lambda b: (0, 0)),
            pl.BlockSpec((1, 4 * H), lambda b: (0, 0)),
        ]

    w_out_p = jnp.pad(jnp.transpose(params["w_out"]), ((0, 0), (0, Op - O)))  # (H, Op)
    b_out_p = jnp.pad(params["b_out"], (0, Op - O))[None, :]                  # (1, Op)
    inputs += [w_out_p, b_out_p]
    in_specs += [
        pl.BlockSpec((H, Op), lambda b: (0, 0)),
        pl.BlockSpec((1, Op), lambda b: (0, 0)),
    ]

    unroll = True if T <= 16 else 8
    kernel = _make_lstm_kernel(T, BT, D, H, Op, L, unroll)

    # cost estimate (advisory)
    flops = 2 * T * Bp * H * Op
    for din in dins:
        flops += 2 * T * Bp * 4 * H * (din + H)
    transcendentals = 5 * L * T * Bp * H
    bytes_accessed = 4 * int(sum(int(a.size) for a in inputs) + T * Bp * Op)
    cost = pl.CostEstimate(flops=int(flops),
                           transcendentals=int(transcendentals),
                           bytes_accessed=bytes_accessed)

    # explicit VMEM budget: double-buffered blocked I/O + whole weights + scratch
    block_bytes = 4 * (T * BT * D + T * BT * 1 + T * BT * Op)
    weight_bytes = 4 * int(sum(int(a.size) for a in inputs[2:]))
    scratch_bytes = 4 * (T * BT * 4 * H + T * BT * H)
    vmem_budget = min(48 * 1024 * 1024,
                      max(2 * (block_bytes + weight_bytes) + scratch_bytes
                          + 8 * 1024 * 1024,
                          16 * 1024 * 1024))

    out_tm = pl.pallas_call(
        kernel,
        grid=(nb,),
        out_shape=jax.ShapeDtypeStruct((T, Bp, Op), jnp.float32),
        in_specs=in_specs,
        out_specs=pl.BlockSpec((T, BT, Op), lambda b: (0, b, 0)),
        scratch_shapes=[
            pltpu.VMEM((T * BT, 4 * H), jnp.float32),   # hoisted gates_x
            pltpu.VMEM((T * BT, H), jnp.float32),       # per-layer sequence
        ],
        compiler_params=pltpu.CompilerParams(
            dimension_semantics=("parallel",),
            vmem_limit_bytes=int(vmem_budget)),
        cost_estimate=cost,
    )(*inputs)

    # un-pad and return batch-first
    return jnp.transpose(out_tm[:, :B, :O], (1, 0, 2))        # (B, T, O)


# ---------------- deterministic parameter init (mirrors nn.LSTM/nn.Linear shapes) ----------------
def init_params(key, hidden_dim, hidden_layers, input_size, output_size):
    k = 1.0 / math.sqrt(hidden_dim)
    keys = jax.random.split(key, hidden_layers * 4 + 2)
    ki = 0
    layers = []
    for l in range(hidden_layers):
        din = input_size if l == 0 else hidden_dim
        w_ih = jax.random.uniform(keys[ki], (4 * hidden_dim, din), jnp.float32, -k, k); ki += 1
        w_hh = jax.random.uniform(keys[ki], (4 * hidden_dim, hidden_dim), jnp.float32, -k, k); ki += 1
        b_ih = jax.random.uniform(keys[ki], (4 * hidden_dim,), jnp.float32, -k, k); ki += 1
        b_hh = jax.random.uniform(keys[ki], (4 * hidden_dim,), jnp.float32, -k, k); ki += 1
        layers.append((w_ih, w_hh, b_ih, b_hh))
    w_out = jax.random.uniform(keys[ki], (output_size, hidden_dim), jnp.float32, -k, k); ki += 1
    b_out = jax.random.uniform(keys[ki], (output_size,), jnp.float32, -k, k)
    return {"hidden_dim": hidden_dim, "hidden_layers": hidden_layers,
            "input_size": input_size, "output_size": output_size,
            "layers": layers, "w_out": w_out, "b_out": b_out}


# ---------------- pure-JAX reference (PyTorch LSTM semantics, original gate order) ----------------
def lstm_pred_reference(x, lengths, params):
    B, T, _ = x.shape
    H = params["hidden_dim"]
    seq = x
    for (w_ih, w_hh, b_ih, b_hh) in params["layers"]:
        h = jnp.zeros((B, H), jnp.float32)
        c = jnp.zeros((B, H), jnp.float32)
        outs = []
        for t in range(T):
            gates = seq[:, t, :] @ w_ih.T + h @ w_hh.T + b_ih + b_hh
            i = jax.nn.sigmoid(gates[:, :H])
            f = jax.nn.sigmoid(gates[:, H:2 * H])
            g = jnp.tanh(gates[:, 2 * H:3 * H])
            o = jax.nn.sigmoid(gates[:, 3 * H:4 * H])
            c = f * c + i * g
            h = o * jnp.tanh(c)
            outs.append(h)
        seq = jnp.stack(outs, axis=1)
    mask = (jnp.arange(T)[None, :] < lengths[:, None]).astype(jnp.float32)[:, :, None]
    seq = seq * mask
    return seq @ params["w_out"].T + params["b_out"]


if __name__ == "__main__":
    B, T = 4, 8
    hidden_dim, hidden_layers, input_size, output_size = 32, 2, 16, 8

    key = jax.random.PRNGKey(0)
    pkey, xkey = jax.random.split(key)
    params = init_params(pkey, hidden_dim, hidden_layers, input_size, output_size)

    x = jax.random.normal(xkey, (B, T, input_size), jnp.float32)
    # pack_padded_sequence(enforce_sorted=True) expects descending lengths, lengths[0] == T
    lengths = jnp.array([8, 7, 5, 3], dtype=jnp.int32)

    out = lstm_pred_forward(x, lengths, params)
    out = jax.block_until_ready(out)

    ref = lstm_pred_reference(x, lengths, params)
    assert out.shape == (B, T, output_size)
    np.testing.assert_allclose(np.asarray(out), np.asarray(ref), rtol=1e-4, atol=1e-4)
    print("KERNEL_OK")
</pallas_src>

<mosaic_0001>
module attributes {stable_mosaic.version = 11 : i64} {
  func.func @kernel(%arg0: i32, %arg1: memref<8x8x16xf32, #tpu.memory_space<vmem>>, %arg2: memref<8x8x1xf32, #tpu.memory_space<vmem>>, %arg3: memref<16x128xf32, #tpu.memory_space<vmem>>, %arg4: memref<32x128xf32, #tpu.memory_space<vmem>>, %arg5: memref<1x128xf32, #tpu.memory_space<vmem>>, %arg6: memref<32x128xf32, #tpu.memory_space<vmem>>, %arg7: memref<32x128xf32, #tpu.memory_space<vmem>>, %arg8: memref<1x128xf32, #tpu.memory_space<vmem>>, %arg9: memref<32x128xf32, #tpu.memory_space<vmem>>, %arg10: memref<1x128xf32, #tpu.memory_space<vmem>>, %arg11: memref<8x8x128xf32, #tpu.memory_space<vmem>>, %arg12: memref<64x128xf32, #tpu.memory_space<vmem>>, %arg13: memref<64x32xf32, #tpu.memory_space<vmem>>) attributes {dimension_semantics = [#tpu.dimension_semantics<parallel>], iteration_bounds = array<i64: 1>, scalar_prefetch = 0 : i64, scratch_operands = 2 : i64, tpu.core_type = #tpu.core_type<tc>, window_params = [{transform_indices = @transform_0, window_bounds = array<i64: 8, 8, 16>}, {transform_indices = @transform_1, window_bounds = array<i64: 8, 8, 1>}, {pipeline_mode = #tpu.pipeline_mode<synchronous>, transform_indices = @transform_2, window_bounds = array<i64: 16, 128>}, {pipeline_mode = #tpu.pipeline_mode<synchronous>, transform_indices = @transform_3, window_bounds = array<i64: 32, 128>}, {pipeline_mode = #tpu.pipeline_mode<synchronous>, transform_indices = @transform_4, window_bounds = array<i64: 1, 128>}, {pipeline_mode = #tpu.pipeline_mode<synchronous>, transform_indices = @transform_5, window_bounds = array<i64: 32, 128>}, {pipeline_mode = #tpu.pipeline_mode<synchronous>, transform_indices = @transform_6, window_bounds = array<i64: 32, 128>}, {pipeline_mode = #tpu.pipeline_mode<synchronous>, transform_indices = @transform_7, window_bounds = array<i64: 1, 128>}, {pipeline_mode = #tpu.pipeline_mode<synchronous>, transform_indices = @transform_8, window_bounds = array<i64: 32, 128>}, {pipeline_mode = #tpu.pipeline_mode<synchronous>, transform_indices = @transform_9, window_bounds = array<i64: 1, 128>}, {transform_indices = @transform_10, window_bounds = array<i64: 8, 8, 128>}]} {
    %c0 = arith.constant 0 : index
    %c0_0 = arith.constant 0 : index
    %c0_1 = arith.constant 0 : index
    %0 = vector.load %arg1[%c0, %c0_0, %c0_1] : memref<8x8x16xf32, #tpu.memory_space<vmem>>, vector<8x8x16xf32>
    %1 = vector.shape_cast %0 : vector<8x8x16xf32> to vector<64x16xf32>
    %c0_2 = arith.constant 0 : index
    %c0_3 = arith.constant 0 : index
    %2 = vector.load %arg4[%c0_2, %c0_3] : memref<32x128xf32, #tpu.memory_space<vmem>>, vector<32x128xf32>
    %c0_4 = arith.constant 0 : index
    %c0_5 = arith.constant 0 : index
    %3 = vector.load %arg3[%c0_4, %c0_5] : memref<16x128xf32, #tpu.memory_space<vmem>>, vector<16x128xf32>
    %cst = arith.constant dense<0.000000e+00> : vector<64x128xf32>
    %4 = tpu.matmul %1, %3, %cst {dimension_numbers = #tpu.dot_dimension_numbers<[1], [0], [0], [1], [0, 0, 1, 1], [], []>} : vector<64x16xf32>, vector<16x128xf32>, vector<64x128xf32> -> vector<64x128xf32>
    %c0_6 = arith.constant 0 : index
    %c0_7 = arith.constant 0 : index
    %5 = vector.load %arg5[%c0_6, %c0_7] : memref<1x128xf32, #tpu.memory_space<vmem>>, vector<1x128xf32>
    %6 = vector.broadcast %5 : vector<1x128xf32> to vector<64x128xf32>
    %7 = arith.addf %4, %6 : vector<64x128xf32>
    %c0_8 = arith.constant 0 : index
    %c0_9 = arith.constant 0 : index
    %8 = vector.load %arg12[%c0_8, %c0_9] : memref<64x128xf32, #tpu.memory_space<vmem>>, vector<64x128xf32>
    tpu.vector_store %arg12[%c0_8, %c0_9], %7 {strides = array<i32>} : memref<64x128xf32, #tpu.memory_space<vmem>>, vector<64x128xf32>,
    %cst_10 = arith.constant 0.000000e+00 : f32
    %9 = vector.broadcast %cst_10 : f32 to vector<8x32xf32>
    %cst_11 = arith.constant 0.000000e+00 : f32
    %10 = vector.broadcast %cst_11 : f32 to vector<8x32xf32>
    %c0_i32 = arith.constant 0 : i32
    %c8_i32 = arith.constant 8 : i32
    %11 = arith.muli %c0_i32, %c8_i32 : i32
    %12 = tpu.assume_multiple %11, 8 : i32
    %13 = arith.index_cast %12 : i32 to index
    %c0_12 = arith.constant 0 : index
    %14 = vector.load %arg12[%13, %c0_12] : memref<64x128xf32, #tpu.memory_space<vmem>>, vector<8x128xf32>
    %cst_13 = arith.constant dense<0.000000e+00> : vector<8x128xf32>
    %15 = tpu.matmul %9, %2, %cst_13 {dimension_numbers = #tpu.dot_dimension_numbers<[1], [0], [0], [1], [0, 0, 1, 1], [], []>} : vector<8x32xf32>, vector<32x128xf32>, vector<8x128xf32> -> vector<8x128xf32>
    %16 = arith.addf %14, %15 : vector<8x128xf32>
    %17 = vector.extract_strided_slice %16 {offsets = [0, 0], sizes = [8, 96], strides = [1, 1]} : vector<8x128xf32> to vector<8x96xf32>
    %18 = arith.negf %17 : vector<8x96xf32>
    %19 = math.exp %18 : vector<8x96xf32>
    %cst_14 = arith.constant 1.000000e+00 : f32
    %20 = vector.broadcast %cst_14 : f32 to vector<8x96xf32>
    %21 = arith.addf %20, %19 : vector<8x96xf32>
    %22 = arith.divf %20, %21 : vector<8x96xf32>
    %23 = vector.extract_strided_slice %16 {offsets = [0, 96], sizes = [8, 32], strides = [1, 1]} : vector<8x128xf32> to vector<8x32xf32>
    %24 = math.tanh %23 : vector<8x32xf32>
    %25 = vector.extract_strided_slice %22 {offsets = [0, 0], sizes = [8, 32], strides = [1, 1]} : vector<8x96xf32> to vector<8x32xf32>
    %26 = vector.extract_strided_slice %22 {offsets = [0, 32], sizes = [8, 32], strides = [1, 1]} : vector<8x96xf32> to vector<8x32xf32>
    %27 = vector.extract_strided_slice %22 {offsets = [0, 64], sizes = [8, 32], strides = [1, 1]} : vector<8x96xf32> to vector<8x32xf32>
    %28 = arith.mulf %26, %10 : vector<8x32xf32>
    %29 = arith.mulf %25, %24 : vector<8x32xf32>
    %30 = arith.addf %28, %29 : vector<8x32xf32>
    %31 = math.tanh %30 : vector<8x32xf32>
    %32 = arith.mulf %27, %31 : vector<8x32xf32>
    %33 = arith.index_cast %12 : i32 to index
    %c0_15 = arith.constant 0 : index
    %34 = vector.load %arg13[%33, %c0_15] : memref<64x32xf32, #tpu.memory_space<vmem>>, vector<8x32xf32>
    tpu.vector_store %arg13[%33, %c0_15], %32 {strides = array<i32>} : memref<64x32xf32, #tpu.memory_space<vmem>>, vector<8x32xf32>,
    %c1_i32 = arith.constant 1 : i32
    %c8_i32_16 = arith.constant 8 : i32
    %35 = arith.muli %c1_i32, %c8_i32_16 : i32
    %36 = tpu.assume_multiple %35, 8 : i32
    %37 = arith.index_cast %36 : i32 to index
    %c0_17 = arith.constant 0 : index
    %38 = vector.load %arg12[%37, %c0_17] : memref<64x128xf32, #tpu.memory_space<vmem>>, vector<8x128xf32>
    %cst_18 = arith.constant dense<0.000000e+00> : vector<8x128xf32>
    %39 = tpu.matmul %32, %2, %cst_18 {dimension_numbers = #tpu.dot_dimension_numbers<[1], [0], [0], [1], [0, 0, 1, 1], [], []>} : vector<8x32xf32>, vector<32x128xf32>, vector<8x128xf32> -> vector<8x128xf32>
    %40 = arith.addf %38, %39 : vector<8x128xf32>
    %41 = vector.extract_strided_slice %40 {offsets = [0, 0], sizes = [8, 96], strides = [1, 1]} : vector<8x128xf32> to vector<8x96xf32>
    %42 = arith.negf %41 : vector<8x96xf32>
    %43 = math.exp %42 : vector<8x96xf32>
    %cst_19 = arith.constant 1.000000e+00 : f32
    %44 = vector.broadcast %cst_19 : f32 to vector<8x96xf32>
    %45 = arith.addf %44, %43 : vector<8x96xf32>
    %46 = arith.divf %44, %45 : vector<8x96xf32>
    %47 = vector.extract_strided_slice %40 {offsets = [0, 96], sizes = [8, 32], strides = [1, 1]} : vector<8x128xf32> to vector<8x32xf32>
    %48 = math.tanh %47 : vector<8x32xf32>
    %49 = vector.extract_strided_slice %46 {offsets = [0, 0], sizes = [8, 32], strides = [1, 1]} : vector<8x96xf32> to vector<8x32xf32>
    %50 = vector.extract_strided_slice %46 {offsets = [0, 32], sizes = [8, 32], strides = [1, 1]} : vector<8x96xf32> to vector<8x32xf32>
    %51 = vector.extract_strided_slice %46 {offsets = [0, 64], sizes = [8, 32], strides = [1, 1]} : vector<8x96xf32> to vector<8x32xf32>
    %52 = arith.mulf %50, %30 : vector<8x32xf32>
    %53 = arith.mulf %49, %48 : vector<8x32xf32>
    %54 = arith.addf %52, %53 : vector<8x32xf32>
    %55 = math.tanh %54 : vector<8x32xf32>
    %56 = arith.mulf %51, %55 : vector<8x32xf32>
    %57 = arith.index_cast %36 : i32 to index
    %c0_20 = arith.constant 0 : index
    %58 = vector.load %arg13[%57, %c0_20] : memref<64x32xf32, #tpu.memory_space<vmem>>, vector<8x32xf32>
    tpu.vector_store %arg13[%57, %c0_20], %56 {strides = array<i32>} : memref<64x32xf32, #tpu.memory_space<vmem>>, vector<8x32xf32>,
    %c2_i32 = arith.constant 2 : i32
    %c8_i32_21 = arith.constant 8 : i32
    %59 = arith.muli %c2_i32, %c8_i32_21 : i32
    %60 = tpu.assume_multiple %59, 8 : i32
    %61 = arith.index_cast %60 : i32 to index
    %c0_22 = arith.constant 0 : index
    %62 = vector.load %arg12[%61, %c0_22] : memref<64x128xf32, #tpu.memory_space<vmem>>, vector<8x128xf32>
    %cst_23 = arith.constant dense<0.000000e+00> : vector<8x128xf32>
    %63 = tpu.matmul %56, %2, %cst_23 {dimension_numbers = #tpu.dot_dimension_numbers<[1], [0], [0], [1], [0, 0, 1, 1], [], []>} : vector<8x32xf32>, vector<32x128xf32>, vector<8x128xf32> -> vector<8x128xf32>
    %64 = arith.addf %62, %63 : vector<8x128xf32>
    %65 = vector.extract_strided_slice %64 {offsets = [0, 0], sizes = [8, 96], strides = [1, 1]} : vector<8x128xf32> to vector<8x96xf32>
    %66 = arith.negf %65 : vector<8x96xf32>
    %67 = math.exp %66 : vector<8x96xf32>
    %cst_24 = arith.constant 1.000000e+00 : f32
    %68 = vector.broadcast %cst_24 : f32 to vector<8x96xf32>
    %69 = arith.addf %68, %67 : vector<8x96xf32>
    %70 = arith.divf %68, %69 : vector<8x96xf32>
    %71 = vector.extract_strided_slice %64 {offsets = [0, 96], sizes = [8, 32], strides = [1, 1]} : vector<8x128xf32> to vector<8x32xf32>
    %72 = math.tanh %71 : vector<8x32xf32>
    %73 = vector.extract_strided_slice %70 {offsets = [0, 0], sizes = [8, 32], strides = [1, 1]} : vector<8x96xf32> to vector<8x32xf32>
    %74 = vector.extract_strided_slice %70 {offsets = [0, 32], sizes = [8, 32], strides = [1, 1]} : vector<8x96xf32> to vector<8x32xf32>
    %75 = vector.extract_strided_slice %70 {offsets = [0, 64], sizes = [8, 32], strides = [1, 1]} : vector<8x96xf32> to vector<8x32xf32>
    %76 = arith.mulf %74, %54 : vector<8x32xf32>
    %77 = arith.mulf %73, %72 : vector<8x32xf32>
    %78 = arith.addf %76, %77 : vector<8x32xf32>
    %79 = math.tanh %78 : vector<8x32xf32>
    %80 = arith.mulf %75, %79 : vector<8x32xf32>
    %81 = arith.index_cast %60 : i32 to index
    %c0_25 = arith.constant 0 : index
    %82 = vector.load %arg13[%81, %c0_25] : memref<64x32xf32, #tpu.memory_space<vmem>>, vector<8x32xf32>
    tpu.vector_store %arg13[%81, %c0_25], %80 {strides = array<i32>} : memref<64x32xf32, #tpu.memory_space<vmem>>, vector<8x32xf32>,
    %c3_i32 = arith.constant 3 : i32
    %c8_i32_26 = arith.constant 8 : i32
    %83 = arith.muli %c3_i32, %c8_i32_26 : i32
    %84 = tpu.assume_multiple %83, 8 : i32
    %85 = arith.index_cast %84 : i32 to index
    %c0_27 = arith.constant 0 : index
    %86 = vector.load %arg12[%85, %c0_27] : memref<64x128xf32, #tpu.memory_space<vmem>>, vector<8x128xf32>
    %cst_28 = arith.constant dense<0.000000e+00> : vector<8x128xf32>
    %87 = tpu.matmul %80, %2, %cst_28 {dimension_numbers = #tpu.dot_dimension_numbers<[1], [0], [0], [1], [0, 0, 1, 1], [], []>} : vector<8x32xf32>, vector<32x128xf32>, vector<8x128xf32> -> vector<8x128xf32>
    %88 = arith.addf %86, %87 : vector<8x128xf32>
    %89 = vector.extract_strided_slice %88 {offsets = [0, 0], sizes = [8, 96], strides = [1, 1]} : vector<8x128xf32> to vector<8x96xf32>
    %90 = arith.negf %89 : vector<8x96xf32>
    %91 = math.exp %90 : vector<8x96xf32>
    %cst_29 = arith.constant 1.000000e+00 : f32
    %92 = vector.broadcast %cst_29 : f32 to vector<8x96xf32>
    %93 = arith.addf %92, %91 : vector<8x96xf32>
    %94 = arith.divf %92, %93 : vector<8x96xf32>
    %95 = vector.extract_strided_slice %88 {offsets = [0, 96], sizes = [8, 32], strides = [1, 1]} : vector<8x128xf32> to vector<8x32xf32>
    %96 = math.tanh %95 : vector<8x32xf32>
    %97 = vector.extract_strided_slice %94 {offsets = [0, 0], sizes = [8, 32], strides = [1, 1]} : vector<8x96xf32> to vector<8x32xf32>
    %98 = vector.extract_strided_slice %94 {offsets = [0, 32], sizes = [8, 32], strides = [1, 1]} : vector<8x96xf32> to vector<8x32xf32>
    %99 = vector.extract_strided_slice %94 {offsets = [0, 64], sizes = [8, 32], strides = [1, 1]} : vector<8x96xf32> to vector<8x32xf32>
    %100 = arith.mulf %98, %78 : vector<8x32xf32>
    %101 = arith.mulf %97, %96 : vector<8x32xf32>
    %102 = arith.addf %100, %101 : vector<8x32xf32>
    %103 = math.tanh %102 : vector<8x32xf32>
    %104 = arith.mulf %99, %103 : vector<8x32xf32>
    %105 = arith.index_cast %84 : i32 to index
    %c0_30 = arith.constant 0 : index
    %106 = vector.load %arg13[%105, %c0_30] : memref<64x32xf32, #tpu.memory_space<vmem>>, vector<8x32xf32>
    tpu.vector_store %arg13[%105, %c0_30], %104 {strides = array<i32>} : memref<64x32xf32, #tpu.memory_space<vmem>>, vector<8x32xf32>,
    %c4_i32 = arith.constant 4 : i32
    %c8_i32_31 = arith.constant 8 : i32
    %107 = arith.muli %c4_i32, %c8_i32_31 : i32
    %108 = tpu.assume_multiple %107, 8 : i32
    %109 = arith.index_cast %108 : i32 to index
    %c0_32 = arith.constant 0 : index
    %110 = vector.load %arg12[%109, %c0_32] : memref<64x128xf32, #tpu.memory_space<vmem>>, vector<8x128xf32>
    %cst_33 = arith.constant dense<0.000000e+00> : vector<8x128xf32>
    %111 = tpu.matmul %104, %2, %cst_33 {dimension_numbers = #tpu.dot_dimension_numbers<[1], [0], [0], [1], [0, 0, 1, 1], [], []>} : vector<8x32xf32>, vector<32x128xf32>, vector<8x128xf32> -> vector<8x128xf32>
    %112 = arith.addf %110, %111 : vector<8x128xf32>
    %113 = vector.extract_strided_slice %112 {offsets = [0, 0], sizes = [8, 96], strides = [1, 1]} : vector<8x128xf32> to vector<8x96xf32>
    %114 = arith.negf %113 : vector<8x96xf32>
    %115 = math.exp %114 : vector<8x96xf32>
    %cst_34 = arith.constant 1.000000e+00 : f32
    %116 = vector.broadcast %cst_34 : f32 to vector<8x96xf32>
    %117 = arith.addf %116, %115 : vector<8x96xf32>
    %118 = arith.divf %116, %117 : vector<8x96xf32>
    %119 = vector.extract_strided_slice %112 {offsets = [0, 96], sizes = [8, 32], strides = [1, 1]} : vector<8x128xf32> to vector<8x32xf32>
    %120 = math.tanh %119 : vector<8x32xf32>
    %121 = vector.extract_strided_slice %118 {offsets = [0, 0], sizes = [8, 32], strides = [1, 1]} : vector<8x96xf32> to vector<8x32xf32>
    %122 = vector.extract_strided_slice %118 {offsets = [0, 32], sizes = [8, 32], strides = [1, 1]} : vector<8x96xf32> to vector<8x32xf32>
    %123 = vector.extract_strided_slice %118 {offsets = [0, 64], sizes = [8, 32], strides = [1, 1]} : vector<8x96xf32> to vector<8x32xf32>
    %124 = arith.mulf %122, %102 : vector<8x32xf32>
    %125 = arith.mulf %121, %120 : vector<8x32xf32>
    %126 = arith.addf %124, %125 : vector<8x32xf32>
    %127 = math.tanh %126 : vector<8x32xf32>
    %128 = arith.mulf %123, %127 : vector<8x32xf32>
    %129 = arith.index_cast %108 : i32 to index
    %c0_35 = arith.constant 0 : index
    %130 = vector.load %arg13[%129, %c0_35] : memref<64x32xf32, #tpu.memory_space<vmem>>, vector<8x32xf32>
    tpu.vector_store %arg13[%129, %c0_35], %128 {strides = array<i32>} : memref<64x32xf32, #tpu.memory_space<vmem>>, vector<8x32xf32>,
    %c5_i32 = arith.constant 5 : i32
    %c8_i32_36 = arith.constant 8 : i32
    %131 = arith.muli %c5_i32, %c8_i32_36 : i32
    %132 = tpu.assume_multiple %131, 8 : i32
    %133 = arith.index_cast %132 : i32 to index
    %c0_37 = arith.constant 0 : index
    %134 = vector.load %arg12[%133, %c0_37] : memref<64x128xf32, #tpu.memory_space<vmem>>, vector<8x128xf32>
    %cst_38 = arith.constant dense<0.000000e+00> : vector<8x128xf32>
    %135 = tpu.matmul %128, %2, %cst_38 {dimension_numbers = #tpu.dot_dimension_numbers<[1], [0], [0], [1], [0, 0, 1, 1], [], []>} : vector<8x32xf32>, vector<32x128xf32>, vector<8x128xf32> -> vector<8x128xf32>
    %136 = arith.addf %134, %135 : vector<8x128xf32>
    %137 = vector.extract_strided_slice %136 {offsets = [0, 0], sizes = [8, 96], strides = [1, 1]} : vector<8x128xf32> to vector<8x96xf32>
    %138 = arith.negf %137 : vector<8x96xf32>
    %139 = math.exp %138 : vector<8x96xf32>
    %cst_39 = arith.constant 1.000000e+00 : f32
    %140 = vector.broadcast %cst_39 : f32 to vector<8x96xf32>
    %141 = arith.addf %140, %139 : vector<8x96xf32>
    %142 = arith.divf %140, %141 : vector<8x96xf32>
    %143 = vector.extract_strided_slice %136 {offsets = [0, 96], sizes = [8, 32], strides = [1, 1]} : vector<8x128xf32> to vector<8x32xf32>
    %144 = math.tanh %143 : vector<8x32xf32>
    %145 = vector.extract_strided_slice %142 {offsets = [0, 0], sizes = [8, 32], strides = [1, 1]} : vector<8x96xf32> to vector<8x32xf32>
    %146 = vector.extract_strided_slice %142 {offsets = [0, 32], sizes = [8, 32], strides = [1, 1]} : vector<8x96xf32> to vector<8x32xf32>
    %147 = vector.extract_strided_slice %142 {offsets = [0, 64], sizes = [8, 32], strides = [1, 1]} : vector<8x96xf32> to vector<8x32xf32>
    %148 = arith.mulf %146, %126 : vector<8x32xf32>
    %149 = arith.mulf %145, %144 : vector<8x32xf32>
    %150 = arith.addf %148, %149 : vector<8x32xf32>
    %151 = math.tanh %150 : vector<8x32xf32>
    %152 = arith.mulf %147, %151 : vector<8x32xf32>
    %153 = arith.index_cast %132 : i32 to index
    %c0_40 = arith.constant 0 : index
    %154 = vector.load %arg13[%153, %c0_40] : memref<64x32xf32, #tpu.memory_space<vmem>>, vector<8x32xf32>
    tpu.vector_store %arg13[%153, %c0_40], %152 {strides = array<i32>} : memref<64x32xf32, #tpu.memory_space<vmem>>, vector<8x32xf32>,
    %c6_i32 = arith.constant 6 : i32
    %c8_i32_41 = arith.constant 8 : i32
    %155 = arith.muli %c6_i32, %c8_i32_41 : i32
    %156 = tpu.assume_multiple %155, 8 : i32
    %157 = arith.index_cast %156 : i32 to index
    %c0_42 = arith.constant 0 : index
    %158 = vector.load %arg12[%157, %c0_42] : memref<64x128xf32, #tpu.memory_space<vmem>>, vector<8x128xf32>
    %cst_43 = arith.constant dense<0.000000e+00> : vector<8x128xf32>
    %159 = tpu.matmul %152, %2, %cst_43 {dimension_numbers = #tpu.dot_dimension_numbers<[1], [0], [0], [1], [0, 0, 1, 1], [], []>} : vector<8x32xf32>, vector<32x128xf32>, vector<8x128xf32> -> vector<8x128xf32>
    %160 = arith.addf %158, %159 : vector<8x128xf32>
    %161 = vector.extract_strided_slice %160 {offsets = [0, 0], sizes = [8, 96], strides = [1, 1]} : vector<8x128xf32> to vector<8x96xf32>
    %162 = arith.negf %161 : vector<8x96xf32>
    %163 = math.exp %162 : vector<8x96xf32>
    %cst_44 = arith.constant 1.000000e+00 : f32
    %164 = vector.broadcast %cst_44 : f32 to vector<8x96xf32>
    %165 = arith.addf %164, %163 : vector<8x96xf32>
    %166 = arith.divf %164, %165 : vector<8x96xf32>
    %167 = vector.extract_strided_slice %160 {offsets = [0, 96], sizes = [8, 32], strides = [1, 1]} : vector<8x128xf32> to vector<8x32xf32>
    %168 = math.tanh %167 : vector<8x32xf32>
    %169 = vector.extract_strided_slice %166 {offsets = [0, 0], sizes = [8, 32], strides = [1, 1]} : vector<8x96xf32> to vector<8x32xf32>
    %170 = vector.extract_strided_slice %166 {offsets = [0, 32], sizes = [8, 32], strides = [1, 1]} : vector<8x96xf32> to vector<8x32xf32>
    %171 = vector.extract_strided_slice %166 {offsets = [0, 64], sizes = [8, 32], strides = [1, 1]} : vector<8x96xf32> to vector<8x32xf32>
    %172 = arith.mulf %170, %150 : vector<8x32xf32>
    %173 = arith.mulf %169, %168 : vector<8x32xf32>
    %174 = arith.addf %172, %173 : vector<8x32xf32>
    %175 = math.tanh %174 : vector<8x32xf32>
    %176 = arith.mulf %171, %175 : vector<8x32xf32>
    %177 = arith.index_cast %156 : i32 to index
    %c0_45 = arith.constant 0 : index
    %178 = vector.load %arg13[%177, %c0_45] : memref<64x32xf32, #tpu.memory_space<vmem>>, vector<8x32xf32>
    tpu.vector_store %arg13[%177, %c0_45], %176 {strides = array<i32>} : memref<64x32xf32, #tpu.memory_space<vmem>>, vector<8x32xf32>,
    %c7_i32 = arith.constant 7 : i32
    %c8_i32_46 = arith.constant 8 : i32
    %179 = arith.muli %c7_i32, %c8_i32_46 : i32
    %180 = tpu.assume_multiple %179, 8 : i32
    %181 = arith.index_cast %180 : i32 to index
    %c0_47 = arith.constant 0 : index
    %182 = vector.load %arg12[%181, %c0_47] : memref<64x128xf32, #tpu.memory_space<vmem>>, vector<8x128xf32>
    %cst_48 = arith.constant dense<0.000000e+00> : vector<8x128xf32>
    %183 = tpu.matmul %176, %2, %cst_48 {dimension_numbers = #tpu.dot_dimension_numbers<[1], [0], [0], [1], [0, 0, 1, 1], [], []>} : vector<8x32xf32>, vector<32x128xf32>, vector<8x128xf32> -> vector<8x128xf32>
    %184 = arith.addf %182, %183 : vector<8x128xf32>
    %185 = vector.extract_strided_slice %184 {offsets = [0, 0], sizes = [8, 96], strides = [1, 1]} : vector<8x128xf32> to vector<8x96xf32>
    %186 = arith.negf %185 : vector<8x96xf32>
    %187 = math.exp %186 : vector<8x96xf32>
    %cst_49 = arith.constant 1.000000e+00 : f32
    %188 = vector.broadcast %cst_49 : f32 to vector<8x96xf32>
    %189 = arith.addf %188, %187 : vector<8x96xf32>
    %190 = arith.divf %188, %189 : vector<8x96xf32>
    %191 = vector.extract_strided_slice %184 {offsets = [0, 96], sizes = [8, 32], strides = [1, 1]} : vector<8x128xf32> to vector<8x32xf32>
    %192 = math.tanh %191 : vector<8x32xf32>
    %193 = vector.extract_strided_slice %190 {offsets = [0, 0], sizes = [8, 32], strides = [1, 1]} : vector<8x96xf32> to vector<8x32xf32>
    %194 = vector.extract_strided_slice %190 {offsets = [0, 32], sizes = [8, 32], strides = [1, 1]} : vector<8x96xf32> to vector<8x32xf32>
    %195 = vector.extract_strided_slice %190 {offsets = [0, 64], sizes = [8, 32], strides = [1, 1]} : vector<8x96xf32> to vector<8x32xf32>
    %196 = arith.mulf %194, %174 : vector<8x32xf32>
    %197 = arith.mulf %193, %192 : vector<8x32xf32>
    %198 = arith.addf %196, %197 : vector<8x32xf32>
    %199 = math.tanh %198 : vector<8x32xf32>
    %200 = arith.mulf %195, %199 : vector<8x32xf32>
    %201 = arith.index_cast %180 : i32 to index
    %c0_50 = arith.constant 0 : index
    %202 = vector.load %arg13[%201, %c0_50] : memref<64x32xf32, #tpu.memory_space<vmem>>, vector<8x32xf32>
    tpu.vector_store %arg13[%201, %c0_50], %200 {strides = array<i32>} : memref<64x32xf32, #tpu.memory_space<vmem>>, vector<8x32xf32>,
    %c8_i32_51 = arith.constant 8 : i32
    %c0_52 = arith.constant 0 : index
    %c0_53 = arith.constant 0 : index
    %203 = vector.load %arg7[%c0_52, %c0_53] : memref<32x128xf32, #tpu.memory_space<vmem>>, vector<32x128xf32>
    %c0_54 = arith.constant 0 : index
    %c0_55 = arith.constant 0 : index
    %204 = vector.load %arg13[%c0_54, %c0_55] : memref<64x32xf32, #tpu.memory_space<vmem>>, vector<64x32xf32>
    %c0_56 = arith.constant 0 : index
    %c0_57 = arith.constant 0 : index
    %205 = vector.load %arg6[%c0_56, %c0_57] : memref<32x128xf32, #tpu.memory_space<vmem>>, vector<32x128xf32>
    %cst_58 = arith.constant dense<0.000000e+00> : vector<64x128xf32>
    %206 = tpu.matmul %204, %205, %cst_58 {dimension_numbers = #tpu.dot_dimension_numbers<[1], [0], [0], [1], [0, 0, 1, 1], [], []>} : vector<64x32xf32>, vector<32x128xf32>, vector<64x128xf32> -> vector<64x128xf32>
    %c0_59 = arith.constant 0 : index
    %c0_60 = arith.constant 0 : index
    %207 = vector.load %arg8[%c0_59, %c0_60] : memref<1x128xf32, #tpu.memory_space<vmem>>, vector<1x128xf32>
    %208 = vector.broadcast %207 : vector<1x128xf32> to vector<64x128xf32>
    %209 = arith.addf %206, %208 : vector<64x128xf32>
    %c0_61 = arith.constant 0 : index
    %c0_62 = arith.constant 0 : index
    %210 = vector.load %arg12[%c0_61, %c0_62] : memref<64x128xf32, #tpu.memory_space<vmem>>, vector<64x128xf32>
    tpu.vector_store %arg12[%c0_61, %c0_62], %209 {strides = array<i32>} : memref<64x128xf32, #tpu.memory_space<vmem>>, vector<64x128xf32>,
    %cst_63 = arith.constant 0.000000e+00 : f32
    %211 = vector.broadcast %cst_63 : f32 to vector<8x32xf32>
    %cst_64 = arith.constant 0.000000e+00 : f32
    %212 = vector.broadcast %cst_64 : f32 to vector<8x32xf32>
    %c0_i32_65 = arith.constant 0 : i32
    %c8_i32_66 = arith.constant 8 : i32
    %213 = arith.muli %c0_i32_65, %c8_i32_66 : i32
    %214 = tpu.assume_multiple %213, 8 : i32
    %215 = arith.index_cast %214 : i32 to index
    %c0_67 = arith.constant 0 : index
    %216 = vector.load %arg12[%215, %c0_67] : memref<64x128xf32, #tpu.memory_space<vmem>>, vector<8x128xf32>
    %cst_68 = arith.constant dense<0.000000e+00> : vector<8x128xf32>
    %217 = tpu.matmul %211, %203, %cst_68 {dimension_numbers = #tpu.dot_dimension_numbers<[1], [0], [0], [1], [0, 0, 1, 1], [], []>} : vector<8x32xf32>, vector<32x128xf32>, vector<8x128xf32> -> vector<8x128xf32>
    %218 = arith.addf %216, %217 : vector<8x128xf32>
    %219 = vector.extract_strided_slice %218 {offsets = [0, 0], sizes = [8, 96], strides = [1, 1]} : vector<8x128xf32> to vector<8x96xf32>
    %220 = arith.negf %219 : vector<8x96xf32>
    %221 = math.exp %220 : vector<8x96xf32>
    %cst_69 = arith.constant 1.000000e+00 : f32
    %222 = vector.broadcast %cst_69 : f32 to vector<8x96xf32>
    %223 = arith.addf %222, %221 : vector<8x96xf32>
    %224 = arith.divf %222, %223 : vector<8x96xf32>
    %225 = vector.extract_strided_slice %218 {offsets = [0, 96], sizes = [8, 32], strides = [1, 1]} : vector<8x128xf32> to vector<8x32xf32>
    %226 = math.tanh %225 : vector<8x32xf32>
    %227 = vector.extract_strided_slice %224 {offsets = [0, 0], sizes = [8, 32], strides = [1, 1]} : vector<8x96xf32> to vector<8x32xf32>
    %228 = vector.extract_strided_slice %224 {offsets = [0, 32], sizes = [8, 32], strides = [1, 1]} : vector<8x96xf32> to vector<8x32xf32>
    %229 = vector.extract_strided_slice %224 {offsets = [0, 64], sizes = [8, 32], strides = [1, 1]} : vector<8x96xf32> to vector<8x32xf32>
    %230 = arith.mulf %228, %212 : vector<8x32xf32>
    %231 = arith.mulf %227, %226 : vector<8x32xf32>
    %232 = arith.addf %230, %231 : vector<8x32xf32>
    %233 = math.tanh %232 : vector<8x32xf32>
    %234 = arith.mulf %229, %233 : vector<8x32xf32>
    %235 = arith.index_cast %214 : i32 to index
    %c0_70 = arith.constant 0 : index
    %236 = vector.load %arg13[%235, %c0_70] : memref<64x32xf32, #tpu.memory_space<vmem>>, vector<8x32xf32>
    tpu.vector_store %arg13[%235, %c0_70], %234 {strides = array<i32>} : memref<64x32xf32, #tpu.memory_space<vmem>>, vector<8x32xf32>,
    %c1_i32_71 = arith.constant 1 : i32
    %c8_i32_72 = arith.constant 8 : i32
    %237 = arith.muli %c1_i32_71, %c8_i32_72 : i32
    %238 = tpu.assume_multiple %237, 8 : i32
    %239 = arith.index_cast %238 : i32 to index
    %c0_73 = arith.constant 0 : index
    %240 = vector.load %arg12[%239, %c0_73] : memref<64x128xf32, #tpu.memory_space<vmem>>, vector<8x128xf32>
    %cst_74 = arith.constant dense<0.000000e+00> : vector<8x128xf32>
    %241 = tpu.matmul %234, %203, %cst_74 {dimension_numbers = #tpu.dot_dimension_numbers<[1], [0], [0], [1], [0, 0, 1, 1], [], []>} : vector<8x32xf32>, vector<32x128xf32>, vector<8x128xf32> -> vector<8x128xf32>
    %242 = arith.addf %240, %241 : vector<8x128xf32>
    %243 = vector.extract_strided_slice %242 {offsets = [0, 0], sizes = [8, 96], strides = [1, 1]} : vector<8x128xf32> to vector<8x96xf32>
    %244 = arith.negf %243 : vector<8x96xf32>
    %245 = math.exp %244 : vector<8x96xf32>
    %cst_75 = arith.constant 1.000000e+00 : f32
    %246 = vector.broadcast %cst_75 : f32 to vector<8x96xf32>
    %247 = arith.addf %246, %245 : vector<8x96xf32>
    %248 = arith.divf %246, %247 : vector<8x96xf32>
    %249 = vector.extract_strided_slice %242 {offsets = [0, 96], sizes = [8, 32], strides = [1, 1]} : vector<8x128xf32> to vector<8x32xf32>
    %250 = math.tanh %249 : vector<8x32xf32>
    %251 = vector.extract_strided_slice %248 {offsets = [0, 0], sizes = [8, 32], strides = [1, 1]} : vector<8x96xf32> to vector<8x32xf32>
    %252 = vector.extract_strided_slice %248 {offsets = [0, 32], sizes = [8, 32], strides = [1, 1]} : vector<8x96xf32> to vector<8x32xf32>
    %253 = vector.extract_strided_slice %248 {offsets = [0, 64], sizes = [8, 32], strides = [1, 1]} : vector<8x96xf32> to vector<8x32xf32>
    %254 = arith.mulf %252, %232 : vector<8x32xf32>
    %255 = arith.mulf %251, %250 : vector<8x32xf32>
    %256 = arith.addf %254, %255 : vector<8x32xf32>
    %257 = math.tanh %256 : vector<8x32xf32>
    %258 = arith.mulf %253, %257 : vector<8x32xf32>
    %259 = arith.index_cast %238 : i32 to index
    %c0_76 = arith.constant 0 : index
    %260 = vector.load %arg13[%259, %c0_76] : memref<64x32xf32, #tpu.memory_space<vmem>>, vector<8x32xf32>
    tpu.vector_store %arg13[%259, %c0_76], %258 {strides = array<i32>} : memref<64x32xf32, #tpu.memory_space<vmem>>, vector<8x32xf32>,
    %c2_i32_77 = arith.constant 2 : i32
    %c8_i32_78 = arith.constant 8 : i32
    %261 = arith.muli %c2_i32_77, %c8_i32_78 : i32
    %262 = tpu.assume_multiple %261, 8 : i32
    %263 = arith.index_cast %262 : i32 to index
    %c0_79 = arith.constant 0 : index
    %264 = vector.load %arg12[%263, %c0_79] : memref<64x128xf32, #tpu.memory_space<vmem>>, vector<8x128xf32>
    %cst_80 = arith.constant dense<0.000000e+00> : vector<8x128xf32>
    %265 = tpu.matmul %258, %203, %cst_80 {dimension_numbers = #tpu.dot_dimension_numbers<[1], [0], [0], [1], [0, 0, 1, 1], [], []>} : vector<8x32xf32>, vector<32x128xf32>, vector<8x128xf32> -> vector<8x128xf32>
    %266 = arith.addf %264, %265 : vector<8x128xf32>
    %267 = vector.extract_strided_slice %266 {offsets = [0, 0], sizes = [8, 96], strides = [1, 1]} : vector<8x128xf32> to vector<8x96xf32>
    %268 = arith.negf %267 : vector<8x96xf32>
    %269 = math.exp %268 : vector<8x96xf32>
    %cst_81 = arith.constant 1.000000e+00 : f32
    %270 = vector.broadcast %cst_81 : f32 to vector<8x96xf32>
    %271 = arith.addf %270, %269 : vector<8x96xf32>
    %272 = arith.divf %270, %271 : vector<8x96xf32>
    %273 = vector.extract_strided_slice %266 {offsets = [0, 96], sizes = [8, 32], strides = [1, 1]} : vector<8x128xf32> to vector<8x32xf32>
    %274 = math.tanh %273 : vector<8x32xf32>
    %275 = vector.extract_strided_slice %272 {offsets = [0, 0], sizes = [8, 32], strides = [1, 1]} : vector<8x96xf32> to vector<8x32xf32>
    %276 = vector.extract_strided_slice %272 {offsets = [0, 32], sizes = [8, 32], strides = [1, 1]} : vector<8x96xf32> to vector<8x32xf32>
    %277 = vector.extract_strided_slice %272 {offsets = [0, 64], sizes = [8, 32], strides = [1, 1]} : vector<8x96xf32> to vector<8x32xf32>
    %278 = arith.mulf %276, %256 : vector<8x32xf32>
    %279 = arith.mulf %275, %274 : vector<8x32xf32>
    %280 = arith.addf %278, %279 : vector<8x32xf32>
    %281 = math.tanh %280 : vector<8x32xf32>
    %282 = arith.mulf %277, %281 : vector<8x32xf32>
    %283 = arith.index_cast %262 : i32 to index
    %c0_82 = arith.constant 0 : index
    %284 = vector.load %arg13[%283, %c0_82] : memref<64x32xf32, #tpu.memory_space<vmem>>, vector<8x32xf32>
    tpu.vector_store %arg13[%283, %c0_82], %282 {strides = array<i32>} : memref<64x32xf32, #tpu.memory_space<vmem>>, vector<8x32xf32>,
    %c3_i32_83 = arith.constant 3 : i32
    %c8_i32_84 = arith.constant 8 : i32
    %285 = arith.muli %c3_i32_83, %c8_i32_84 : i32
    %286 = tpu.assume_multiple %285, 8 : i32
    %287 = arith.index_cast %286 : i32 to index
    %c0_85 = arith.constant 0 : index
    %288 = vector.load %arg12[%287, %c0_85] : memref<64x128xf32, #tpu.memory_space<vmem>>, vector<8x128xf32>
    %cst_86 = arith.constant dense<0.000000e+00> : vector<8x128xf32>
    %289 = tpu.matmul %282, %203, %cst_86 {dimension_numbers = #tpu.dot_dimension_numbers<[1], [0], [0], [1], [0, 0, 1, 1], [], []>} : vector<8x32xf32>, vector<32x128xf32>, vector<8x128xf32> -> vector<8x128xf32>
    %290 = arith.addf %288, %289 : vector<8x128xf32>
    %291 = vector.extract_strided_slice %290 {offsets = [0, 0], sizes = [8, 96], strides = [1, 1]} : vector<8x128xf32> to vector<8x96xf32>
    %292 = arith.negf %291 : vector<8x96xf32>
    %293 = math.exp %292 : vector<8x96xf32>
    %cst_87 = arith.constant 1.000000e+00 : f32
    %294 = vector.broadcast %cst_87 : f32 to vector<8x96xf32>
    %295 = arith.addf %294, %293 : vector<8x96xf32>
    %296 = arith.divf %294, %295 : vector<8x96xf32>
    %297 = vector.extract_strided_slice %290 {offsets = [0, 96], sizes = [8, 32], strides = [1, 1]} : vector<8x128xf32> to vector<8x32xf32>
    %298 = math.tanh %297 : vector<8x32xf32>
    %299 = vector.extract_strided_slice %296 {offsets = [0, 0], sizes = [8, 32], strides = [1, 1]} : vector<8x96xf32> to vector<8x32xf32>
    %300 = vector.extract_strided_slice %296 {offsets = [0, 32], sizes = [8, 32], strides = [1, 1]} : vector<8x96xf32> to vector<8x32xf32>
    %301 = vector.extract_strided_slice %296 {offsets = [0, 64], sizes = [8, 32], strides = [1, 1]} : vector<8x96xf32> to vector<8x32xf32>
    %302 = arith.mulf %300, %280 : vector<8x32xf32>
    %303 = arith.mulf %299, %298 : vector<8x32xf32>
    %304 = arith.addf %302, %303 : vector<8x32xf32>
    %305 = math.tanh %304 : vector<8x32xf32>
    %306 = arith.mulf %301, %305 : vector<8x32xf32>
    %307 = arith.index_cast %286 : i32 to index
    %c0_88 = arith.constant 0 : index
    %308 = vector.load %arg13[%307, %c0_88] : memref<64x32xf32, #tpu.memory_space<vmem>>, vector<8x32xf32>
    tpu.vector_store %arg13[%307, %c0_88], %306 {strides = array<i32>} : memref<64x32xf32, #tpu.memory_space<vmem>>, vector<8x32xf32>,
    %c4_i32_89 = arith.constant 4 : i32
    %c8_i32_90 = arith.constant 8 : i32
    %309 = arith.muli %c4_i32_89, %c8_i32_90 : i32
    %310 = tpu.assume_multiple %309, 8 : i32
    %311 = arith.index_cast %310 : i32 to index
    %c0_91 = arith.constant 0 : index
    %312 = vector.load %arg12[%311, %c0_91] : memref<64x128xf32, #tpu.memory_space<vmem>>, vector<8x128xf32>
    %cst_92 = arith.constant dense<0.000000e+00> : vector<8x128xf32>
    %313 = tpu.matmul %306, %203, %cst_92 {dimension_numbers = #tpu.dot_dimension_numbers<[1], [0], [0], [1], [0, 0, 1, 1], [], []>} : vector<8x32xf32>, vector<32x128xf32>, vector<8x128xf32> -> vector<8x128xf32>
    %314 = arith.addf %312, %313 : vector<8x128xf32>
    %315 = vector.extract_strided_slice %314 {offsets = [0, 0], sizes = [8, 96], strides = [1, 1]} : vector<8x128xf32> to vector<8x96xf32>
    %316 = arith.negf %315 : vector<8x96xf32>
    %317 = math.exp %316 : vector<8x96xf32>
    %cst_93 = arith.constant 1.000000e+00 : f32
    %318 = vector.broadcast %cst_93 : f32 to vector<8x96xf32>
    %319 = arith.addf %318, %317 : vector<8x96xf32>
    %320 = arith.divf %318, %319 : vector<8x96xf32>
    %321 = vector.extract_strided_slice %314 {offsets = [0, 96], sizes = [8, 32], strides = [1, 1]} : vector<8x128xf32> to vector<8x32xf32>
    %322 = math.tanh %321 : vector<8x32xf32>
    %323 = vector.extract_strided_slice %320 {offsets = [0, 0], sizes = [8, 32], strides = [1, 1]} : vector<8x96xf32> to vector<8x32xf32>
    %324 = vector.extract_strided_slice %320 {offsets = [0, 32], sizes = [8, 32], strides = [1, 1]} : vector<8x96xf32> to vector<8x32xf32>
    %325 = vector.extract_strided_slice %320 {offsets = [0, 64], sizes = [8, 32], strides = [1, 1]} : vector<8x96xf32> to vector<8x32xf32>
    %326 = arith.mulf %324, %304 : vector<8x32xf32>
    %327 = arith.mulf %323, %322 : vector<8x32xf32>
    %328 = arith.addf %326, %327 : vector<8x32xf32>
    %329 = math.tanh %328 : vector<8x32xf32>
    %330 = arith.mulf %325, %329 : vector<8x32xf32>
    %331 = arith.index_cast %310 : i32 to index
    %c0_94 = arith.constant 0 : index
    %332 = vector.load %arg13[%331, %c0_94] : memref<64x32xf32, #tpu.memory_space<vmem>>, vector<8x32xf32>
    tpu.vector_store %arg13[%331, %c0_94], %330 {strides = array<i32>} : memref<64x32xf32, #tpu.memory_space<vmem>>, vector<8x32xf32>,
    %c5_i32_95 = arith.constant 5 : i32
    %c8_i32_96 = arith.constant 8 : i32
    %333 = arith.muli %c5_i32_95, %c8_i32_96 : i32
    %334 = tpu.assume_multiple %333, 8 : i32
    %335 = arith.index_cast %334 : i32 to index
    %c0_97 = arith.constant 0 : index
    %336 = vector.load %arg12[%335, %c0_97] : memref<64x128xf32, #tpu.memory_space<vmem>>, vector<8x128xf32>
    %cst_98 = arith.constant dense<0.000000e+00> : vector<8x128xf32>
    %337 = tpu.matmul %330, %203, %cst_98 {dimension_numbers = #tpu.dot_dimension_numbers<[1], [0], [0], [1], [0, 0, 1, 1], [], []>} : vector<8x32xf32>, vector<32x128xf32>, vector<8x128xf32> -> vector<8x128xf32>
    %338 = arith.addf %336, %337 : vector<8x128xf32>
    %339 = vector.extract_strided_slice %338 {offsets = [0, 0], sizes = [8, 96], strides = [1, 1]} : vector<8x128xf32> to vector<8x96xf32>
    %340 = arith.negf %339 : vector<8x96xf32>
    %341 = math.exp %340 : vector<8x96xf32>
    %cst_99 = arith.constant 1.000000e+00 : f32
    %342 = vector.broadcast %cst_99 : f32 to vector<8x96xf32>
    %343 = arith.addf %342, %341 : vector<8x96xf32>
    %344 = arith.divf %342, %343 : vector<8x96xf32>
    %345 = vector.extract_strided_slice %338 {offsets = [0, 96], sizes = [8, 32], strides = [1, 1]} : vector<8x128xf32> to vector<8x32xf32>
    %346 = math.tanh %345 : vector<8x32xf32>
    %347 = vector.extract_strided_slice %344 {offsets = [0, 0], sizes = [8, 32], strides = [1, 1]} : vector<8x96xf32> to vector<8x32xf32>
    %348 = vector.extract_strided_slice %344 {offsets = [0, 32], sizes = [8, 32], strides = [1, 1]} : vector<8x96xf32> to vector<8x32xf32>
    %349 = vector.extract_strided_slice %344 {offsets = [0, 64], sizes = [8, 32], strides = [1, 1]} : vector<8x96xf32> to vector<8x32xf32>
    %350 = arith.mulf %348, %328 : vector<8x32xf32>
    %351 = arith.mulf %347, %346 : vector<8x32xf32>
    %352 = arith.addf %350, %351 : vector<8x32xf32>
    %353 = math.tanh %352 : vector<8x32xf32>
    %354 = arith.mulf %349, %353 : vector<8x32xf32>
    %355 = arith.index_cast %334 : i32 to index
    %c0_100 = arith.constant 0 : index
    %356 = vector.load %arg13[%355, %c0_100] : memref<64x32xf32, #tpu.memory_space<vmem>>, vector<8x32xf32>
    tpu.vector_store %arg13[%355, %c0_100], %354 {strides = array<i32>} : memref<64x32xf32, #tpu.memory_space<vmem>>, vector<8x32xf32>,
    %c6_i32_101 = arith.constant 6 : i32
    %c8_i32_102 = arith.constant 8 : i32
    %357 = arith.muli %c6_i32_101, %c8_i32_102 : i32
    %358 = tpu.assume_multiple %357, 8 : i32
    %359 = arith.index_cast %358 : i32 to index
    %c0_103 = arith.constant 0 : index
    %360 = vector.load %arg12[%359, %c0_103] : memref<64x128xf32, #tpu.memory_space<vmem>>, vector<8x128xf32>
    %cst_104 = arith.constant dense<0.000000e+00> : vector<8x128xf32>
    %361 = tpu.matmul %354, %203, %cst_104 {dimension_numbers = #tpu.dot_dimension_numbers<[1], [0], [0], [1], [0, 0, 1, 1], [], []>} : vector<8x32xf32>, vector<32x128xf32>, vector<8x128xf32> -> vector<8x128xf32>
    %362 = arith.addf %360, %361 : vector<8x128xf32>
    %363 = vector.extract_strided_slice %362 {offsets = [0, 0], sizes = [8, 96], strides = [1, 1]} : vector<8x128xf32> to vector<8x96xf32>
    %364 = arith.negf %363 : vector<8x96xf32>
    %365 = math.exp %364 : vector<8x96xf32>
    %cst_105 = arith.constant 1.000000e+00 : f32
    %366 = vector.broadcast %cst_105 : f32 to vector<8x96xf32>
    %367 = arith.addf %366, %365 : vector<8x96xf32>
    %368 = arith.divf %366, %367 : vector<8x96xf32>
    %369 = vector.extract_strided_slice %362 {offsets = [0, 96], sizes = [8, 32], strides = [1, 1]} : vector<8x128xf32> to vector<8x32xf32>
    %370 = math.tanh %369 : vector<8x32xf32>
    %371 = vector.extract_strided_slice %368 {offsets = [0, 0], sizes = [8, 32], strides = [1, 1]} : vector<8x96xf32> to vector<8x32xf32>
    %372 = vector.extract_strided_slice %368 {offsets = [0, 32], sizes = [8, 32], strides = [1, 1]} : vector<8x96xf32> to vector<8x32xf32>
    %373 = vector.extract_strided_slice %368 {offsets = [0, 64], sizes = [8, 32], strides = [1, 1]} : vector<8x96xf32> to vector<8x32xf32>
    %374 = arith.mulf %372, %352 : vector<8x32xf32>
    %375 = arith.mulf %371, %370 : vector<8x32xf32>
    %376 = arith.addf %374, %375 : vector<8x32xf32>
    %377 = math.tanh %376 : vector<8x32xf32>
    %378 = arith.mulf %373, %377 : vector<8x32xf32>
    %379 = arith.index_cast %358 : i32 to index
    %c0_106 = arith.constant 0 : index
    %380 = vector.load %arg13[%379, %c0_106] : memref<64x32xf32, #tpu.memory_space<vmem>>, vector<8x32xf32>
    tpu.vector_store %arg13[%379, %c0_106], %378 {strides = array<i32>} : memref<64x32xf32, #tpu.memory_space<vmem>>, vector<8x32xf32>,
    %c7_i32_107 = arith.constant 7 : i32
    %c8_i32_108 = arith.constant 8 : i32
    %381 = arith.muli %c7_i32_107, %c8_i32_108 : i32
    %382 = tpu.assume_multiple %381, 8 : i32
    %383 = arith.index_cast %382 : i32 to index
    %c0_109 = arith.constant 0 : index
    %384 = vector.load %arg12[%383, %c0_109] : memref<64x128xf32, #tpu.memory_space<vmem>>, vector<8x128xf32>
    %cst_110 = arith.constant dense<0.000000e+00> : vector<8x128xf32>
    %385 = tpu.matmul %378, %203, %cst_110 {dimension_numbers = #tpu.dot_dimension_numbers<[1], [0], [0], [1], [0, 0, 1, 1], [], []>} : vector<8x32xf32>, vector<32x128xf32>, vector<8x128xf32> -> vector<8x128xf32>
    %386 = arith.addf %384, %385 : vector<8x128xf32>
    %387 = vector.extract_strided_slice %386 {offsets = [0, 0], sizes = [8, 96], strides = [1, 1]} : vector<8x128xf32> to vector<8x96xf32>
    %388 = arith.negf %387 : vector<8x96xf32>
    %389 = math.exp %388 : vector<8x96xf32>
    %cst_111 = arith.constant 1.000000e+00 : f32
    %390 = vector.broadcast %cst_111 : f32 to vector<8x96xf32>
    %391 = arith.addf %390, %389 : vector<8x96xf32>
    %392 = arith.divf %390, %391 : vector<8x96xf32>
    %393 = vector.extract_strided_slice %386 {offsets = [0, 96], sizes = [8, 32], strides = [1, 1]} : vector<8x128xf32> to vector<8x32xf32>
    %394 = math.tanh %393 : vector<8x32xf32>
    %395 = vector.extract_strided_slice %392 {offsets = [0, 0], sizes = [8, 32], strides = [1, 1]} : vector<8x96xf32> to vector<8x32xf32>
    %396 = vector.extract_strided_slice %392 {offsets = [0, 32], sizes = [8, 32], strides = [1, 1]} : vector<8x96xf32> to vector<8x32xf32>
    %397 = vector.extract_strided_slice %392 {offsets = [0, 64], sizes = [8, 32], strides = [1, 1]} : vector<8x96xf32> to vector<8x32xf32>
    %398 = arith.mulf %396, %376 : vector<8x32xf32>
    %399 = arith.mulf %395, %394 : vector<8x32xf32>
    %400 = arith.addf %398, %399 : vector<8x32xf32>
    %401 = math.tanh %400 : vector<8x32xf32>
    %402 = arith.mulf %397, %401 : vector<8x32xf32>
    %403 = arith.index_cast %382 : i32 to index
    %c0_112 = arith.constant 0 : index
    %404 = vector.load %arg13[%403, %c0_112] : memref<64x32xf32, #tpu.memory_space<vmem>>, vector<8x32xf32>
    tpu.vector_store %arg13[%403, %c0_112], %402 {strides = array<i32>} : memref<64x32xf32, #tpu.memory_space<vmem>>, vector<8x32xf32>,
    %c8_i32_113 = arith.constant 8 : i32
    %c0_114 = arith.constant 0 : index
    %c0_115 = arith.constant 0 : index
    %405 = vector.load %arg13[%c0_114, %c0_115] : memref<64x32xf32, #tpu.memory_space<vmem>>, vector<64x32xf32>
    %c0_116 = arith.constant 0 : index
    %c0_117 = arith.constant 0 : index
    %c0_118 = arith.constant 0 : index
    %406 = vector.load %arg2[%c0_116, %c0_117, %c0_118] : memref<8x8x1xf32, #tpu.memory_space<vmem>>, vector<8x8x1xf32>
    %407 = vector.shape_cast %406 : vector<8x8x1xf32> to vector<64x1xf32>
    %408 = vector.broadcast %407 : vector<64x1xf32> to vector<64x32xf32>
    %409 = arith.mulf %405, %408 : vector<64x32xf32>
    %c0_119 = arith.constant 0 : index
    %c0_120 = arith.constant 0 : index
    %410 = vector.load %arg9[%c0_119, %c0_120] : memref<32x128xf32, #tpu.memory_space<vmem>>, vector<32x128xf32>
    %cst_121 = arith.constant dense<0.000000e+00> : vector<64x128xf32>
    %411 = tpu.matmul %409, %410, %cst_121 {dimension_numbers = #tpu.dot_dimension_numbers<[1], [0], [0], [1], [0, 0, 1, 1], [], []>} : vector<64x32xf32>, vector<32x128xf32>, vector<64x128xf32> -> vector<64x128xf32>
    %c0_122 = arith.constant 0 : index
    %c0_123 = arith.constant 0 : index
    %412 = vector.load %arg10[%c0_122, %c0_123] : memref<1x128xf32, #tpu.memory_space<vmem>>, vector<1x128xf32>
    %413 = vector.broadcast %412 : vector<1x128xf32> to vector<64x128xf32>
    %414 = arith.addf %411, %413 : vector<64x128xf32>
    %415 = vector.shape_cast %414 : vector<64x128xf32> to vector<8x8x128xf32>
    %c0_124 = arith.constant 0 : index
    %c0_125 = arith.constant 0 : index
    %c0_126 = arith.constant 0 : index
    %416 = vector.load %arg11[%c0_124, %c0_125, %c0_126] : memref<8x8x128xf32, #tpu.memory_space<vmem>>, vector<8x8x128xf32>
    tpu.vector_store %arg11[%c0_124, %c0_125, %c0_126], %415 {strides = array<i32>} : memref<8x8x128xf32, #tpu.memory_space<vmem>>, vector<8x8x128xf32>,
    return
  }
  func.func @transform_0(%arg0: i32) -> (i32, i32, i32) {
    %c0_i32 = arith.constant 0 : i32
    %c0_i32_0 = arith.constant 0 : i32
    %c0_i32_1 = arith.constant 0 : i32
    return %c0_i32, %arg0, %c0_i32_0 : i32, i32, i32
  }
  func.func @transform_1(%arg0: i32) -> (i32, i32, i32) {
    %c0_i32 = arith.constant 0 : i32
    %c0_i32_0 = arith.constant 0 : i32
    %c0_i32_1 = arith.constant 0 : i32
    return %c0_i32, %arg0, %c0_i32_0 : i32, i32, i32
  }
  func.func @transform_2(%arg0: i32) -> (i32, i32) {
    %c0_i32 = arith.constant 0 : i32
    %c0_i32_0 = arith.constant 0 : i32
    %c0_i32_1 = arith.constant 0 : i32
    return %c0_i32, %c0_i32_0 : i32, i32
  }
  func.func @transform_3(%arg0: i32) -> (i32, i32) {
    %c0_i32 = arith.constant 0 : i32
    %c0_i32_0 = arith.constant 0 : i32
    %c0_i32_1 = arith.constant 0 : i32
    return %c0_i32, %c0_i32_0 : i32, i32
  }
  func.func @transform_4(%arg0: i32) -> (i32, i32) {
    %c0_i32 = arith.constant 0 : i32
    %c0_i32_0 = arith.constant 0 : i32
    %c0_i32_1 = arith.constant 0 : i32
    return %c0_i32, %c0_i32_0 : i32, i32
  }
  func.func @transform_5(%arg0: i32) -> (i32, i32) {
    %c0_i32 = arith.constant 0 : i32
    %c0_i32_0 = arith.constant 0 : i32
    %c0_i32_1 = arith.constant 0 : i32
    return %c0_i32, %c0_i32_0 : i32, i32
  }
  func.func @transform_6(%arg0: i32) -> (i32, i32) {
    %c0_i32 = arith.constant 0 : i32
    %c0_i32_0 = arith.constant 0 : i32
    %c0_i32_1 = arith.constant 0 : i32
    return %c0_i32, %c0_i32_0 : i32, i32
  }
  func.func @transform_7(%arg0: i32) -> (i32, i32) {
    %c0_i32 = arith.constant 0 : i32
    %c0_i32_0 = arith.constant 0 : i32
    %c0_i32_1 = arith.constant 0 : i32
    return %c0_i32, %c0_i32_0 : i32, i32
  }
  func.func @transform_8(%arg0: i32) -> (i32, i32) {
    %c0_i32 = arith.constant 0 : i32
    %c0_i32_0 = arith.constant 0 : i32
    %c0_i32_1 = arith.constant 0 : i32
    return %c0_i32, %c0_i32_0 : i32, i32
  }
  func.func @transform_9(%arg0: i32) -> (i32, i32) {
    %c0_i32 = arith.constant 0 : i32
    %c0_i32_0 = arith.constant 0 : i32
    %c0_i32_1 = arith.constant 0 : i32
    return %c0_i32, %c0_i32_0 : i32, i32
  }
  func.func @transform_10(%arg0: i32) -> (i32, i32, i32) {
    %c0_i32 = arith.constant 0 : i32
    %c0_i32_0 = arith.constant 0 : i32
    %c0_i32_1 = arith.constant 0 : i32
    return %c0_i32, %arg0, %c0_i32_0 : i32, i32, i32
  }
}

</mosaic_0001>

<llo_original>
// kernel: tpu_custom_call.1
$region0: #{tpu_custom_call.1}
  #allocation0 [shape = 'u32[]', space=smem, size = 0x4, offset = 0x4, fixed_abs, tag = 'smem constant byte address 0x4 - core index']
  #allocation1 [shape = 'u32[144,128]{1,0:T(1,128)}', space=vmem, size = 0x12000, scoped, tag = 'internal scratch']
  #allocation2 [shape = 'f32[64,128]{1,0:T(8,128)}', space=vmem, size = 0x8000, scoped, tag = 'scratch operand']
  #allocation3 [shape = 'f32[64,32]{1,0:T(8,128)}', space=vmem, size = 0x8000, scoped, tag = 'scratch operand']
  %s0 = inlined_call_operand.vmem [shape: f32[8,8,16], index: 0, kind: input, shape index: {}]
  %s1 = inlined_call_operand.vmem [shape: f32[8,8,1], index: 1, kind: input, shape index: {}]
  %s2 = inlined_call_operand.hbm [shape: f32[16,128], index: 2, kind: input, shape index: {}]
  %s3 = inlined_call_operand.hbm [shape: f32[32,128], index: 3, kind: input, shape index: {}]
  %s4 = inlined_call_operand.vmem [shape: f32[1,128], index: 4, kind: input, shape index: {}]
  %s5 = inlined_call_operand.hbm [shape: f32[32,128], index: 5, kind: input, shape index: {}]
  %s6 = inlined_call_operand.hbm [shape: f32[32,128], index: 6, kind: input, shape index: {}]
  %s7 = inlined_call_operand.vmem [shape: f32[1,128], index: 7, kind: input, shape index: {}]
  %s8 = inlined_call_operand.vmem [shape: f32[32,128], index: 8, kind: input, shape index: {}]
  %s9 = inlined_call_operand.vmem [shape: f32[1,128], index: 9, kind: input, shape index: {}]
  %s10 = inlined_call_operand.hbm [shape: f32[8,8,128], index: 10, kind: output, shape index: {}]
  %s11 = sld [smem:[#allocation0]]
  $region66: #{tpu_custom_call.1} parent=0
    _
  %s13 = ssub.s32 1, %s11
  %s14 = scalar_select 0, %s13, %s11
  $region1: #{tpu_custom_call.1} parent=0
    #allocation4 [shape = 'u8[8192]{0}', space=vmem, size = 0x2000, scoped, tag = 'input window, operand 2, single buffered']
    #allocation5 [shape = 's32[1]{0}', space=sflag, size = 0x4, scoped, tag = 'scoped memory for tpu_custom_call.1']
    #allocation6 [shape = 's32[1]{0}', space=sflag, size = 0x4, scoped, tag = 'scoped memory for tpu_custom_call.1']
    #allocation7 [shape = 'u8[16384]{0}', space=vmem, size = 0x4000, scoped, tag = 'input window, operand 3, single buffered']
    #allocation8 [shape = 's32[1]{0}', space=sflag, size = 0x4, scoped, tag = 'scoped memory for tpu_custom_call.1']
    #allocation9 [shape = 'u8[16384]{0}', space=vmem, size = 0x4000, scoped, tag = 'input window, operand 5, single buffered']
    #allocation10 [shape = 'u8[16384]{0}', space=vmem, size = 0x4000, scoped, tag = 'input window, operand 6, single buffered']
    #allocation11 [shape = 's32[1]{0}', space=sflag, size = 0x4, scoped, tag = 'scoped memory for tpu_custom_call.1']
    #allocation12 [shape = 'u8[32768]{0}', space=vmem, size = 0x8000, scoped, tag = 'output window, operand 0, single buffered']
    %15 = vsyncpa [#allocation5], 0
    %16 = vsyncpa [#allocation8], 0
    %17 = vsyncpa [#allocation11], 0
    %18 = vsyncpa [#allocation6], 0
    // Predicated region
    $region2: #{tpu_custom_call.1} parent=1 // pred_check
      _
    $region3: #{tpu_custom_call.1} parent=1 // pred_check_branch
      %20 = sbr.rel (0) target = $region5
    $region4: #{tpu_custom_call.1} parent=1 // pred_region
      _
    $region5: #{tpu_custom_call.1} parent=1 // pred_fallthru
      _
    // Predicated region
    $region6: #{tpu_custom_call.1} parent=1 // pred_check
      _
    $region7: #{tpu_custom_call.1} parent=1 // pred_check_branch
      %22 = sbr.rel (0) target = $region9
    $region8: #{tpu_custom_call.1} parent=1 // pred_region
      _
    $region9: #{tpu_custom_call.1} parent=1 // pred_fallthru
      _
    // Predicated region
    $region10: #{tpu_custom_call.1} parent=1 // pred_check
      _
    $region11: #{tpu_custom_call.1} parent=1 // pred_check_branch
      %24 = sbr.rel (0) target = $region13
    $region12: #{tpu_custom_call.1} parent=1 // pred_region
      %s26 = ssub.s32 256, 256
      %27 = vsyncadd [#allocation5], %s26
      %s28 = sshll.u32 [#allocation4], 4
      %s29 = int_to_ptr.vmem [resolvable:$true] %s28
      %34 = dma.hbm_to_vmem [thread:$0]  %s2, 256, %s29, [#allocation5], 128, 128, 8
    $region13: #{tpu_custom_call.1} parent=1 // pred_fallthru
      _
    // Predicated region
    $region14: #{tpu_custom_call.1} parent=1 // pred_check
      _
    $region15: #{tpu_custom_call.1} parent=1 // pred_check_branch
      %36 = sbr.rel (0) target = $region17
    $region16: #{tpu_custom_call.1} parent=1 // pred_region
      %s38 = ssub.s32 512, 512
      %39 = vsyncadd [#allocation8], %s38
      %s40 = sshll.u32 [#allocation7], 4
      %s41 = int_to_ptr.vmem [resolvable:$true] %s40
      %46 = dma.hbm_to_vmem [thread:$0]  %s3, 512, %s41, [#allocation8], 128, 128, 8
    $region17: #{tpu_custom_call.1} parent=1 // pred_fallthru
      _
    // Predicated region
    $region18: #{tpu_custom_call.1} parent=1 // pred_check
      _
    $region19: #{tpu_custom_call.1} parent=1 // pred_check_branch
      %48 = sbr.rel (0) target = $region21
    $region20: #{tpu_custom_call.1} parent=1 // pred_region
      _
    $region21: #{tpu_custom_call.1} parent=1 // pred_fallthru
      _
    // Predicated region
    $region22: #{tpu_custom_call.1} parent=1 // pred_check
      _
    $region23: #{tpu_custom_call.1} parent=1 // pred_check_branch
      %50 = sbr.rel (0) target = $region25
    $region24: #{tpu_custom_call.1} parent=1 // pred_region
      %s52 = ssub.s32 512, 512
      %53 = vsyncadd [#allocation8], %s52
      %s54 = sshll.u32 [#allocation9], 4
      %s55 = int_to_ptr.vmem [resolvable:$true] %s54
      %60 = dma.hbm_to_vmem [thread:$0]  %s5, 512, %s55, [#allocation8], 128, 128, 8
    $region25: #{tpu_custom_call.1} parent=1 // pred_fallthru
      _
    // Predicated region
    $region26: #{tpu_custom_call.1} parent=1 // pred_check
      _
    $region27: #{tpu_custom_call.1} parent=1 // pred_check_branch
      %62 = sbr.rel (0) target = $region29
    $region28: #{tpu_custom_call.1} parent=1 // pred_region
      %s64 = ssub.s32 512, 512
      %65 = vsyncadd [#allocation11], %s64
      %s66 = sshll.u32 [#allocation10], 4
      %s67 = int_to_ptr.vmem [resolvable:$true] %s66
      %72 = dma.hbm_to_vmem [thread:$0]  %s6, 512, %s67, [#allocation11], 128, 128, 8
    $region29: #{tpu_custom_call.1} parent=1 // pred_fallthru
      _
    // Predicated region
    $region30: #{tpu_custom_call.1} parent=1 // pred_check
      _
    $region31: #{tpu_custom_call.1} parent=1 // pred_check_branch
      %74 = sbr.rel (0) target = $region33
    $region32: #{tpu_custom_call.1} parent=1 // pred_region
      _
    $region33: #{tpu_custom_call.1} parent=1 // pred_fallthru
      _
    // Predicated region
    $region34: #{tpu_custom_call.1} parent=1 // pred_check
      _
    $region35: #{tpu_custom_call.1} parent=1 // pred_check_branch
      %76 = sbr.rel (0) target = $region37
    $region36: #{tpu_custom_call.1} parent=1 // pred_region
      _
    $region37: #{tpu_custom_call.1} parent=1 // pred_fallthru
      _
    // Predicated region
    $region38: #{tpu_custom_call.1} parent=1 // pred_check
      _
    $region39: #{tpu_custom_call.1} parent=1 // pred_check_branch
      %78 = sbr.rel (0) target = $region41
    $region40: #{tpu_custom_call.1} parent=1 // pred_region
      _
    $region41: #{tpu_custom_call.1} parent=1 // pred_fallthru
      _
    // Predicated region
    $region42: #{tpu_custom_call.1} parent=1 // pred_check
      _
    $region43: #{tpu_custom_call.1} parent=1 // pred_check_branch
      %80 = sbr.rel (0) target = $region45
    $region44: #{tpu_custom_call.1} parent=1 // pred_region
      %81 = dma.done [#allocation5], 256
    $region45: #{tpu_custom_call.1} parent=1 // pred_fallthru
      _
    // Predicated region
    $region46: #{tpu_custom_call.1} parent=1 // pred_check
      _
    $region47: #{tpu_custom_call.1} parent=1 // pred_check_branch
      %83 = sbr.rel (0) target = $region49
    $region48: #{tpu_custom_call.1} parent=1 // pred_region
      %84 = dma.done [#allocation8], 512
    $region49: #{tpu_custom_call.1} parent=1 // pred_fallthru
      _
    // Predicated region
    $region50: #{tpu_custom_call.1} parent=1 // pred_check
      _
    $region51: #{tpu_custom_call.1} parent=1 // pred_check_branch
      %86 = sbr.rel (0) target = $region53
    $region52: #{tpu_custom_call.1} parent=1 // pred_region
      %87 = dma.done [#allocation8], 512
    $region53: #{tpu_custom_call.1} parent=1 // pred_fallthru
      _
    // Predicated region
    $region54: #{tpu_custom_call.1} parent=1 // pred_check
      _
    $region55: #{tpu_custom_call.1} parent=1 // pred_check_branch
      %89 = sbr.rel (0) target = $region57
    $region56: #{tpu_custom_call.1} parent=1 // pred_region
      %90 = dma.done [#allocation11], 512
    $region57: #{tpu_custom_call.1} parent=1 // pred_fallthru
      _
    %v91 = vld [vmem:[%s0] sm:$0xff]
    %v92 = vld [vmem:[%s0 + $0x8] sm:$0xff]
    %v93 = vld [vmem:[%s0 + $0x10] sm:$0xff]
    %v94 = vld [vmem:[%s0 + $0x18] sm:$0xff]
    %v95 = vld [vmem:[%s0 + $0x20] sm:$0xff]
    %v96 = vld [vmem:[%s0 + $0x28] sm:$0xff]
    %v97 = vld [vmem:[%s0 + $0x30] sm:$0xff]
    %v98 = vld [vmem:[%s0 + $0x38] sm:$0xff]
    %v99 = vld [vmem:[#allocation7] sm:$0xff]
    %v100 = vld [vmem:[#allocation7 + $0x8] sm:$0xff]
    %v101 = vld [vmem:[#allocation7 + $0x10] sm:$0xff]
    %v102 = vld [vmem:[#allocation7 + $0x18] sm:$0xff]
    %v103 = vld [vmem:[#allocation4] sm:$0xff]
    %v104 = vld [vmem:[#allocation4 + $0x8] sm:$0xff]
    %v105 = vld [vmem:[%s4] sm:$0x1]
    %v107 = vlaneseq
    %v108 = vshrl.u32 %v107, 7
    %v109 = vsub.s32 0, %v108
    %v110 = vrot.slane %v105, %v109
    %vm112 = vcmask 130048
    %v114 = vsel %vm112, %v91, 0
    %v117 = vsel %vm112, %v92, 0
    %v120 = vsel %vm112, %v93, 0
    %v123 = vsel %vm112, %v94, 0
    %v126 = vsel %vm112, %v95, 0
    %v129 = vsel %vm112, %v96, 0
    %v132 = vsel %vm112, %v97, 0
    %v135 = vsel %vm112, %v98, 0
    %137 = vmatprep.subr.mxu0 0.0
    %138 = vmatpush1.msra.mxu0 %v103
    %139 = vmatprep.subr.mxu0 0.0
    %140 = vmatpush1.msra.mxu0 %v104
    %141 = vmatprep.subr.mxu0 0.0
    %142 = vmatpush1.msra.mxu0 0.0
    %143 = vmatprep.subr.mxu0 0.0
    %144 = vmatpush1.msra.mxu0 0.0
    %145 = vmatprep.subr.mxu0 0.0
    %146 = vmatpush1.msra.mxu0 0.0
    %147 = vmatprep.subr.mxu0 0.0
    %148 = vmatpush1.msra.mxu0 0.0
    %149 = vmatprep.subr.mxu0 0.0
    %150 = vmatpush1.msra.mxu0 0.0
    %151 = vmatprep.subr.mxu0 0.0
    %152 = vmatpush1.msra.mxu0 0.0
    %153 = vmatprep.subr.mxu0 0.0
    %154 = vmatpush1.msra.mxu0 0.0
    %155 = vmatprep.subr.mxu0 0.0
    %156 = vmatpush1.msra.mxu0 0.0
    %157 = vmatprep.subr.mxu0 0.0
    %158 = vmatpush1.msra.mxu0 0.0
    %159 = vmatprep.subr.mxu0 0.0
    %160 = vmatpush1.msra.mxu0 0.0
    %161 = vmatprep.subr.mxu0 0.0
    %162 = vmatpush1.msra.mxu0 0.0
    %163 = vmatprep.subr.mxu0 0.0
    %164 = vmatpush1.msra.mxu0 0.0
    %165 = vmatprep.subr.mxu0 0.0
    %166 = vmatpush1.msra.mxu0 0.0
    %167 = vmatprep.subr.mxu0 0.0
    %168 = vmatpush1.msra.mxu0 0.0
    %169 = vmatprep.subr.mxu0 0.0
    %170 = vmatpush1.msra.mxu0 0.0
    %171 = vmatprep.subr.mxu0 0.0
    %172 = vmatpush1.msra.mxu0 0.0
    %173 = vmatprep.subr.mxu0 0.0
    %174 = vmatpush1.msra.mxu0 0.0
    %175 = vmatprep.subr.mxu0 0.0
    %176 = vmatpush1.msra.mxu0 0.0
    %177 = vmatprep.subr.mxu0 0.0
    %178 = vmatpush1.msra.mxu0 0.0
    %179 = vmatprep.subr.mxu0 0.0
    %180 = vmatpush1.msra.mxu0 0.0
    %181 = vmatprep.subr.mxu0 0.0
    %182 = vmatpush1.msra.mxu0 0.0
    %183 = vmatprep.subr.mxu0 0.0
    %184 = vmatpush1.msra.mxu0 0.0
    %185 = vmatprep.subr.mxu0 0.0
    %186 = vmatpush1.msra.mxu0 0.0
    %187 = vmatprep.subr.mxu0 0.0
    %188 = vmatpush1.msra.mxu0 0.0
    %189 = vmatprep.subr.mxu0 0.0
    %190 = vmatpush1.msra.mxu0 0.0
    %191 = vmatprep.subr.mxu0 0.0
    %192 = vmatpush1.msra.mxu0 0.0
    %193 = vmatprep.subr.mxu0 0.0
    %194 = vmatpush1.msra.mxu0 0.0
    %195 = vmatprep.subr.mxu0 0.0
    %196 = vmatpush1.msra.mxu0 0.0
    %197 = vmatprep.subr.mxu0 0.0
    %198 = vmatpush1.msra.mxu0 0.0
    %199 = vmatprep.subr.mxu0 0.0
    %200 = vmatpush1.msra.mxu0 0.0
    %201 = vmatprep.mubr.f32.mxu0 0.0
    %202 = vmatmul.mubr.f32.gmra.mrb[0].mxu0 %v114
    %v203 = vpop.f32.mrb[0].mxu0
    %v204 = vadd.f32 %v110, %v203
    %v205 = vpop.f32.mrb[0].mxu0
    %206 = vmatprep.mubr.f32.mxu0 0.0
    %207 = vmatmul.mubr.f32.gmra.mrb[0].mxu0 %v117
    %v208 = vpop.f32.mrb[0].mxu0
    %v209 = vadd.f32 %v110, %v208
    %v210 = vpop.f32.mrb[0].mxu0
    %211 = vmatprep.mubr.f32.mxu0 0.0
    %212 = vmatmul.mubr.f32.gmra.mrb[0].mxu0 %v120
    %v213 = vpop.f32.mrb[0].mxu0
    %v214 = vadd.f32 %v110, %v213
    %v215 = vpop.f32.mrb[0].mxu0
    %216 = vmatprep.mubr.f32.mxu0 0.0
    %217 = vmatmul.mubr.f32.gmra.mrb[0].mxu0 %v123
    %v218 = vpop.f32.mrb[0].mxu0
    %v219 = vadd.f32 %v110, %v218
    %v220 = vpop.f32.mrb[0].mxu0
    %221 = vmatprep.mubr.f32.mxu0 0.0
    %222 = vmatmul.mubr.f32.gmra.mrb[0].mxu0 %v126
    %v223 = vpop.f32.mrb[0].mxu0
    %v224 = vadd.f32 %v110, %v223
    %v225 = vpop.f32.mrb[0].mxu0
    %226 = vmatprep.mubr.f32.mxu0 0.0
    %227 = vmatmul.mubr.f32.gmra.mrb[0].mxu0 %v129
    %v228 = vpop.f32.mrb[0].mxu0
    %v229 = vadd.f32 %v110, %v228
    %v230 = vpop.f32.mrb[0].mxu0
    %231 = vmatprep.mubr.f32.mxu0 0.0
    %232 = vmatmul.mubr.f32.gmra.mrb[0].mxu0 %v132
    %v233 = vpop.f32.mrb[0].mxu0
    %v234 = vadd.f32 %v110, %v233
    %v235 = vpop.f32.mrb[0].mxu0
    %236 = vmatprep.mubr.f32.mxu0 0.0
    %237 = vmatmul.mubr.f32.gmra.mrb[0].mxu0 %v135
    %v238 = vpop.f32.mrb[0].mxu0
    %v239 = vadd.f32 %v110, %v238
    %v240 = vpop.f32.mrb[0].mxu0
    %241 = vdwg.mxu0
    %242 = vst [vmem:[#allocation2] sm:$0xff] %v204
    %243 = vst [vmem:[#allocation2 + $0x8] sm:$0xff] %v209
    %244 = vst [vmem:[#allocation2 + $0x10] sm:$0xff] %v214
    %245 = vst [vmem:[#allocation2 + $0x18] sm:$0xff] %v219
    %246 = vst [vmem:[#allocation2 + $0x20] sm:$0xff] %v224
    %247 = vst [vmem:[#allocation2 + $0x28] sm:$0xff] %v229
    %248 = vst [vmem:[#allocation2 + $0x30] sm:$0xff] %v234
    %249 = vst [vmem:[#allocation2 + $0x38] sm:$0xff] %v239
    %v250 = vld [vmem:[#allocation2] sm:$0xff]
    %vm251 = vcmask 261120
    %v253 = vsel %vm251, 0.0, 0
    %255 = vmatprep.subr.mxu0 0.0
    %256 = vmatpush1.msra.mxu0 %v99
    %257 = vmatprep.subr.mxu0 0.0
    %258 = vmatpush1.msra.mxu0 %v100
    %259 = vmatprep.subr.mxu0 0.0
    %260 = vmatpush1.msra.mxu0 %v101
    %261 = vmatprep.subr.mxu0 0.0
    %262 = vmatpush1.msra.mxu0 %v102
    %263 = vmatprep.subr.mxu0 0.0
    %264 = vmatpush1.msra.mxu0 0.0
    %265 = vmatprep.subr.mxu0 0.0
    %266 = vmatpush1.msra.mxu0 0.0
    %267 = vmatprep.subr.mxu0 0.0
    %268 = vmatpush1.msra.mxu0 0.0
    %269 = vmatprep.subr.mxu0 0.0
    %270 = vmatpush1.msra.mxu0 0.0
    %271 = vmatprep.subr.mxu0 0.0
    %272 = vmatpush1.msra.mxu0 0.0
    %273 = vmatprep.subr.mxu0 0.0
    %274 = vmatpush1.msra.mxu0 0.0
    %275 = vmatprep.subr.mxu0 0.0
    %276 = vmatpush1.msra.mxu0 0.0
    %277 = vmatprep.subr.mxu0 0.0
    %278 = vmatpush1.msra.mxu0 0.0
    %279 = vmatprep.subr.mxu0 0.0
    %280 = vmatpush1.msra.mxu0 0.0
    %281 = vmatprep.subr.mxu0 0.0
    %282 = vmatpush1.msra.mxu0 0.0
    %283 = vmatprep.subr.mxu0 0.0
    %284 = vmatpush1.msra.mxu0 0.0
    %285 = vmatprep.subr.mxu0 0.0
    %286 = vmatpush1.msra.mxu0 0.0
    %287 = vmatprep.subr.mxu0 0.0
    %288 = vmatpush1.msra.mxu0 0.0
    %289 = vmatprep.subr.mxu0 0.0
    %290 = vmatpush1.msra.mxu0 0.0
    %291 = vmatprep.subr.mxu0 0.0
    %292 = vmatpush1.msra.mxu0 0.0
    %293 = vmatprep.subr.mxu0 0.0
    %294 = vmatpush1.msra.mxu0 0.0
    %295 = vmatprep.subr.mxu0 0.0
    %296 = vmatpush1.msra.mxu0 0.0
    %297 = vmatprep.subr.mxu0 0.0
    %298 = vmatpush1.msra.mxu0 0.0
    %299 = vmatprep.subr.mxu0 0.0
    %300 = vmatpush1.msra.mxu0 0.0
    %301 = vmatprep.subr.mxu0 0.0
    %302 = vmatpush1.msra.mxu0 0.0
    %303 = vmatprep.subr.mxu0 0.0
    %304 = vmatpush1.msra.mxu0 0.0
    %305 = vmatprep.subr.mxu0 0.0
    %306 = vmatpush1.msra.mxu0 0.0
    %307 = vmatprep.subr.mxu0 0.0
    %308 = vmatpush1.msra.mxu0 0.0
    %309 = vmatprep.subr.mxu0 0.0
    %310 = vmatpush1.msra.mxu0 0.0
    %311 = vmatprep.subr.mxu0 0.0
    %312 = vmatpush1.msra.mxu0 0.0
    %313 = vmatprep.subr.mxu0 0.0
    %314 = vmatpush1.msra.mxu0 0.0
    %315 = vmatprep.subr.mxu0 0.0
    %316 = vmatpush1.msra.mxu0 0.0
    %317 = vmatprep.subr.mxu0 0.0
    %318 = vmatpush1.msra.mxu0 0.0
    %319 = vmatprep.mubr.f32.mxu0 0.0
    %320 = vmatmul.mubr.f32.gmra.mrb[0].mxu0 %v253
    %v321 = vpop.f32.mrb[0].mxu0
    %v322 = vadd.f32 0.0, %v321
    %v323 = vpop.f32.mrb[0].mxu0
    %324 = vdwg.mxu0
    %v325 = vadd.f32 %v250, %v322
    %v326 = vxor.u32 %v325, 2147483648
    %v327 = vmul.f32 %v326, 1.442695
    %v328 = vpow.pop %v327
    %v329 = vadd.f32 %v328, 1.0
    %v330 = vrcp.pop %v329
    %v331 = vmul.f32 1.0, %v330
    %v332 = vtanh.pop %v325
    %v333 = vmul.f32 %v331, 0.0
    %335 = vrot.lane.b32.xlu0 %v332, 32
    %v336 = vpop.permute.xlu0 %335
    %v338 = vmul.f32 %v331, %v336
    %340 = vrot.lane.b32.xlu0 %v338, 32
    %v341 = vpop.permute.xlu0 %340
    %v343 = vadd.f32 %v333, %v341
    %v344 = vtanh.pop %v343
    %346 = vrot.lane.b32.xlu0 %v344, 32
    %v347 = vpop.permute.xlu0 %346
    %v349 = vmul.f32 %v331, %v347
    %351 = vrot.lane.b32.xlu0 %v349, 64
    %v352 = vpop.permute.xlu0 %351
    %354 = vst.msk [vmem:[#allocation3] sm:$0xff] %vm251, %v352
    %s355 = scalar_lea.vmem [#allocation2], 8
    %v356 = vld [vmem:[%s355] sm:$0xff]
    %v357 = vsel %vm251, %v352, 0
    %359 = vmatprep.subr.mxu0 0.0
    %360 = vmatpush1.msra.mxu0 %v99
    %361 = vmatprep.subr.mxu0 0.0
    %362 = vmatpush1.msra.mxu0 %v100
    %363 = vmatprep.subr.mxu0 0.0
    %364 = vmatpush1.msra.mxu0 %v101
    %365 = vmatprep.subr.mxu0 0.0
    %366 = vmatpush1.msra.mxu0 %v102
    %367 = vmatprep.subr.mxu0 0.0
    %368 = vmatpush1.msra.mxu0 0.0
    %369 = vmatprep.subr.mxu0 0.0
    %370 = vmatpush1.msra.mxu0 0.0
    %371 = vmatprep.subr.mxu0 0.0
    %372 = vmatpush1.msra.mxu0 0.0
    %373 = vmatprep.subr.mxu0 0.0
    %374 = vmatpush1.msra.mxu0 0.0
    %375 = vmatprep.subr.mxu0 0.0
    %376 = vmatpush1.msra.mxu0 0.0
    %377 = vmatprep.subr.mxu0 0.0
    %378 = vmatpush1.msra.mxu0 0.0
    %379 = vmatprep.subr.mxu0 0.0
    %380 = vmatpush1.msra.mxu0 0.0
    %381 = vmatprep.subr.mxu0 0.0
    %382 = vmatpush1.msra.mxu0 0.0
    %383 = vmatprep.subr.mxu0 0.0
    %384 = vmatpush1.msra.mxu0 0.0
    %385 = vmatprep.subr.mxu0 0.0
    %386 = vmatpush1.msra.mxu0 0.0
    %387 = vmatprep.subr.mxu0 0.0
    %388 = vmatpush1.msra.mxu0 0.0
    %389 = vmatprep.subr.mxu0 0.0
    %390 = vmatpush1.msra.mxu0 0.0
    %391 = vmatprep.subr.mxu0 0.0
    %392 = vmatpush1.msra.mxu0 0.0
    %393 = vmatprep.subr.mxu0 0.0
    %394 = vmatpush1.msra.mxu0 0.0
    %395 = vmatprep.subr.mxu0 0.0
    %396 = vmatpush1.msra.mxu0 0.0
    %397 = vmatprep.subr.mxu0 0.0
    %398 = vmatpush1.msra.mxu0 0.0
    %399 = vmatprep.subr.mxu0 0.0
    %400 = vmatpush1.msra.mxu0 0.0
    %401 = vmatprep.subr.mxu0 0.0
    %402 = vmatpush1.msra.mxu0 0.0
    %403 = vmatprep.subr.mxu0 0.0
    %404 = vmatpush1.msra.mxu0 0.0
    %405 = vmatprep.subr.mxu0 0.0
    %406 = vmatpush1.msra.mxu0 0.0
    %407 = vmatprep.subr.mxu0 0.0
    %408 = vmatpush1.msra.mxu0 0.0
    %409 = vmatprep.subr.mxu0 0.0
    %410 = vmatpush1.msra.mxu0 0.0
    %411 = vmatprep.subr.mxu0 0.0
    %412 = vmatpush1.msra.mxu0 0.0
    %413 = vmatprep.subr.mxu0 0.0
    %414 = vmatpush1.msra.mxu0 0.0
    %415 = vmatprep.subr.mxu0 0.0
    %416 = vmatpush1.msra.mxu0 0.0
    %417 = vmatprep.subr.mxu0 0.0
    %418 = vmatpush1.msra.mxu0 0.0
    %419 = vmatprep.subr.mxu0 0.0
    %420 = vmatpush1.msra.mxu0 0.0
    %421 = vmatprep.subr.mxu0 0.0
    %422 = vmatpush1.msra.mxu0 0.0
    %423 = vmatprep.mubr.f32.mxu0 0.0
    %424 = vmatmul.mubr.f32.gmra.mrb[0].mxu0 %v357
    %v425 = vpop.f32.mrb[0].mxu0
    %v426 = vadd.f32 0.0, %v425
    %v427 = vpop.f32.mrb[0].mxu0
    %428 = vdwg.mxu0
    %v429 = vadd.f32 %v356, %v426
    %v430 = vxor.u32 %v429, 2147483648
    %v431 = vmul.f32 %v430, 1.442695
    %v432 = vpow.pop %v431
    %v433 = vadd.f32 %v432, 1.0
    %v434 = vrcp.pop %v433
    %v435 = vmul.f32 1.0, %v434
    %v436 = vtanh.pop %v429
    %v437 = vmul.f32 %v435, %v343
    %439 = vrot.lane.b32.xlu0 %v436, 32
    %v440 = vpop.permute.xlu0 %439
    %v442 = vmul.f32 %v435, %v440
    %444 = vrot.lane.b32.xlu0 %v442, 32
    %v445 = vpop.permute.xlu0 %444
    %v447 = vadd.f32 %v437, %v445
    %v448 = vtanh.pop %v447
    %450 = vrot.lane.b32.xlu0 %v448, 32
    %v451 = vpop.permute.xlu0 %450
    %v453 = vmul.f32 %v435, %v451
    %455 = vrot.lane.b32.xlu0 %v453, 64
    %v456 = vpop.permute.xlu0 %455
    %s458 = scalar_lea.vmem [#allocation3], 8
    %459 = vst.msk [vmem:[%s458] sm:$0xff] %vm251, %v456
    %s460 = scalar_lea.vmem [#allocation2], 16
    %v461 = vld [vmem:[%s460] sm:$0xff]
    %v462 = vsel %vm251, %v456, 0
    %464 = vmatprep.subr.mxu0 0.0
    %465 = vmatpush1.msra.mxu0 %v99
    %466 = vmatprep.subr.mxu0 0.0
    %467 = vmatpush1.msra.mxu0 %v100
    %468 = vmatprep.subr.mxu0 0.0
    %469 = vmatpush1.msra.mxu0 %v101
    %470 = vmatprep.subr.mxu0 0.0
    %471 = vmatpush1.msra.mxu0 %v102
    %472 = vmatprep.subr.mxu0 0.0
    %473 = vmatpush1.msra.mxu0 0.0
    %474 = vmatprep.subr.mxu0 0.0
    %475 = vmatpush1.msra.mxu0 0.0
    %476 = vmatprep.subr.mxu0 0.0
    %477 = vmatpush1.msra.mxu0 0.0
    %478 = vmatprep.subr.mxu0 0.0
    %479 = vmatpush1.msra.mxu0 0.0
    %480 = vmatprep.subr.mxu0 0.0
    %481 = vmatpush1.msra.mxu0 0.0
    %482 = vmatprep.subr.mxu0 0.0
    %483 = vmatpush1.msra.mxu0 0.0
    %484 = vmatprep.subr.mxu0 0.0
    %485 = vmatpush1.msra.mxu0 0.0
    %486 = vmatprep.subr.mxu0 0.0
    %487 = vmatpush1.msra.mxu0 0.0
    %488 = vmatprep.subr.mxu0 0.0
    %489 = vmatpush1.msra.mxu0 0.0
    %490 = vmatprep.subr.mxu0 0.0
    %491 = vmatpush1.msra.mxu0 0.0
    %492 = vmatprep.subr.mxu0 0.0
    %493 = vmatpush1.msra.mxu0 0.0
    %494 = vmatprep.subr.mxu0 0.0
    %495 = vmatpush1.msra.mxu0 0.0
    %496 = vmatprep.subr.mxu0 0.0
    %497 = vmatpush1.msra.mxu0 0.0
    %498 = vmatprep.subr.mxu0 0.0
    %499 = vmatpush1.msra.mxu0 0.0
    %500 = vmatprep.subr.mxu0 0.0
    %501 = vmatpush1.msra.mxu0 0.0
    %502 = vmatprep.subr.mxu0 0.0
    %503 = vmatpush1.msra.mxu0 0.0
    %504 = vmatprep.subr.mxu0 0.0
    %505 = vmatpush1.msra.mxu0 0.0
    %506 = vmatprep.subr.mxu0 0.0
    %507 = vmatpush1.msra.mxu0 0.0
    %508 = vmatprep.subr.mxu0 0.0
    %509 = vmatpush1.msra.mxu0 0.0
    %510 = vmatprep.subr.mxu0 0.0
    %511 = vmatpush1.msra.mxu0 0.0
    %512 = vmatprep.subr.mxu0 0.0
    %513 = vmatpush1.msra.mxu0 0.0
    %514 = vmatprep.subr.mxu0 0.0
    %515 = vmatpush1.msra.mxu0 0.0
    %516 = vmatprep.subr.mxu0 0.0
    %517 = vmatpush1.msra.mxu0 0.0
    %518 = vmatprep.subr.mxu0 0.0
    %519 = vmatpush1.msra.mxu0 0.0
    %520 = vmatprep.subr.mxu0 0.0
    %521 = vmatpush1.msra.mxu0 0.0
    %522 = vmatprep.subr.mxu0 0.0
    %523 = vmatpush1.msra.mxu0 0.0
    %524 = vmatprep.subr.mxu0 0.0
    %525 = vmatpush1.msra.mxu0 0.0
    %526 = vmatprep.subr.mxu0 0.0
    %527 = vmatpush1.msra.mxu0 0.0
    %528 = vmatprep.mubr.f32.mxu0 0.0
    %529 = vmatmul.mubr.f32.gmra.mrb[0].mxu0 %v462
    %v530 = vpop.f32.mrb[0].mxu0
    %v531 = vadd.f32 0.0, %v530
    %v532 = vpop.f32.mrb[0].mxu0
    %533 = vdwg.mxu0
    %v534 = vadd.f32 %v461, %v531
    %v535 = vxor.u32 %v534, 2147483648
    %v536 = vmul.f32 %v535, 1.442695
    %v537 = vpow.pop %v536
    %v538 = vadd.f32 %v537, 1.0
    %v539 = vrcp.pop %v538
    %v540 = vmul.f32 1.0, %v539
    %v541 = vtanh.pop %v534
    %v542 = vmul.f32 %v540, %v447
    %544 = vrot.lane.b32.xlu0 %v541, 32
    %v545 = vpop.permute.xlu0 %544
    %v547 = vmul.f32 %v540, %v545
    %549 = vrot.lane.b32.xlu0 %v547, 32
    %v550 = vpop.permute.xlu0 %549
    %v552 = vadd.f32 %v542, %v550
    %v553 = vtanh.pop %v552
    %555 = vrot.lane.b32.xlu0 %v553, 32
    %v556 = vpop.permute.xlu0 %555
    %v558 = vmul.f32 %v540, %v556
    %560 = vrot.lane.b32.xlu0 %v558, 64
    %v561 = vpop.permute.xlu0 %560
    %s563 = scalar_lea.vmem [#allocation3], 16
    %564 = vst.msk [vmem:[%s563] sm:$0xff] %vm251, %v561
    %s565 = scalar_lea.vmem [#allocation2], 24
    %v566 = vld [vmem:[%s565] sm:$0xff]
    %v567 = vsel %vm251, %v561, 0
    %569 = vmatprep.subr.mxu0 0.0
    %570 = vmatpush1.msra.mxu0 %v99
    %571 = vmatprep.subr.mxu0 0.0
    %572 = vmatpush1.msra.mxu0 %v100
    %573 = vmatprep.subr.mxu0 0.0
    %574 = vmatpush1.msra.mxu0 %v101
    %575 = vmatprep.subr.mxu0 0.0
    %576 = vmatpush1.msra.mxu0 %v102
    %577 = vmatprep.subr.mxu0 0.0
    %578 = vmatpush1.msra.mxu0 0.0
    %579 = vmatprep.subr.mxu0 0.0
    %580 = vmatpush1.msra.mxu0 0.0
    %581 = vmatprep.subr.mxu0 0.0
    %582 = vmatpush1.msra.mxu0 0.0
    %583 = vmatprep.subr.mxu0 0.0
    %584 = vmatpush1.msra.mxu0 0.0
    %585 = vmatprep.subr.mxu0 0.0
    %586 = vmatpush1.msra.mxu0 0.0
    %587 = vmatprep.subr.mxu0 0.0
    %588 = vmatpush1.msra.mxu0 0.0
    %589 = vmatprep.subr.mxu0 0.0
    %590 = vmatpush1.msra.mxu0 0.0
    %591 = vmatprep.subr.mxu0 0.0
    %592 = vmatpush1.msra.mxu0 0.0
    %593 = vmatprep.subr.mxu0 0.0
    %594 = vmatpush1.msra.mxu0 0.0
    %595 = vmatprep.subr.mxu0 0.0
    %596 = vmatpush1.msra.mxu0 0.0
    %597 = vmatprep.subr.mxu0 0.0
    %598 = vmatpush1.msra.mxu0 0.0
    %599 = vmatprep.subr.mxu0 0.0
    %600 = vmatpush1.msra.mxu0 0.0
    %601 = vmatprep.subr.mxu0 0.0
    %602 = vmatpush1.msra.mxu0 0.0
    %603 = vmatprep.subr.mxu0 0.0
    %604 = vmatpush1.msra.mxu0 0.0
    %605 = vmatprep.subr.mxu0 0.0
    %606 = vmatpush1.msra.mxu0 0.0
    %607 = vmatprep.subr.mxu0 0.0
    %608 = vmatpush1.msra.mxu0 0.0
    %609 = vmatprep.subr.mxu0 0.0
    %610 = vmatpush1.msra.mxu0 0.0
    %611 = vmatprep.subr.mxu0 0.0
    %612 = vmatpush1.msra.mxu0 0.0
    %613 = vmatprep.subr.mxu0 0.0
    %614 = vmatpush1.msra.mxu0 0.0
    %615 = vmatprep.subr.mxu0 0.0
    %616 = vmatpush1.msra.mxu0 0.0
    %617 = vmatprep.subr.mxu0 0.0
    %618 = vmatpush1.msra.mxu0 0.0
    %619 = vmatprep.subr.mxu0 0.0
    %620 = vmatpush1.msra.mxu0 0.0
    %621 = vmatprep.subr.mxu0 0.0
    %622 = vmatpush1.msra.mxu0 0.0
    %623 = vmatprep.subr.mxu0 0.0
    %624 = vmatpush1.msra.mxu0 0.0
    %625 = vmatprep.subr.mxu0 0.0
    %626 = vmatpush1.msra.mxu0 0.0
    %627 = vmatprep.subr.mxu0 0.0
    %628 = vmatpush1.msra.mxu0 0.0
    %629 = vmatprep.subr.mxu0 0.0
    %630 = vmatpush1.msra.mxu0 0.0
    %631 = vmatprep.subr.mxu0 0.0
    %632 = vmatpush1.msra.mxu0 0.0
    %633 = vmatprep.mubr.f32.mxu0 0.0
    %634 = vmatmul.mubr.f32.gmra.mrb[0].mxu0 %v567
    %v635 = vpop.f32.mrb[0].mxu0
    %v636 = vadd.f32 0.0, %v635
    %v637 = vpop.f32.mrb[0].mxu0
    %638 = vdwg.mxu0
    %v639 = vadd.f32 %v566, %v636
    %v640 = vxor.u32 %v639, 2147483648
    %v641 = vmul.f32 %v640, 1.442695
    %v642 = vpow.pop %v641
    %v643 = vadd.f32 %v642, 1.0
    %v644 = vrcp.pop %v643
    %v645 = vmul.f32 1.0, %v644
    %v646 = vtanh.pop %v639
    %v647 = vmul.f32 %v645, %v552
    %649 = vrot.lane.b32.xlu0 %v646, 32
    %v650 = vpop.permute.xlu0 %649
    %v652 = vmul.f32 %v645, %v650
    %654 = vrot.lane.b32.xlu0 %v652, 32
    %v655 = vpop.permute.xlu0 %654
    %v657 = vadd.f32 %v647, %v655
    %v658 = vtanh.pop %v657
    %660 = vrot.lane.b32.xlu0 %v658, 32
    %v661 = vpop.permute.xlu0 %660
    %v663 = vmul.f32 %v645, %v661
    %665 = vrot.lane.b32.xlu0 %v663, 64
    %v666 = vpop.permute.xlu0 %665
    %s668 = scalar_lea.vmem [#allocation3], 24
    %669 = vst.msk [vmem:[%s668] sm:$0xff] %vm251, %v666
    %s670 = scalar_lea.vmem [#allocation2], 32
    %v671 = vld [vmem:[%s670] sm:$0xff]
    %v672 = vsel %vm251, %v666, 0
    %674 = vmatprep.subr.mxu0 0.0
    %675 = vmatpush1.msra.mxu0 %v99
    %676 = vmatprep.subr.mxu0 0.0
    %677 = vmatpush1.msra.mxu0 %v100
    %678 = vmatprep.subr.mxu0 0.0
    %679 = vmatpush1.msra.mxu0 %v101
    %680 = vmatprep.subr.mxu0 0.0
    %681 = vmatpush1.msra.mxu0 %v102
    %682 = vmatprep.subr.mxu0 0.0
    %683 = vmatpush1.msra.mxu0 0.0
    %684 = vmatprep.subr.mxu0 0.0
    %685 = vmatpush1.msra.mxu0 0.0
    %686 = vmatprep.subr.mxu0 0.0
    %687 = vmatpush1.msra.mxu0 0.0
    %688 = vmatprep.subr.mxu0 0.0
    %689 = vmatpush1.msra.mxu0 0.0
    %690 = vmatprep.subr.mxu0 0.0
    %691 = vmatpush1.msra.mxu0 0.0
    %692 = vmatprep.subr.mxu0 0.0
    %693 = vmatpush1.msra.mxu0 0.0
    %694 = vmatprep.subr.mxu0 0.0
    %695 = vmatpush1.msra.mxu0 0.0
    %696 = vmatprep.subr.mxu0 0.0
    %697 = vmatpush1.msra.mxu0 0.0
    %698 = vmatprep.subr.mxu0 0.0
    %699 = vmatpush1.msra.mxu0 0.0
    %700 = vmatprep.subr.mxu0 0.0
    %701 = vmatpush1.msra.mxu0 0.0
    %702 = vmatprep.subr.mxu0 0.0
    %703 = vmatpush1.msra.mxu0 0.0
    %704 = vmatprep.subr.mxu0 0.0
    %705 = vmatpush1.msra.mxu0 0.0
    %706 = vmatprep.subr.mxu0 0.0
    %707 = vmatpush1.msra.mxu0 0.0
    %708 = vmatprep.subr.mxu0 0.0
    %709 = vmatpush1.msra.mxu0 0.0
    %710 = vmatprep.subr.mxu0 0.0
    %711 = vmatpush1.msra.mxu0 0.0
    %712 = vmatprep.subr.mxu0 0.0
    %713 = vmatpush1.msra.mxu0 0.0
    %714 = vmatprep.subr.mxu0 0.0
    %715 = vmatpush1.msra.mxu0 0.0
    %716 = vmatprep.subr.mxu0 0.0
    %717 = vmatpush1.msra.mxu0 0.0
    %718 = vmatprep.subr.mxu0 0.0
    %719 = vmatpush1.msra.mxu0 0.0
    %720 = vmatprep.subr.mxu0 0.0
    %721 = vmatpush1.msra.mxu0 0.0
    %722 = vmatprep.subr.mxu0 0.0
    %723 = vmatpush1.msra.mxu0 0.0
    %724 = vmatprep.subr.mxu0 0.0
    %725 = vmatpush1.msra.mxu0 0.0
    %726 = vmatprep.subr.mxu0 0.0
    %727 = vmatpush1.msra.mxu0 0.0
    %728 = vmatprep.subr.mxu0 0.0
    %729 = vmatpush1.msra.mxu0 0.0
    %730 = vmatprep.subr.mxu0 0.0
    %731 = vmatpush1.msra.mxu0 0.0
    %732 = vmatprep.subr.mxu0 0.0
    %733 = vmatpush1.msra.mxu0 0.0
    %734 = vmatprep.subr.mxu0 0.0
    %735 = vmatpush1.msra.mxu0 0.0
    %736 = vmatprep.subr.mxu0 0.0
    %737 = vmatpush1.msra.mxu0 0.0
    %738 = vmatprep.mubr.f32.mxu0 0.0
    %739 = vmatmul.mubr.f32.gmra.mrb[0].mxu0 %v672
    %v740 = vpop.f32.mrb[0].mxu0
    %v741 = vadd.f32 0.0, %v740
    %v742 = vpop.f32.mrb[0].mxu0
    %743 = vdwg.mxu0
    %v744 = vadd.f32 %v671, %v741
    %v745 = vxor.u32 %v744, 2147483648
    %v746 = vmul.f32 %v745, 1.442695
    %v747 = vpow.pop %v746
    %v748 = vadd.f32 %v747, 1.0
    %v749 = vrcp.pop %v748
    %v750 = vmul.f32 1.0, %v749
    %v751 = vtanh.pop %v744
    %v752 = vmul.f32 %v750, %v657
    %754 = vrot.lane.b32.xlu0 %v751, 32
    %v755 = vpop.permute.xlu0 %754
    %v757 = vmul.f32 %v750, %v755
    %759 = vrot.lane.b32.xlu0 %v757, 32
    %v760 = vpop.permute.xlu0 %759
    %v762 = vadd.f32 %v752, %v760
    %v763 = vtanh.pop %v762
    %765 = vrot.lane.b32.xlu0 %v763, 32
    %v766 = vpop.permute.xlu0 %765
    %v768 = vmul.f32 %v750, %v766
    %770 = vrot.lane.b32.xlu0 %v768, 64
    %v771 = vpop.permute.xlu0 %770
    %s773 = scalar_lea.vmem [#allocation3], 32
    %774 = vst.msk [vmem:[%s773] sm:$0xff] %vm251, %v771
    %s775 = scalar_lea.vmem [#allocation2], 40
    %v776 = vld [vmem:[%s775] sm:$0xff]
    %v777 = vsel %vm251, %v771, 0
    %779 = vmatprep.subr.mxu0 0.0
    %780 = vmatpush1.msra.mxu0 %v99
    %781 = vmatprep.subr.mxu0 0.0
    %782 = vmatpush1.msra.mxu0 %v100
    %783 = vmatprep.subr.mxu0 0.0
    %784 = vmatpush1.msra.mxu0 %v101
    %785 = vmatprep.subr.mxu0 0.0
    %786 = vmatpush1.msra.mxu0 %v102
    %787 = vmatprep.subr.mxu0 0.0
    %788 = vmatpush1.msra.mxu0 0.0
    %789 = vmatprep.subr.mxu0 0.0
    %790 = vmatpush1.msra.mxu0 0.0
    %791 = vmatprep.subr.mxu0 0.0
    %792 = vmatpush1.msra.mxu0 0.0
    %793 = vmatprep.subr.mxu0 0.0
    %794 = vmatpush1.msra.mxu0 0.0
    %795 = vmatprep.subr.mxu0 0.0
    %796 = vmatpush1.msra.mxu0 0.0
    %797 = vmatprep.subr.mxu0 0.0
    %798 = vmatpush1.msra.mxu0 0.0
    %799 = vmatprep.subr.mxu0 0.0
    %800 = vmatpush1.msra.mxu0 0.0
    %801 = vmatprep.subr.mxu0 0.0
    %802 = vmatpush1.msra.mxu0 0.0
    %803 = vmatprep.subr.mxu0 0.0
    %804 = vmatpush1.msra.mxu0 0.0
    %805 = vmatprep.subr.mxu0 0.0
    %806 = vmatpush1.msra.mxu0 0.0
    %807 = vmatprep.subr.mxu0 0.0
    %808 = vmatpush1.msra.mxu0 0.0
    %809 = vmatprep.subr.mxu0 0.0
    %810 = vmatpush1.msra.mxu0 0.0
    %811 = vmatprep.subr.mxu0 0.0
    %812 = vmatpush1.msra.mxu0 0.0
    %813 = vmatprep.subr.mxu0 0.0
    %814 = vmatpush1.msra.mxu0 0.0
    %815 = vmatprep.subr.mxu0 0.0
    %816 = vmatpush1.msra.mxu0 0.0
    %817 = vmatprep.subr.mxu0 0.0
    %818 = vmatpush1.msra.mxu0 0.0
    %819 = vmatprep.subr.mxu0 0.0
    %820 = vmatpush1.msra.mxu0 0.0
    %821 = vmatprep.subr.mxu0 0.0
    %822 = vmatpush1.msra.mxu0 0.0
    %823 = vmatprep.subr.mxu0 0.0
    %824 = vmatpush1.msra.mxu0 0.0
    %825 = vmatprep.subr.mxu0 0.0
    %826 = vmatpush1.msra.mxu0 0.0
    %827 = vmatprep.subr.mxu0 0.0
    %828 = vmatpush1.msra.mxu0 0.0
    %829 = vmatprep.subr.mxu0 0.0
    %830 = vmatpush1.msra.mxu0 0.0
    %831 = vmatprep.subr.mxu0 0.0
    %832 = vmatpush1.msra.mxu0 0.0
    %833 = vmatprep.subr.mxu0 0.0
    %834 = vmatpush1.msra.mxu0 0.0
    %835 = vmatprep.subr.mxu0 0.0
    %836 = vmatpush1.msra.mxu0 0.0
    %837 = vmatprep.subr.mxu0 0.0
    %838 = vmatpush1.msra.mxu0 0.0
    %839 = vmatprep.subr.mxu0 0.0
    %840 = vmatpush1.msra.mxu0 0.0
    %841 = vmatprep.subr.mxu0 0.0
    %842 = vmatpush1.msra.mxu0 0.0
    %843 = vmatprep.mubr.f32.mxu0 0.0
    %844 = vmatmul.mubr.f32.gmra.mrb[0].mxu0 %v777
    %v845 = vpop.f32.mrb[0].mxu0
    %v846 = vadd.f32 0.0, %v845
    %v847 = vpop.f32.mrb[0].mxu0
    %848 = vdwg.mxu0
    %v849 = vadd.f32 %v776, %v846
    %v850 = vxor.u32 %v849, 2147483648
    %v851 = vmul.f32 %v850, 1.442695
    %v852 = vpow.pop %v851
    %v853 = vadd.f32 %v852, 1.0
    %v854 = vrcp.pop %v853
    %v855 = vmul.f32 1.0, %v854
    %v856 = vtanh.pop %v849
    %v857 = vmul.f32 %v855, %v762
    %859 = vrot.lane.b32.xlu0 %v856, 32
    %v860 = vpop.permute.xlu0 %859
    %v862 = vmul.f32 %v855, %v860
    %864 = vrot.lane.b32.xlu0 %v862, 32
    %v865 = vpop.permute.xlu0 %864
    %v867 = vadd.f32 %v857, %v865
    %v868 = vtanh.pop %v867
    %870 = vrot.lane.b32.xlu0 %v868, 32
    %v871 = vpop.permute.xlu0 %870
    %v873 = vmul.f32 %v855, %v871
    %875 = vrot.lane.b32.xlu0 %v873, 64
    %v876 = vpop.permute.xlu0 %875
    %s878 = scalar_lea.vmem [#allocation3], 40
    %879 = vst.msk [vmem:[%s878] sm:$0xff] %vm251, %v876
    %s880 = scalar_lea.vmem [#allocation2], 48
    %v881 = vld [vmem:[%s880] sm:$0xff]
    %v882 = vsel %vm251, %v876, 0
    %884 = vmatprep.subr.mxu0 0.0
    %885 = vmatpush1.msra.mxu0 %v99
    %886 = vmatprep.subr.mxu0 0.0
    %887 = vmatpush1.msra.mxu0 %v100
    %888 = vmatprep.subr.mxu0 0.0
    %889 = vmatpush1.msra.mxu0 %v101
    %890 = vmatprep.subr.mxu0 0.0
    %891 = vmatpush1.msra.mxu0 %v102
    %892 = vmatprep.subr.mxu0 0.0
    %893 = vmatpush1.msra.mxu0 0.0
    %894 = vmatprep.subr.mxu0 0.0
    %895 = vmatpush1.msra.mxu0 0.0
    %896 = vmatprep.subr.mxu0 0.0
    %897 = vmatpush1.msra.mxu0 0.0
    %898 = vmatprep.subr.mxu0 0.0
    %899 = vmatpush1.msra.mxu0 0.0
    %900 = vmatprep.subr.mxu0 0.0
    %901 = vmatpush1.msra.mxu0 0.0
    %902 = vmatprep.subr.mxu0 0.0
    %903 = vmatpush1.msra.mxu0 0.0
    %904 = vmatprep.subr.mxu0 0.0
    %905 = vmatpush1.msra.mxu0 0.0
    %906 = vmatprep.subr.mxu0 0.0
    %907 = vmatpush1.msra.mxu0 0.0
    %908 = vmatprep.subr.mxu0 0.0
    %909 = vmatpush1.msra.mxu0 0.0
    %910 = vmatprep.subr.mxu0 0.0
    %911 = vmatpush1.msra.mxu0 0.0
    %912 = vmatprep.subr.mxu0 0.0
    %913 = vmatpush1.msra.mxu0 0.0
    %914 = vmatprep.subr.mxu0 0.0
    %915 = vmatpush1.msra.mxu0 0.0
    %916 = vmatprep.subr.mxu0 0.0
    %917 = vmatpush1.msra.mxu0 0.0
    %918 = vmatprep.subr.mxu0 0.0
    %919 = vmatpush1.msra.mxu0 0.0
    %920 = vmatprep.subr.mxu0 0.0
    %921 = vmatpush1.msra.mxu0 0.0
    %922 = vmatprep.subr.mxu0 0.0
    %923 = vmatpush1.msra.mxu0 0.0
    %924 = vmatprep.subr.mxu0 0.0
    %925 = vmatpush1.msra.mxu0 0.0
    %926 = vmatprep.subr.mxu0 0.0
    %927 = vmatpush1.msra.mxu0 0.0
    %928 = vmatprep.subr.mxu0 0.0
    %929 = vmatpush1.msra.mxu0 0.0
    %930 = vmatprep.subr.mxu0 0.0
    %931 = vmatpush1.msra.mxu0 0.0
    %932 = vmatprep.subr.mxu0 0.0
    %933 = vmatpush1.msra.mxu0 0.0
    %934 = vmatprep.subr.mxu0 0.0
    %935 = vmatpush1.msra.mxu0 0.0
    %936 = vmatprep.subr.mxu0 0.0
    %937 = vmatpush1.msra.mxu0 0.0
    %938 = vmatprep.subr.mxu0 0.0
    %939 = vmatpush1.msra.mxu0 0.0
    %940 = vmatprep.subr.mxu0 0.0
    %941 = vmatpush1.msra.mxu0 0.0
    %942 = vmatprep.subr.mxu0 0.0
    %943 = vmatpush1.msra.mxu0 0.0
    %944 = vmatprep.subr.mxu0 0.0
    %945 = vmatpush1.msra.mxu0 0.0
    %946 = vmatprep.subr.mxu0 0.0
    %947 = vmatpush1.msra.mxu0 0.0
    %948 = vmatprep.mubr.f32.mxu0 0.0
    %949 = vmatmul.mubr.f32.gmra.mrb[0].mxu0 %v882
    %v950 = vpop.f32.mrb[0].mxu0
    %v951 = vadd.f32 0.0, %v950
    %v952 = vpop.f32.mrb[0].mxu0
    %953 = vdwg.mxu0
    %v954 = vadd.f32 %v881, %v951
    %v955 = vxor.u32 %v954, 2147483648
    %v956 = vmul.f32 %v955, 1.442695
    %v957 = vpow.pop %v956
    %v958 = vadd.f32 %v957, 1.0
    %v959 = vrcp.pop %v958
    %v960 = vmul.f32 1.0, %v959
    %v961 = vtanh.pop %v954
    %v962 = vmul.f32 %v960, %v867
    %964 = vrot.lane.b32.xlu0 %v961, 32
    %v965 = vpop.permute.xlu0 %964
    %v967 = vmul.f32 %v960, %v965
    %969 = vrot.lane.b32.xlu0 %v967, 32
    %v970 = vpop.permute.xlu0 %969
    %v972 = vadd.f32 %v962, %v970
    %v973 = vtanh.pop %v972
    %975 = vrot.lane.b32.xlu0 %v973, 32
    %v976 = vpop.permute.xlu0 %975
    %v978 = vmul.f32 %v960, %v976
    %980 = vrot.lane.b32.xlu0 %v978, 64
    %v981 = vpop.permute.xlu0 %980
    %s983 = scalar_lea.vmem [#allocation3], 48
    %984 = vst.msk [vmem:[%s983] sm:$0xff] %vm251, %v981
    %s985 = scalar_lea.vmem [#allocation2], 56
    %v986 = vld [vmem:[%s985] sm:$0xff]
    %v987 = vsel %vm251, %v981, 0
    %989 = vmatprep.subr.mxu0 0.0
    %990 = vmatpush1.msra.mxu0 %v99
    %991 = vmatprep.subr.mxu0 0.0
    %992 = vmatpush1.msra.mxu0 %v100
    %993 = vmatprep.subr.mxu0 0.0
    %994 = vmatpush1.msra.mxu0 %v101
    %995 = vmatprep.subr.mxu0 0.0
    %996 = vmatpush1.msra.mxu0 %v102
    %997 = vmatprep.subr.mxu0 0.0
    %998 = vmatpush1.msra.mxu0 0.0
    %999 = vmatprep.subr.mxu0 0.0
    %1000 = vmatpush1.msra.mxu0 0.0
    %1001 = vmatprep.subr.mxu0 0.0
    %1002 = vmatpush1.msra.mxu0 0.0
    %1003 = vmatprep.subr.mxu0 0.0
    %1004 = vmatpush1.msra.mxu0 0.0
    %1005 = vmatprep.subr.mxu0 0.0
    %1006 = vmatpush1.msra.mxu0 0.0
    %1007 = vmatprep.subr.mxu0 0.0
    %1008 = vmatpush1.msra.mxu0 0.0
    %1009 = vmatprep.subr.mxu0 0.0
    %1010 = vmatpush1.msra.mxu0 0.0
    %1011 = vmatprep.subr.mxu0 0.0
    %1012 = vmatpush1.msra.mxu0 0.0
    %1013 = vmatprep.subr.mxu0 0.0
    %1014 = vmatpush1.msra.mxu0 0.0
    %1015 = vmatprep.subr.mxu0 0.0
    %1016 = vmatpush1.msra.mxu0 0.0
    %1017 = vmatprep.subr.mxu0 0.0
    %1018 = vmatpush1.msra.mxu0 0.0
    %1019 = vmatprep.subr.mxu0 0.0
    %1020 = vmatpush1.msra.mxu0 0.0
    %1021 = vmatprep.subr.mxu0 0.0
    %1022 = vmatpush1.msra.mxu0 0.0
    %1023 = vmatprep.subr.mxu0 0.0
    %1024 = vmatpush1.msra.mxu0 0.0
    %1025 = vmatprep.subr.mxu0 0.0
    %1026 = vmatpush1.msra.mxu0 0.0
    %1027 = vmatprep.subr.mxu0 0.0
    %1028 = vmatpush1.msra.mxu0 0.0
    %1029 = vmatprep.subr.mxu0 0.0
    %1030 = vmatpush1.msra.mxu0 0.0
    %1031 = vmatprep.subr.mxu0 0.0
    %1032 = vmatpush1.msra.mxu0 0.0
    %1033 = vmatprep.subr.mxu0 0.0
    %1034 = vmatpush1.msra.mxu0 0.0
    %1035 = vmatprep.subr.mxu0 0.0
    %1036 = vmatpush1.msra.mxu0 0.0
    %1037 = vmatprep.subr.mxu0 0.0
    %1038 = vmatpush1.msra.mxu0 0.0
    %1039 = vmatprep.subr.mxu0 0.0
    %1040 = vmatpush1.msra.mxu0 0.0
    %1041 = vmatprep.subr.mxu0 0.0
    %1042 = vmatpush1.msra.mxu0 0.0
    %1043 = vmatprep.subr.mxu0 0.0
    %1044 = vmatpush1.msra.mxu0 0.0
    %1045 = vmatprep.subr.mxu0 0.0
    %1046 = vmatpush1.msra.mxu0 0.0
    %1047 = vmatprep.subr.mxu0 0.0
    %1048 = vmatpush1.msra.mxu0 0.0
    %1049 = vmatprep.subr.mxu0 0.0
    %1050 = vmatpush1.msra.mxu0 0.0
    %1051 = vmatprep.subr.mxu0 0.0
    %1052 = vmatpush1.msra.mxu0 0.0
    %1053 = vmatprep.mubr.f32.mxu0 0.0
    %1054 = vmatmul.mubr.f32.gmra.mrb[0].mxu0 %v987
    %v1055 = vpop.f32.mrb[0].mxu0
    %v1056 = vadd.f32 0.0, %v1055
    %v1057 = vpop.f32.mrb[0].mxu0
    %1058 = vdwg.mxu0
    %v1059 = vadd.f32 %v986, %v1056
    %v1060 = vxor.u32 %v1059, 2147483648
    %v1061 = vmul.f32 %v1060, 1.442695
    %v1062 = vpow.pop %v1061
    %v1063 = vadd.f32 %v1062, 1.0
    %v1064 = vrcp.pop %v1063
    %v1065 = vmul.f32 1.0, %v1064
    %v1066 = vtanh.pop %v1059
    %v1067 = vmul.f32 %v1065, %v972
    %1069 = vrot.lane.b32.xlu0 %v1066, 32
    %v1070 = vpop.permute.xlu0 %1069
    %v1072 = vmul.f32 %v1065, %v1070
    %1074 = vrot.lane.b32.xlu0 %v1072, 32
    %v1075 = vpop.permute.xlu0 %1074
    %v1077 = vadd.f32 %v1067, %v1075
    %v1078 = vtanh.pop %v1077
    %1080 = vrot.lane.b32.xlu0 %v1078, 32
    %v1081 = vpop.permute.xlu0 %1080
    %v1083 = vmul.f32 %v1065, %v1081
    %1085 = vrot.lane.b32.xlu0 %v1083, 64
    %v1086 = vpop.permute.xlu0 %1085
    %s1088 = scalar_lea.vmem [#allocation3], 56
    %1089 = vst.msk [vmem:[%s1088] sm:$0xff] %vm251, %v1086
    %v1090 = vld [vmem:[#allocation10] sm:$0xff]
    %v1091 = vld [vmem:[#allocation10 + $0x8] sm:$0xff]
    %v1092 = vld [vmem:[#allocation10 + $0x10] sm:$0xff]
    %v1093 = vld [vmem:[#allocation10 + $0x18] sm:$0xff]
    %v1094 = vld [vmem:[#allocation3] sm:$0xff]
    %v1095 = vld [vmem:[#allocation3 + $0x8] sm:$0xff]
    %v1096 = vld [vmem:[#allocation3 + $0x10] sm:$0xff]
    %v1097 = vld [vmem:[#allocation3 + $0x18] sm:$0xff]
    %v1098 = vld [vmem:[#allocation3 + $0x20] sm:$0xff]
    %v1099 = vld [vmem:[#allocation3 + $0x28] sm:$0xff]
    %v1100 = vld [vmem:[#allocation3 + $0x30] sm:$0xff]
    %v1101 = vld [vmem:[#allocation3 + $0x38] sm:$0xff]
    %v1102 = vld [vmem:[#allocation9] sm:$0xff]
    %v1103 = vld [vmem:[#allocation9 + $0x8] sm:$0xff]
    %v1104 = vld [vmem:[#allocation9 + $0x10] sm:$0xff]
    %v1105 = vld [vmem:[#allocation9 + $0x18] sm:$0xff]
    %v1106 = vld [vmem:[%s7] sm:$0x1]
    %v1108 = vlaneseq
    %v1109 = vshrl.u32 %v1108, 7
    %v1110 = vsub.s32 0, %v1109
    %v1111 = vrot.slane %v1106, %v1110
    %v1114 = vsel %vm251, %v1094, 0
    %v1117 = vsel %vm251, %v1095, 0
    %v1120 = vsel %vm251, %v1096, 0
    %v1123 = vsel %vm251, %v1097, 0
    %v1126 = vsel %vm251, %v1098, 0
    %v1129 = vsel %vm251, %v1099, 0
    %v1132 = vsel %vm251, %v1100, 0
    %v1135 = vsel %vm251, %v1101, 0
    %1137 = vmatprep.subr.mxu0 0.0
    %1138 = vmatpush1.msra.mxu0 %v1102
    %1139 = vmatprep.subr.mxu0 0.0
    %1140 = vmatpush1.msra.mxu0 %v1103
    %1141 = vmatprep.subr.mxu0 0.0
    %1142 = vmatpush1.msra.mxu0 %v1104
    %1143 = vmatprep.subr.mxu0 0.0
    %1144 = vmatpush1.msra.mxu0 %v1105
    %1145 = vmatprep.subr.mxu0 0.0
    %1146 = vmatpush1.msra.mxu0 0.0
    %1147 = vmatprep.subr.mxu0 0.0
    %1148 = vmatpush1.msra.mxu0 0.0
    %1149 = vmatprep.subr.mxu0 0.0
    %1150 = vmatpush1.msra.mxu0 0.0
    %1151 = vmatprep.subr.mxu0 0.0
    %1152 = vmatpush1.msra.mxu0 0.0
    %1153 = vmatprep.subr.mxu0 0.0
    %1154 = vmatpush1.msra.mxu0 0.0
    %1155 = vmatprep.subr.mxu0 0.0
    %1156 = vmatpush1.msra.mxu0 0.0
    %1157 = vmatprep.subr.mxu0 0.0
    %1158 = vmatpush1.msra.mxu0 0.0
    %1159 = vmatprep.subr.mxu0 0.0
    %1160 = vmatpush1.msra.mxu0 0.0
    %1161 = vmatprep.subr.mxu0 0.0
    %1162 = vmatpush1.msra.mxu0 0.0
    %1163 = vmatprep.subr.mxu0 0.0
    %1164 = vmatpush1.msra.mxu0 0.0
    %1165 = vmatprep.subr.mxu0 0.0
    %1166 = vmatpush1.msra.mxu0 0.0
    %1167 = vmatprep.subr.mxu0 0.0
    %1168 = vmatpush1.msra.mxu0 0.0
    %1169 = vmatprep.subr.mxu0 0.0
    %1170 = vmatpush1.msra.mxu0 0.0
    %1171 = vmatprep.subr.mxu0 0.0
    %1172 = vmatpush1.msra.mxu0 0.0
    %1173 = vmatprep.subr.mxu0 0.0
    %1174 = vmatpush1.msra.mxu0 0.0
    %1175 = vmatprep.subr.mxu0 0.0
    %1176 = vmatpush1.msra.mxu0 0.0
    %1177 = vmatprep.subr.mxu0 0.0
    %1178 = vmatpush1.msra.mxu0 0.0
    %1179 = vmatprep.subr.mxu0 0.0
    %1180 = vmatpush1.msra.mxu0 0.0
    %1181 = vmatprep.subr.mxu0 0.0
    %1182 = vmatpush1.msra.mxu0 0.0
    %1183 = vmatprep.subr.mxu0 0.0
    %1184 = vmatpush1.msra.mxu0 0.0
    %1185 = vmatprep.subr.mxu0 0.0
    %1186 = vmatpush1.msra.mxu0 0.0
    %1187 = vmatprep.subr.mxu0 0.0
    %1188 = vmatpush1.msra.mxu0 0.0
    %1189 = vmatprep.subr.mxu0 0.0
    %1190 = vmatpush1.msra.mxu0 0.0
    %1191 = vmatprep.subr.mxu0 0.0
    %1192 = vmatpush1.msra.mxu0 0.0
    %1193 = vmatprep.subr.mxu0 0.0
    %1194 = vmatpush1.msra.mxu0 0.0
    %1195 = vmatprep.subr.mxu0 0.0
    %1196 = vmatpush1.msra.mxu0 0.0
    %1197 = vmatprep.subr.mxu0 0.0
    %1198 = vmatpush1.msra.mxu0 0.0
    %1199 = vmatprep.subr.mxu0 0.0
    %1200 = vmatpush1.msra.mxu0 0.0
    %1201 = vmatprep.mubr.f32.mxu0 0.0
    %1202 = vmatmul.mubr.f32.gmra.mrb[0].mxu0 %v1114
    %v1203 = vpop.f32.mrb[0].mxu0
    %v1204 = vadd.f32 %v1111, %v1203
    %v1205 = vpop.f32.mrb[0].mxu0
    %1206 = vmatprep.mubr.f32.mxu0 0.0
    %1207 = vmatmul.mubr.f32.gmra.mrb[0].mxu0 %v1117
    %v1208 = vpop.f32.mrb[0].mxu0
    %v1209 = vadd.f32 %v1111, %v1208
    %v1210 = vpop.f32.mrb[0].mxu0
    %1211 = vmatprep.mubr.f32.mxu0 0.0
    %1212 = vmatmul.mubr.f32.gmra.mrb[0].mxu0 %v1120
    %v1213 = vpop.f32.mrb[0].mxu0
    %v1214 = vadd.f32 %v1111, %v1213
    %v1215 = vpop.f32.mrb[0].mxu0
    %1216 = vmatprep.mubr.f32.mxu0 0.0
    %1217 = vmatmul.mubr.f32.gmra.mrb[0].mxu0 %v1123
    %v1218 = vpop.f32.mrb[0].mxu0
    %v1219 = vadd.f32 %v1111, %v1218
    %v1220 = vpop.f32.mrb[0].mxu0
    %1221 = vmatprep.mubr.f32.mxu0 0.0
    %1222 = vmatmul.mubr.f32.gmra.mrb[0].mxu0 %v1126
    %v1223 = vpop.f32.mrb[0].mxu0
    %v1224 = vadd.f32 %v1111, %v1223
    %v1225 = vpop.f32.mrb[0].mxu0
    %1226 = vmatprep.mubr.f32.mxu0 0.0
    %1227 = vmatmul.mubr.f32.gmra.mrb[0].mxu0 %v1129
    %v1228 = vpop.f32.mrb[0].mxu0
    %v1229 = vadd.f32 %v1111, %v1228
    %v1230 = vpop.f32.mrb[0].mxu0
    %1231 = vmatprep.mubr.f32.mxu0 0.0
    %1232 = vmatmul.mubr.f32.gmra.mrb[0].mxu0 %v1132
    %v1233 = vpop.f32.mrb[0].mxu0
    %v1234 = vadd.f32 %v1111, %v1233
    %v1235 = vpop.f32.mrb[0].mxu0
    %1236 = vmatprep.mubr.f32.mxu0 0.0
    %1237 = vmatmul.mubr.f32.gmra.mrb[0].mxu0 %v1135
    %v1238 = vpop.f32.mrb[0].mxu0
    %v1239 = vadd.f32 %v1111, %v1238
    %v1240 = vpop.f32.mrb[0].mxu0
    %1241 = vdwg.mxu0
    %1242 = vst [vmem:[#allocation2] sm:$0xff] %v1204
    %1243 = vst [vmem:[#allocation2 + $0x8] sm:$0xff] %v1209
    %1244 = vst [vmem:[#allocation2 + $0x10] sm:$0xff] %v1214
    %1245 = vst [vmem:[#allocation2 + $0x18] sm:$0xff] %v1219
    %1246 = vst [vmem:[#allocation2 + $0x20] sm:$0xff] %v1224
    %1247 = vst [vmem:[#allocation2 + $0x28] sm:$0xff] %v1229
    %1248 = vst [vmem:[#allocation2 + $0x30] sm:$0xff] %v1234
    %1249 = vst [vmem:[#allocation2 + $0x38] sm:$0xff] %v1239
    %v1250 = vld [vmem:[#allocation2] sm:$0xff]
    %1251 = vmatprep.subr.mxu0 0.0
    %1252 = vmatpush1.msra.mxu0 %v1090
    %1253 = vmatprep.subr.mxu0 0.0
    %1254 = vmatpush1.msra.mxu0 %v1091
    %1255 = vmatprep.subr.mxu0 0.0
    %1256 = vmatpush1.msra.mxu0 %v1092
    %1257 = vmatprep.subr.mxu0 0.0
    %1258 = vmatpush1.msra.mxu0 %v1093
    %1259 = vmatprep.subr.mxu0 0.0
    %1260 = vmatpush1.msra.mxu0 0.0
    %1261 = vmatprep.subr.mxu0 0.0
    %1262 = vmatpush1.msra.mxu0 0.0
    %1263 = vmatprep.subr.mxu0 0.0
    %1264 = vmatpush1.msra.mxu0 0.0
    %1265 = vmatprep.subr.mxu0 0.0
    %1266 = vmatpush1.msra.mxu0 0.0
    %1267 = vmatprep.subr.mxu0 0.0
    %1268 = vmatpush1.msra.mxu0 0.0
    %1269 = vmatprep.subr.mxu0 0.0
    %1270 = vmatpush1.msra.mxu0 0.0
    %1271 = vmatprep.subr.mxu0 0.0
    %1272 = vmatpush1.msra.mxu0 0.0
    %1273 = vmatprep.subr.mxu0 0.0
    %1274 = vmatpush1.msra.mxu0 0.0
    %1275 = vmatprep.subr.mxu0 0.0
    %1276 = vmatpush1.msra.mxu0 0.0
    %1277 = vmatprep.subr.mxu0 0.0
    %1278 = vmatpush1.msra.mxu0 0.0
    %1279 = vmatprep.subr.mxu0 0.0
    %1280 = vmatpush1.msra.mxu0 0.0
    %1281 = vmatprep.subr.mxu0 0.0
    %1282 = vmatpush1.msra.mxu0 0.0
    %1283 = vmatprep.subr.mxu0 0.0
    %1284 = vmatpush1.msra.mxu0 0.0
    %1285 = vmatprep.subr.mxu0 0.0
    %1286 = vmatpush1.msra.mxu0 0.0
    %1287 = vmatprep.subr.mxu0 0.0
    %1288 = vmatpush1.msra.mxu0 0.0
    %1289 = vmatprep.subr.mxu0 0.0
    %1290 = vmatpush1.msra.mxu0 0.0
    %1291 = vmatprep.subr.mxu0 0.0
    %1292 = vmatpush1.msra.mxu0 0.0
    %1293 = vmatprep.subr.mxu0 0.0
    %1294 = vmatpush1.msra.mxu0 0.0
    %1295 = vmatprep.subr.mxu0 0.0
    %1296 = vmatpush1.msra.mxu0 0.0
    %1297 = vmatprep.subr.mxu0 0.0
    %1298 = vmatpush1.msra.mxu0 0.0
    %1299 = vmatprep.subr.mxu0 0.0
    %1300 = vmatpush1.msra.mxu0 0.0
    %1301 = vmatprep.subr.mxu0 0.0
    %1302 = vmatpush1.msra.mxu0 0.0
    %1303 = vmatprep.subr.mxu0 0.0
    %1304 = vmatpush1.msra.mxu0 0.0
    %1305 = vmatprep.subr.mxu0 0.0
    %1306 = vmatpush1.msra.mxu0 0.0
    %1307 = vmatprep.subr.mxu0 0.0
    %1308 = vmatpush1.msra.mxu0 0.0
    %1309 = vmatprep.subr.mxu0 0.0
    %1310 = vmatpush1.msra.mxu0 0.0
    %1311 = vmatprep.subr.mxu0 0.0
    %1312 = vmatpush1.msra.mxu0 0.0
    %1313 = vmatprep.subr.mxu0 0.0
    %1314 = vmatpush1.msra.mxu0 0.0
    %1315 = vmatprep.mubr.f32.mxu0 0.0
    %1316 = vmatmul.mubr.f32.gmra.mrb[0].mxu0 %v253
    %v1317 = vpop.f32.mrb[0].mxu0
    %v1318 = vadd.f32 0.0, %v1317
    %v1319 = vpop.f32.mrb[0].mxu0
    %1320 = vdwg.mxu0
    %v1321 = vadd.f32 %v1250, %v1318
    %v1322 = vxor.u32 %v1321, 2147483648
    %v1323 = vmul.f32 %v1322, 1.442695
    %v1324 = vpow.pop %v1323
    %v1325 = vadd.f32 %v1324, 1.0
    %v1326 = vrcp.pop %v1325
    %v1327 = vmul.f32 1.0, %v1326
    %v1328 = vtanh.pop %v1321
    %v1329 = vmul.f32 %v1327, 0.0
    %1331 = vrot.lane.b32.xlu0 %v1328, 32
    %v1332 = vpop.permute.xlu0 %1331
    %v1334 = vmul.f32 %v1327, %v1332
    %1336 = vrot.lane.b32.xlu0 %v1334, 32
    %v1337 = vpop.permute.xlu0 %1336
    %v1339 = vadd.f32 %v1329, %v1337
    %v1340 = vtanh.pop %v1339
    %1342 = vrot.lane.b32.xlu0 %v1340, 32
    %v1343 = vpop.permute.xlu0 %1342
    %v1345 = vmul.f32 %v1327, %v1343
    %1347 = vrot.lane.b32.xlu0 %v1345, 64
    %v1348 = vpop.permute.xlu0 %1347
    %1350 = vst.msk [vmem:[#allocation3] sm:$0xff] %vm251, %v1348
    %v1351 = vld [vmem:[%s355] sm:$0xff]
    %v1352 = vsel %vm251, %v1348, 0
    %1354 = vmatprep.subr.mxu0 0.0
    %1355 = vmatpush1.msra.mxu0 %v1090
    %1356 = vmatprep.subr.mxu0 0.0
    %1357 = vmatpush1.msra.mxu0 %v1091
    %1358 = vmatprep.subr.mxu0 0.0
    %1359 = vmatpush1.msra.mxu0 %v1092
    %1360 = vmatprep.subr.mxu0 0.0
    %1361 = vmatpush1.msra.mxu0 %v1093
    %1362 = vmatprep.subr.mxu0 0.0
    %1363 = vmatpush1.msra.mxu0 0.0
    %1364 = vmatprep.subr.mxu0 0.0
    %1365 = vmatpush1.msra.mxu0 0.0
    %1366 = vmatprep.subr.mxu0 0.0
    %1367 = vmatpush1.msra.mxu0 0.0
    %1368 = vmatprep.subr.mxu0 0.0
    %1369 = vmatpush1.msra.mxu0 0.0
    %1370 = vmatprep.subr.mxu0 0.0
    %1371 = vmatpush1.msra.mxu0 0.0
    %1372 = vmatprep.subr.mxu0 0.0
    %1373 = vmatpush1.msra.mxu0 0.0
    %1374 = vmatprep.subr.mxu0 0.0
    %1375 = vmatpush1.msra.mxu0 0.0
    %1376 = vmatprep.subr.mxu0 0.0
    %1377 = vmatpush1.msra.mxu0 0.0
    %1378 = vmatprep.subr.mxu0 0.0
    %1379 = vmatpush1.msra.mxu0 0.0
    %1380 = vmatprep.subr.mxu0 0.0
    %1381 = vmatpush1.msra.mxu0 0.0
    %1382 = vmatprep.subr.mxu0 0.0
    %1383 = vmatpush1.msra.mxu0 0.0
    %1384 = vmatprep.subr.mxu0 0.0
    %1385 = vmatpush1.msra.mxu0 0.0
    %1386 = vmatprep.subr.mxu0 0.0
    %1387 = vmatpush1.msra.mxu0 0.0
    %1388 = vmatprep.subr.mxu0 0.0
    %1389 = vmatpush1.msra.mxu0 0.0
    %1390 = vmatprep.subr.mxu0 0.0
    %1391 = vmatpush1.msra.mxu0 0.0
    %1392 = vmatprep.subr.mxu0 0.0
    %1393 = vmatpush1.msra.mxu0 0.0
    %1394 = vmatprep.subr.mxu0 0.0
    %1395 = vmatpush1.msra.mxu0 0.0
    %1396 = vmatprep.subr.mxu0 0.0
    %1397 = vmatpush1.msra.mxu0 0.0
    %1398 = vmatprep.subr.mxu0 0.0
    %1399 = vmatpush1.msra.mxu0 0.0
    %1400 = vmatprep.subr.mxu0 0.0
    %1401 = vmatpush1.msra.mxu0 0.0
    %1402 = vmatprep.subr.mxu0 0.0
    %1403 = vmatpush1.msra.mxu0 0.0
    %1404 = vmatprep.subr.mxu0 0.0
    %1405 = vmatpush1.msra.mxu0 0.0
    %1406 = vmatprep.subr.mxu0 0.0
    %1407 = vmatpush1.msra.mxu0 0.0
    %1408 = vmatprep.subr.mxu0 0.0
    %1409 = vmatpush1.msra.mxu0 0.0
    %1410 = vmatprep.subr.mxu0 0.0
    %1411 = vmatpush1.msra.mxu0 0.0
    %1412 = vmatprep.subr.mxu0 0.0
    %1413 = vmatpush1.msra.mxu0 0.0
    %1414 = vmatprep.subr.mxu0 0.0
    %1415 = vmatpush1.msra.mxu0 0.0
    %1416 = vmatprep.subr.mxu0 0.0
    %1417 = vmatpush1.msra.mxu0 0.0
    %1418 = vmatprep.mubr.f32.mxu0 0.0
    %1419 = vmatmul.mubr.f32.gmra.mrb[0].mxu0 %v1352
    %v1420 = vpop.f32.mrb[0].mxu0
    %v1421 = vadd.f32 0.0, %v1420
    %v1422 = vpop.f32.mrb[0].mxu0
    %1423 = vdwg.mxu0
    %v1424 = vadd.f32 %v1351, %v1421
    %v1425 = vxor.u32 %v1424, 2147483648
    %v1426 = vmul.f32 %v1425, 1.442695
    %v1427 = vpow.pop %v1426
    %v1428 = vadd.f32 %v1427, 1.0
    %v1429 = vrcp.pop %v1428
    %v1430 = vmul.f32 1.0, %v1429
    %v1431 = vtanh.pop %v1424
    %v1432 = vmul.f32 %v1430, %v1339
    %1434 = vrot.lane.b32.xlu0 %v1431, 32
    %v1435 = vpop.permute.xlu0 %1434
    %v1437 = vmul.f32 %v1430, %v1435
    %1439 = vrot.lane.b32.xlu0 %v1437, 32
    %v1440 = vpop.permute.xlu0 %1439
    %v1442 = vadd.f32 %v1432, %v1440
    %v1443 = vtanh.pop %v1442
    %1445 = vrot.lane.b32.xlu0 %v1443, 32
    %v1446 = vpop.permute.xlu0 %1445
    %v1448 = vmul.f32 %v1430, %v1446
    %1450 = vrot.lane.b32.xlu0 %v1448, 64
    %v1451 = vpop.permute.xlu0 %1450
    %1453 = vst.msk [vmem:[%s458] sm:$0xff] %vm251, %v1451
    %v1454 = vld [vmem:[%s460] sm:$0xff]
    %v1455 = vsel %vm251, %v1451, 0
    %1457 = vmatprep.subr.mxu0 0.0
    %1458 = vmatpush1.msra.mxu0 %v1090
    %1459 = vmatprep.subr.mxu0 0.0
    %1460 = vmatpush1.msra.mxu0 %v1091
    %1461 = vmatprep.subr.mxu0 0.0
    %1462 = vmatpush1.msra.mxu0 %v1092
    %1463 = vmatprep.subr.mxu0 0.0
    %1464 = vmatpush1.msra.mxu0 %v1093
    %1465 = vmatprep.subr.mxu0 0.0
    %1466 = vmatpush1.msra.mxu0 0.0
    %1467 = vmatprep.subr.mxu0 0.0
    %1468 = vmatpush1.msra.mxu0 0.0
    %1469 = vmatprep.subr.mxu0 0.0
    %1470 = vmatpush1.msra.mxu0 0.0
    %1471 = vmatprep.subr.mxu0 0.0
    %1472 = vmatpush1.msra.mxu0 0.0
    %1473 = vmatprep.subr.mxu0 0.0
    %1474 = vmatpush1.msra.mxu0 0.0
    %1475 = vmatprep.subr.mxu0 0.0
    %1476 = vmatpush1.msra.mxu0 0.0
    %1477 = vmatprep.subr.mxu0 0.0
    %1478 = vmatpush1.msra.mxu0 0.0
    %1479 = vmatprep.subr.mxu0 0.0
    %1480 = vmatpush1.msra.mxu0 0.0
    %1481 = vmatprep.subr.mxu0 0.0
    %1482 = vmatpush1.msra.mxu0 0.0
    %1483 = vmatprep.subr.mxu0 0.0
    %1484 = vmatpush1.msra.mxu0 0.0
    %1485 = vmatprep.subr.mxu0 0.0
    %1486 = vmatpush1.msra.mxu0 0.0
    %1487 = vmatprep.subr.mxu0 0.0
    %1488 = vmatpush1.msra.mxu0 0.0
    %1489 = vmatprep.subr.mxu0 0.0
    %1490 = vmatpush1.msra.mxu0 0.0
    %1491 = vmatprep.subr.mxu0 0.0
    %1492 = vmatpush1.msra.mxu0 0.0
    %1493 = vmatprep.subr.mxu0 0.0
    %1494 = vmatpush1.msra.mxu0 0.0
    %1495 = vmatprep.subr.mxu0 0.0
    %1496 = vmatpush1.msra.mxu0 0.0
    %1497 = vmatprep.subr.mxu0 0.0
    %1498 = vmatpush1.msra.mxu0 0.0
    %1499 = vmatprep.subr.mxu0 0.0
    %1500 = vmatpush1.msra.mxu0 0.0
    %1501 = vmatprep.subr.mxu0 0.0
    %1502 = vmatpush1.msra.mxu0 0.0
    %1503 = vmatprep.subr.mxu0 0.0
    %1504 = vmatpush1.msra.mxu0 0.0
    %1505 = vmatprep.subr.mxu0 0.0
    %1506 = vmatpush1.msra.mxu0 0.0
    %1507 = vmatprep.subr.mxu0 0.0
    %1508 = vmatpush1.msra.mxu0 0.0
    %1509 = vmatprep.subr.mxu0 0.0
    %1510 = vmatpush1.msra.mxu0 0.0
    %1511 = vmatprep.subr.mxu0 0.0
    %1512 = vmatpush1.msra.mxu0 0.0
    %1513 = vmatprep.subr.mxu0 0.0
    %1514 = vmatpush1.msra.mxu0 0.0
    %1515 = vmatprep.subr.mxu0 0.0
    %1516 = vmatpush1.msra.mxu0 0.0
    %1517 = vmatprep.subr.mxu0 0.0
    %1518 = vmatpush1.msra.mxu0 0.0
    %1519 = vmatprep.subr.mxu0 0.0
    %1520 = vmatpush1.msra.mxu0 0.0
    %1521 = vmatprep.mubr.f32.mxu0 0.0
    %1522 = vmatmul.mubr.f32.gmra.mrb[0].mxu0 %v1455
    %v1523 = vpop.f32.mrb[0].mxu0
    %v1524 = vadd.f32 0.0, %v1523
    %v1525 = vpop.f32.mrb[0].mxu0
    %1526 = vdwg.mxu0
    %v1527 = vadd.f32 %v1454, %v1524
    %v1528 = vxor.u32 %v1527, 2147483648
    %v1529 = vmul.f32 %v1528, 1.442695
    %v1530 = vpow.pop %v1529
    %v1531 = vadd.f32 %v1530, 1.0
    %v1532 = vrcp.pop %v1531
    %v1533 = vmul.f32 1.0, %v1532
    %v1534 = vtanh.pop %v1527
    %v1535 = vmul.f32 %v1533, %v1442
    %1537 = vrot.lane.b32.xlu0 %v1534, 32
    %v1538 = vpop.permute.xlu0 %1537
    %v1540 = vmul.f32 %v1533, %v1538
    %1542 = vrot.lane.b32.xlu0 %v1540, 32
    %v1543 = vpop.permute.xlu0 %1542
    %v1545 = vadd.f32 %v1535, %v1543
    %v1546 = vtanh.pop %v1545
    %1548 = vrot.lane.b32.xlu0 %v1546, 32
    %v1549 = vpop.permute.xlu0 %1548
    %v1551 = vmul.f32 %v1533, %v1549
    %1553 = vrot.lane.b32.xlu0 %v1551, 64
    %v1554 = vpop.permute.xlu0 %1553
    %1556 = vst.msk [vmem:[%s563] sm:$0xff] %vm251, %v1554
    %v1557 = vld [vmem:[%s565] sm:$0xff]
    %v1558 = vsel %vm251, %v1554, 0
    %1560 = vmatprep.subr.mxu0 0.0
    %1561 = vmatpush1.msra.mxu0 %v1090
    %1562 = vmatprep.subr.mxu0 0.0
    %1563 = vmatpush1.msra.mxu0 %v1091
    %1564 = vmatprep.subr.mxu0 0.0
    %1565 = vmatpush1.msra.mxu0 %v1092
    %1566 = vmatprep.subr.mxu0 0.0
    %1567 = vmatpush1.msra.mxu0 %v1093
    %1568 = vmatprep.subr.mxu0 0.0
    %1569 = vmatpush1.msra.mxu0 0.0
    %1570 = vmatprep.subr.mxu0 0.0
    %1571 = vmatpush1.msra.mxu0 0.0
    %1572 = vmatprep.subr.mxu0 0.0
    %1573 = vmatpush1.msra.mxu0 0.0
    %1574 = vmatprep.subr.mxu0 0.0
    %1575 = vmatpush1.msra.mxu0 0.0
    %1576 = vmatprep.subr.mxu0 0.0
    %1577 = vmatpush1.msra.mxu0 0.0
    %1578 = vmatprep.subr.mxu0 0.0
    %1579 = vmatpush1.msra.mxu0 0.0
    %1580 = vmatprep.subr.mxu0 0.0
    %1581 = vmatpush1.msra.mxu0 0.0
    %1582 = vmatprep.subr.mxu0 0.0
    %1583 = vmatpush1.msra.mxu0 0.0
    %1584 = vmatprep.subr.mxu0 0.0
    %1585 = vmatpush1.msra.mxu0 0.0
    %1586 = vmatprep.subr.mxu0 0.0
    %1587 = vmatpush1.msra.mxu0 0.0
    %1588 = vmatprep.subr.mxu0 0.0
    %1589 = vmatpush1.msra.mxu0 0.0
    %1590 = vmatprep.subr.mxu0 0.0
    %1591 = vmatpush1.msra.mxu0 0.0
    %1592 = vmatprep.subr.mxu0 0.0
    %1593 = vmatpush1.msra.mxu0 0.0
    %1594 = vmatprep.subr.mxu0 0.0
    %1595 = vmatpush1.msra.mxu0 0.0
    %1596 = vmatprep.subr.mxu0 0.0
    %1597 = vmatpush1.msra.mxu0 0.0
    %1598 = vmatprep.subr.mxu0 0.0
    %1599 = vmatpush1.msra.mxu0 0.0
    %1600 = vmatprep.subr.mxu0 0.0
    %1601 = vmatpush1.msra.mxu0 0.0
    %1602 = vmatprep.subr.mxu0 0.0
    %1603 = vmatpush1.msra.mxu0 0.0
    %1604 = vmatprep.subr.mxu0 0.0
    %1605 = vmatpush1.msra.mxu0 0.0
    %1606 = vmatprep.subr.mxu0 0.0
    %1607 = vmatpush1.msra.mxu0 0.0
    %1608 = vmatprep.subr.mxu0 0.0
    %1609 = vmatpush1.msra.mxu0 0.0
    %1610 = vmatprep.subr.mxu0 0.0
    %1611 = vmatpush1.msra.mxu0 0.0
    %1612 = vmatprep.subr.mxu0 0.0
    %1613 = vmatpush1.msra.mxu0 0.0
    %1614 = vmatprep.subr.mxu0 0.0
    %1615 = vmatpush1.msra.mxu0 0.0
    %1616 = vmatprep.subr.mxu0 0.0
    %1617 = vmatpush1.msra.mxu0 0.0
    %1618 = vmatprep.subr.mxu0 0.0
    %1619 = vmatpush1.msra.mxu0 0.0
    %1620 = vmatprep.subr.mxu0 0.0
    %1621 = vmatpush1.msra.mxu0 0.0
    %1622 = vmatprep.subr.mxu0 0.0
    %1623 = vmatpush1.msra.mxu0 0.0
    %1624 = vmatprep.mubr.f32.mxu0 0.0
    %1625 = vmatmul.mubr.f32.gmra.mrb[0].mxu0 %v1558
    %v1626 = vpop.f32.mrb[0].mxu0
    %v1627 = vadd.f32 0.0, %v1626
    %v1628 = vpop.f32.mrb[0].mxu0
    %1629 = vdwg.mxu0
    %v1630 = vadd.f32 %v1557, %v1627
    %v1631 = vxor.u32 %v1630, 2147483648
    %v1632 = vmul.f32 %v1631, 1.442695
    %v1633 = vpow.pop %v1632
    %v1634 = vadd.f32 %v1633, 1.0
    %v1635 = vrcp.pop %v1634
    %v1636 = vmul.f32 1.0, %v1635
    %v1637 = vtanh.pop %v1630
    %v1638 = vmul.f32 %v1636, %v1545
    %1640 = vrot.lane.b32.xlu0 %v1637, 32
    %v1641 = vpop.permute.xlu0 %1640
    %v1643 = vmul.f32 %v1636, %v1641
    %1645 = vrot.lane.b32.xlu0 %v1643, 32
    %v1646 = vpop.permute.xlu0 %1645
    %v1648 = vadd.f32 %v1638, %v1646
    %v1649 = vtanh.pop %v1648
    %1651 = vrot.lane.b32.xlu0 %v1649, 32
    %v1652 = vpop.permute.xlu0 %1651
    %v1654 = vmul.f32 %v1636, %v1652
    %1656 = vrot.lane.b32.xlu0 %v1654, 64
    %v1657 = vpop.permute.xlu0 %1656
    %1659 = vst.msk [vmem:[%s668] sm:$0xff] %vm251, %v1657
    %v1660 = vld [vmem:[%s670] sm:$0xff]
    %v1661 = vsel %vm251, %v1657, 0
    %1663 = vmatprep.subr.mxu0 0.0
    %1664 = vmatpush1.msra.mxu0 %v1090
    %1665 = vmatprep.subr.mxu0 0.0
    %1666 = vmatpush1.msra.mxu0 %v1091
    %1667 = vmatprep.subr.mxu0 0.0
    %1668 = vmatpush1.msra.mxu0 %v1092
    %1669 = vmatprep.subr.mxu0 0.0
    %1670 = vmatpush1.msra.mxu0 %v1093
    %1671 = vmatprep.subr.mxu0 0.0
    %1672 = vmatpush1.msra.mxu0 0.0
    %1673 = vmatprep.subr.mxu0 0.0
    %1674 = vmatpush1.msra.mxu0 0.0
    %1675 = vmatprep.subr.mxu0 0.0
    %1676 = vmatpush1.msra.mxu0 0.0
    %1677 = vmatprep.subr.mxu0 0.0
    %1678 = vmatpush1.msra.mxu0 0.0
    %1679 = vmatprep.subr.mxu0 0.0
    %1680 = vmatpush1.msra.mxu0 0.0
    %1681 = vmatprep.subr.mxu0 0.0
    %1682 = vmatpush1.msra.mxu0 0.0
    %1683 = vmatprep.subr.mxu0 0.0
    %1684 = vmatpush1.msra.mxu0 0.0
    %1685 = vmatprep.subr.mxu0 0.0
    %1686 = vmatpush1.msra.mxu0 0.0
    %1687 = vmatprep.subr.mxu0 0.0
    %1688 = vmatpush1.msra.mxu0 0.0
    %1689 = vmatprep.subr.mxu0 0.0
    %1690 = vmatpush1.msra.mxu0 0.0
    %1691 = vmatprep.subr.mxu0 0.0
    %1692 = vmatpush1.msra.mxu0 0.0
    %1693 = vmatprep.subr.mxu0 0.0
    %1694 = vmatpush1.msra.mxu0 0.0
    %1695 = vmatprep.subr.mxu0 0.0
    %1696 = vmatpush1.msra.mxu0 0.0
    %1697 = vmatprep.subr.mxu0 0.0
    %1698 = vmatpush1.msra.mxu0 0.0
    %1699 = vmatprep.subr.mxu0 0.0
    %1700 = vmatpush1.msra.mxu0 0.0
    %1701 = vmatprep.subr.mxu0 0.0
    %1702 = vmatpush1.msra.mxu0 0.0
    %1703 = vmatprep.subr.mxu0 0.0
    %1704 = vmatpush1.msra.mxu0 0.0
    %1705 = vmatprep.subr.mxu0 0.0
    %1706 = vmatpush1.msra.mxu0 0.0
    %1707 = vmatprep.subr.mxu0 0.0
    %1708 = vmatpush1.msra.mxu0 0.0
    %1709 = vmatprep.subr.mxu0 0.0
    %1710 = vmatpush1.msra.mxu0 0.0
    %1711 = vmatprep.subr.mxu0 0.0
    %1712 = vmatpush1.msra.mxu0 0.0
    %1713 = vmatprep.subr.mxu0 0.0
    %1714 = vmatpush1.msra.mxu0 0.0
    %1715 = vmatprep.subr.mxu0 0.0
    %1716 = vmatpush1.msra.mxu0 0.0
    %1717 = vmatprep.subr.mxu0 0.0
    %1718 = vmatpush1.msra.mxu0 0.0
    %1719 = vmatprep.subr.mxu0 0.0
    %1720 = vmatpush1.msra.mxu0 0.0
    %1721 = vmatprep.subr.mxu0 0.0
    %1722 = vmatpush1.msra.mxu0 0.0
    %1723 = vmatprep.subr.mxu0 0.0
    %1724 = vmatpush1.msra.mxu0 0.0
    %1725 = vmatprep.subr.mxu0 0.0
    %1726 = vmatpush1.msra.mxu0 0.0
    %1727 = vmatprep.mubr.f32.mxu0 0.0
    %1728 = vmatmul.mubr.f32.gmra.mrb[0].mxu0 %v1661
    %v1729 = vpop.f32.mrb[0].mxu0
    %v1730 = vadd.f32 0.0, %v1729
    %v1731 = vpop.f32.mrb[0].mxu0
    %1732 = vdwg.mxu0
    %v1733 = vadd.f32 %v1660, %v1730
    %v1734 = vxor.u32 %v1733, 2147483648
    %v1735 = vmul.f32 %v1734, 1.442695
    %v1736 = vpow.pop %v1735
    %v1737 = vadd.f32 %v1736, 1.0
    %v1738 = vrcp.pop %v1737
    %v1739 = vmul.f32 1.0, %v1738
    %v1740 = vtanh.pop %v1733
    %v1741 = vmul.f32 %v1739, %v1648
    %1743 = vrot.lane.b32.xlu0 %v1740, 32
    %v1744 = vpop.permute.xlu0 %1743
    %v1746 = vmul.f32 %v1739, %v1744
    %1748 = vrot.lane.b32.xlu0 %v1746, 32
    %v1749 = vpop.permute.xlu0 %1748
    %v1751 = vadd.f32 %v1741, %v1749
    %v1752 = vtanh.pop %v1751
    %1754 = vrot.lane.b32.xlu0 %v1752, 32
    %v1755 = vpop.permute.xlu0 %1754
    %v1757 = vmul.f32 %v1739, %v1755
    %1759 = vrot.lane.b32.xlu0 %v1757, 64
    %v1760 = vpop.permute.xlu0 %1759
    %1762 = vst.msk [vmem:[%s773] sm:$0xff] %vm251, %v1760
    %v1763 = vld [vmem:[%s775] sm:$0xff]
    %v1764 = vsel %vm251, %v1760, 0
    %1766 = vmatprep.subr.mxu0 0.0
    %1767 = vmatpush1.msra.mxu0 %v1090
    %1768 = vmatprep.subr.mxu0 0.0
    %1769 = vmatpush1.msra.mxu0 %v1091
    %1770 = vmatprep.subr.mxu0 0.0
    %1771 = vmatpush1.msra.mxu0 %v1092
    %1772 = vmatprep.subr.mxu0 0.0
    %1773 = vmatpush1.msra.mxu0 %v1093
    %1774 = vmatprep.subr.mxu0 0.0
    %1775 = vmatpush1.msra.mxu0 0.0
    %1776 = vmatprep.subr.mxu0 0.0
    %1777 = vmatpush1.msra.mxu0 0.0
    %1778 = vmatprep.subr.mxu0 0.0
    %1779 = vmatpush1.msra.mxu0 0.0
    %1780 = vmatprep.subr.mxu0 0.0
    %1781 = vmatpush1.msra.mxu0 0.0
    %1782 = vmatprep.subr.mxu0 0.0
    %1783 = vmatpush1.msra.mxu0 0.0
    %1784 = vmatprep.subr.mxu0 0.0
    %1785 = vmatpush1.msra.mxu0 0.0
    %1786 = vmatprep.subr.mxu0 0.0
    %1787 = vmatpush1.msra.mxu0 0.0
    %1788 = vmatprep.subr.mxu0 0.0
    %1789 = vmatpush1.msra.mxu0 0.0
    %1790 = vmatprep.subr.mxu0 0.0
    %1791 = vmatpush1.msra.mxu0 0.0
    %1792 = vmatprep.subr.mxu0 0.0
    %1793 = vmatpush1.msra.mxu0 0.0
    %1794 = vmatprep.subr.mxu0 0.0
    %1795 = vmatpush1.msra.mxu0 0.0
    %1796 = vmatprep.subr.mxu0 0.0
    %1797 = vmatpush1.msra.mxu0 0.0
    %1798 = vmatprep.subr.mxu0 0.0
    %1799 = vmatpush1.msra.mxu0 0.0
    %1800 = vmatprep.subr.mxu0 0.0
    %1801 = vmatpush1.msra.mxu0 0.0
    %1802 = vmatprep.subr.mxu0 0.0
    %1803 = vmatpush1.msra.mxu0 0.0
    %1804 = vmatprep.subr.mxu0 0.0
    %1805 = vmatpush1.msra.mxu0 0.0
    %1806 = vmatprep.subr.mxu0 0.0
    %1807 = vmatpush1.msra.mxu0 0.0
    %1808 = vmatprep.subr.mxu0 0.0
    %1809 = vmatpush1.msra.mxu0 0.0
    %1810 = vmatprep.subr.mxu0 0.0
    %1811 = vmatpush1.msra.mxu0 0.0
    %1812 = vmatprep.subr.mxu0 0.0
    %1813 = vmatpush1.msra.mxu0 0.0
    %1814 = vmatprep.subr.mxu0 0.0
    %1815 = vmatpush1.msra.mxu0 0.0
    %1816 = vmatprep.subr.mxu0 0.0
    %1817 = vmatpush1.msra.mxu0 0.0
    %1818 = vmatprep.subr.mxu0 0.0
    %1819 = vmatpush1.msra.mxu0 0.0
    %1820 = vmatprep.subr.mxu0 0.0
    %1821 = vmatpush1.msra.mxu0 0.0
    %1822 = vmatprep.subr.mxu0 0.0
    %1823 = vmatpush1.msra.mxu0 0.0
    %1824 = vmatprep.subr.mxu0 0.0
    %1825 = vmatpush1.msra.mxu0 0.0
    %1826 = vmatprep.subr.mxu0 0.0
    %1827 = vmatpush1.msra.mxu0 0.0
    %1828 = vmatprep.subr.mxu0 0.0
    %1829 = vmatpush1.msra.mxu0 0.0
    %1830 = vmatprep.mubr.f32.mxu0 0.0
    %1831 = vmatmul.mubr.f32.gmra.mrb[0].mxu0 %v1764
    %v1832 = vpop.f32.mrb[0].mxu0
    %v1833 = vadd.f32 0.0, %v1832
    %v1834 = vpop.f32.mrb[0].mxu0
    %1835 = vdwg.mxu0
    %v1836 = vadd.f32 %v1763, %v1833
    %v1837 = vxor.u32 %v1836, 2147483648
    %v1838 = vmul.f32 %v1837, 1.442695
    %v1839 = vpow.pop %v1838
    %v1840 = vadd.f32 %v1839, 1.0
    %v1841 = vrcp.pop %v1840
    %v1842 = vmul.f32 1.0, %v1841
    %v1843 = vtanh.pop %v1836
    %v1844 = vmul.f32 %v1842, %v1751
    %1846 = vrot.lane.b32.xlu0 %v1843, 32
    %v1847 = vpop.permute.xlu0 %1846
    %v1849 = vmul.f32 %v1842, %v1847
    %1851 = vrot.lane.b32.xlu0 %v1849, 32
    %v1852 = vpop.permute.xlu0 %1851
    %v1854 = vadd.f32 %v1844, %v1852
    %v1855 = vtanh.pop %v1854
    %1857 = vrot.lane.b32.xlu0 %v1855, 32
    %v1858 = vpop.permute.xlu0 %1857
    %v1860 = vmul.f32 %v1842, %v1858
    %1862 = vrot.lane.b32.xlu0 %v1860, 64
    %v1863 = vpop.permute.xlu0 %1862
    %1865 = vst.msk [vmem:[%s878] sm:$0xff] %vm251, %v1863
    %v1866 = vld [vmem:[%s880] sm:$0xff]
    %v1867 = vsel %vm251, %v1863, 0
    %1869 = vmatprep.subr.mxu0 0.0
    %1870 = vmatpush1.msra.mxu0 %v1090
    %1871 = vmatprep.subr.mxu0 0.0
    %1872 = vmatpush1.msra.mxu0 %v1091
    %1873 = vmatprep.subr.mxu0 0.0
    %1874 = vmatpush1.msra.mxu0 %v1092
    %1875 = vmatprep.subr.mxu0 0.0
    %1876 = vmatpush1.msra.mxu0 %v1093
    %1877 = vmatprep.subr.mxu0 0.0
    %1878 = vmatpush1.msra.mxu0 0.0
    %1879 = vmatprep.subr.mxu0 0.0
    %1880 = vmatpush1.msra.mxu0 0.0
    %1881 = vmatprep.subr.mxu0 0.0
    %1882 = vmatpush1.msra.mxu0 0.0
    %1883 = vmatprep.subr.mxu0 0.0
    %1884 = vmatpush1.msra.mxu0 0.0
    %1885 = vmatprep.subr.mxu0 0.0
    %1886 = vmatpush1.msra.mxu0 0.0
    %1887 = vmatprep.subr.mxu0 0.0
    %1888 = vmatpush1.msra.mxu0 0.0
    %1889 = vmatprep.subr.mxu0 0.0
    %1890 = vmatpush1.msra.mxu0 0.0
    %1891 = vmatprep.subr.mxu0 0.0
    %1892 = vmatpush1.msra.mxu0 0.0
    %1893 = vmatprep.subr.mxu0 0.0
    %1894 = vmatpush1.msra.mxu0 0.0
    %1895 = vmatprep.subr.mxu0 0.0
    %1896 = vmatpush1.msra.mxu0 0.0
    %1897 = vmatprep.subr.mxu0 0.0
    %1898 = vmatpush1.msra.mxu0 0.0
    %1899 = vmatprep.subr.mxu0 0.0
    %1900 = vmatpush1.msra.mxu0 0.0
    %1901 = vmatprep.subr.mxu0 0.0
    %1902 = vmatpush1.msra.mxu0 0.0
    %1903 = vmatprep.subr.mxu0 0.0
    %1904 = vmatpush1.msra.mxu0 0.0
    %1905 = vmatprep.subr.mxu0 0.0
    %1906 = vmatpush1.msra.mxu0 0.0
    %1907 = vmatprep.subr.mxu0 0.0
    %1908 = vmatpush1.msra.mxu0 0.0
    %1909 = vmatprep.subr.mxu0 0.0
    %1910 = vmatpush1.msra.mxu0 0.0
    %1911 = vmatprep.subr.mxu0 0.0
    %1912 = vmatpush1.msra.mxu0 0.0
    %1913 = vmatprep.subr.mxu0 0.0
    %1914 = vmatpush1.msra.mxu0 0.0
    %1915 = vmatprep.subr.mxu0 0.0
    %1916 = vmatpush1.msra.mxu0 0.0
    %1917 = vmatprep.subr.mxu0 0.0
    %1918 = vmatpush1.msra.mxu0 0.0
    %1919 = vmatprep.subr.mxu0 0.0
    %1920 = vmatpush1.msra.mxu0 0.0
    %1921 = vmatprep.subr.mxu0 0.0
    %1922 = vmatpush1.msra.mxu0 0.0
    %1923 = vmatprep.subr.mxu0 0.0
    %1924 = vmatpush1.msra.mxu0 0.0
    %1925 = vmatprep.subr.mxu0 0.0
    %1926 = vmatpush1.msra.mxu0 0.0
    %1927 = vmatprep.subr.mxu0 0.0
    %1928 = vmatpush1.msra.mxu0 0.0
    %1929 = vmatprep.subr.mxu0 0.0
    %1930 = vmatpush1.msra.mxu0 0.0
    %1931 = vmatprep.subr.mxu0 0.0
    %1932 = vmatpush1.msra.mxu0 0.0
    %1933 = vmatprep.mubr.f32.mxu0 0.0
    %1934 = vmatmul.mubr.f32.gmra.mrb[0].mxu0 %v1867
    %v1935 = vpop.f32.mrb[0].mxu0
    %v1936 = vadd.f32 0.0, %v1935
    %v1937 = vpop.f32.mrb[0].mxu0
    %1938 = vdwg.mxu0
    %v1939 = vadd.f32 %v1866, %v1936
    %v1940 = vxor.u32 %v1939, 2147483648
    %v1941 = vmul.f32 %v1940, 1.442695
    %v1942 = vpow.pop %v1941
    %v1943 = vadd.f32 %v1942, 1.0
    %v1944 = vrcp.pop %v1943
    %v1945 = vmul.f32 1.0, %v1944
    %v1946 = vtanh.pop %v1939
    %v1947 = vmul.f32 %v1945, %v1854
    %1949 = vrot.lane.b32.xlu0 %v1946, 32
    %v1950 = vpop.permute.xlu0 %1949
    %v1952 = vmul.f32 %v1945, %v1950
    %1954 = vrot.lane.b32.xlu0 %v1952, 32
    %v1955 = vpop.permute.xlu0 %1954
    %v1957 = vadd.f32 %v1947, %v1955
    %v1958 = vtanh.pop %v1957
    %1960 = vrot.lane.b32.xlu0 %v1958, 32
    %v1961 = vpop.permute.xlu0 %1960
    %v1963 = vmul.f32 %v1945, %v1961
    %1965 = vrot.lane.b32.xlu0 %v1963, 64
    %v1966 = vpop.permute.xlu0 %1965
    %1968 = vst.msk [vmem:[%s983] sm:$0xff] %vm251, %v1966
    %v1969 = vld [vmem:[%s985] sm:$0xff]
    %v1970 = vsel %vm251, %v1966, 0
    %1972 = vmatprep.subr.mxu0 0.0
    %1973 = vmatpush1.msra.mxu0 %v1090
    %1974 = vmatprep.subr.mxu0 0.0
    %1975 = vmatpush1.msra.mxu0 %v1091
    %1976 = vmatprep.subr.mxu0 0.0
    %1977 = vmatpush1.msra.mxu0 %v1092
    %1978 = vmatprep.subr.mxu0 0.0
    %1979 = vmatpush1.msra.mxu0 %v1093
    %1980 = vmatprep.subr.mxu0 0.0
    %1981 = vmatpush1.msra.mxu0 0.0
    %1982 = vmatprep.subr.mxu0 0.0
    %1983 = vmatpush1.msra.mxu0 0.0
    %1984 = vmatprep.subr.mxu0 0.0
    %1985 = vmatpush1.msra.mxu0 0.0
    %1986 = vmatprep.subr.mxu0 0.0
    %1987 = vmatpush1.msra.mxu0 0.0
    %1988 = vmatprep.subr.mxu0 0.0
    %1989 = vmatpush1.msra.mxu0 0.0
    %1990 = vmatprep.subr.mxu0 0.0
    %1991 = vmatpush1.msra.mxu0 0.0
    %1992 = vmatprep.subr.mxu0 0.0
    %1993 = vmatpush1.msra.mxu0 0.0
    %1994 = vmatprep.subr.mxu0 0.0
    %1995 = vmatpush1.msra.mxu0 0.0
    %1996 = vmatprep.subr.mxu0 0.0
    %1997 = vmatpush1.msra.mxu0 0.0
    %1998 = vmatprep.subr.mxu0 0.0
    %1999 = vmatpush1.msra.mxu0 0.0
    %2000 = vmatprep.subr.mxu0 0.0
    %2001 = vmatpush1.msra.mxu0 0.0
    %2002 = vmatprep.subr.mxu0 0.0
    %2003 = vmatpush1.msra.mxu0 0.0
    %2004 = vmatprep.subr.mxu0 0.0
    %2005 = vmatpush1.msra.mxu0 0.0
    %2006 = vmatprep.subr.mxu0 0.0
    %2007 = vmatpush1.msra.mxu0 0.0
    %2008 = vmatprep.subr.mxu0 0.0
    %2009 = vmatpush1.msra.mxu0 0.0
    %2010 = vmatprep.subr.mxu0 0.0
    %2011 = vmatpush1.msra.mxu0 0.0
    %2012 = vmatprep.subr.mxu0 0.0
    %2013 = vmatpush1.msra.mxu0 0.0
    %2014 = vmatprep.subr.mxu0 0.0
    %2015 = vmatpush1.msra.mxu0 0.0
    %2016 = vmatprep.subr.mxu0 0.0
    %2017 = vmatpush1.msra.mxu0 0.0
    %2018 = vmatprep.subr.mxu0 0.0
    %2019 = vmatpush1.msra.mxu0 0.0
    %2020 = vmatprep.subr.mxu0 0.0
    %2021 = vmatpush1.msra.mxu0 0.0
    %2022 = vmatprep.subr.mxu0 0.0
    %2023 = vmatpush1.msra.mxu0 0.0
    %2024 = vmatprep.subr.mxu0 0.0
    %2025 = vmatpush1.msra.mxu0 0.0
    %2026 = vmatprep.subr.mxu0 0.0
    %2027 = vmatpush1.msra.mxu0 0.0
    %2028 = vmatprep.subr.mxu0 0.0
    %2029 = vmatpush1.msra.mxu0 0.0
    %2030 = vmatprep.subr.mxu0 0.0
    %2031 = vmatpush1.msra.mxu0 0.0
    %2032 = vmatprep.subr.mxu0 0.0
    %2033 = vmatpush1.msra.mxu0 0.0
    %2034 = vmatprep.subr.mxu0 0.0
    %2035 = vmatpush1.msra.mxu0 0.0
    %2036 = vmatprep.mubr.f32.mxu0 0.0
    %2037 = vmatmul.mubr.f32.gmra.mrb[0].mxu0 %v1970
    %v2038 = vpop.f32.mrb[0].mxu0
    %v2039 = vadd.f32 0.0, %v2038
    %v2040 = vpop.f32.mrb[0].mxu0
    %2041 = vdwg.mxu0
    %v2042 = vadd.f32 %v1969, %v2039
    %v2043 = vxor.u32 %v2042, 2147483648
    %v2044 = vmul.f32 %v2043, 1.442695
    %v2045 = vpow.pop %v2044
    %v2046 = vadd.f32 %v2045, 1.0
    %v2047 = vrcp.pop %v2046
    %v2048 = vmul.f32 1.0, %v2047
    %v2049 = vtanh.pop %v2042
    %v2050 = vmul.f32 %v2048, %v1957
    %2052 = vrot.lane.b32.xlu0 %v2049, 32
    %v2053 = vpop.permute.xlu0 %2052
    %v2055 = vmul.f32 %v2048, %v2053
    %2057 = vrot.lane.b32.xlu0 %v2055, 32
    %v2058 = vpop.permute.xlu0 %2057
    %v2060 = vadd.f32 %v2050, %v2058
    %v2061 = vtanh.pop %v2060
    %2063 = vrot.lane.b32.xlu0 %v2061, 32
    %v2064 = vpop.permute.xlu0 %2063
    %v2066 = vmul.f32 %v2048, %v2064
    %2068 = vrot.lane.b32.xlu0 %v2066, 64
    %v2069 = vpop.permute.xlu0 %2068
    %2071 = vst.msk [vmem:[%s1088] sm:$0xff] %vm251, %v2069
    %v2072 = vld [vmem:[#allocation3] sm:$0xff]
    %v2073 = vld [vmem:[#allocation3 + $0x8] sm:$0xff]
    %v2074 = vld [vmem:[#allocation3 + $0x10] sm:$0xff]
    %v2075 = vld [vmem:[#allocation3 + $0x18] sm:$0xff]
    %v2076 = vld [vmem:[#allocation3 + $0x20] sm:$0xff]
    %v2077 = vld [vmem:[#allocation3 + $0x28] sm:$0xff]
    %v2078 = vld [vmem:[#allocation3 + $0x30] sm:$0xff]
    %v2079 = vld [vmem:[#allocation3 + $0x38] sm:$0xff]
    %v2080 = vld [vmem:[%s1] sm:$0xff]
    %v2081 = vld [vmem:[%s1 + $0x8] sm:$0xff]
    %v2082 = vld [vmem:[%s1 + $0x10] sm:$0xff]
    %v2083 = vld [vmem:[%s1 + $0x18] sm:$0xff]
    %v2084 = vld [vmem:[%s1 + $0x20] sm:$0xff]
    %v2085 = vld [vmem:[%s1 + $0x28] sm:$0xff]
    %v2086 = vld [vmem:[%s1 + $0x30] sm:$0xff]
    %v2087 = vld [vmem:[%s1 + $0x38] sm:$0xff]
    %2089 = vset.pattern.permute.xlu0 0
    %2090 = vperm.xlu0 %2089, %v2080
    %v2091 = vpop.permute.xlu0 %2090
    %2094 = vset.pattern.permute.xlu0 0
    %2095 = vperm.xlu0 %2094, %v2081
    %v2096 = vpop.permute.xlu0 %2095
    %2099 = vset.pattern.permute.xlu0 0
    %2100 = vperm.xlu0 %2099, %v2082
    %v2101 = vpop.permute.xlu0 %2100
    %2104 = vset.pattern.permute.xlu0 0
    %2105 = vperm.xlu0 %2104, %v2083
    %v2106 = vpop.permute.xlu0 %2105
    %2109 = vset.pattern.permute.xlu0 0
    %2110 = vperm.xlu0 %2109, %v2084
    %v2111 = vpop.permute.xlu0 %2110
    %2114 = vset.pattern.permute.xlu0 0
    %2115 = vperm.xlu0 %2114, %v2085
    %v2116 = vpop.permute.xlu0 %2115
    %2119 = vset.pattern.permute.xlu0 0
    %2120 = vperm.xlu0 %2119, %v2086
    %v2121 = vpop.permute.xlu0 %2120
    %2124 = vset.pattern.permute.xlu0 0
    %2125 = vperm.xlu0 %2124, %v2087
    %v2126 = vpop.permute.xlu0 %2125
    %v2128 = vmul.f32 %v2072, %v2091
    %v2129 = vmul.f32 %v2073, %v2096
    %v2130 = vmul.f32 %v2074, %v2101
    %v2131 = vmul.f32 %v2075, %v2106
    %v2132 = vmul.f32 %v2076, %v2111
    %v2133 = vmul.f32 %v2077, %v2116
    %v2134 = vmul.f32 %v2078, %v2121
    %v2135 = vmul.f32 %v2079, %v2126
    %v2136 = vld [vmem:[%s8] sm:$0xff]
    %v2137 = vld [vmem:[%s8 + $0x8] sm:$0xff]
    %v2138 = vld [vmem:[%s8 + $0x10] sm:$0xff]
    %v2139 = vld [vmem:[%s8 + $0x18] sm:$0xff]
    %v2140 = vld [vmem:[%s9] sm:$0x1]
    %v2142 = vlaneseq
    %v2143 = vshrl.u32 %v2142, 7
    %v2144 = vsub.s32 0, %v2143
    %v2145 = vrot.slane %v2140, %v2144
    %v2148 = vsel %vm251, %v2128, 0
    %v2151 = vsel %vm251, %v2129, 0
    %v2154 = vsel %vm251, %v2130, 0
    %v2157 = vsel %vm251, %v2131, 0
    %v2160 = vsel %vm251, %v2132, 0
    %v2163 = vsel %vm251, %v2133, 0
    %v2166 = vsel %vm251, %v2134, 0
    %v2169 = vsel %vm251, %v2135, 0
    %2171 = vmatprep.subr.mxu0 0.0
    %2172 = vmatpush1.msra.mxu0 %v2136
    %2173 = vmatprep.subr.mxu0 0.0
    %2174 = vmatpush1.msra.mxu0 %v2137
    %2175 = vmatprep.subr.mxu0 0.0
    %2176 = vmatpush1.msra.mxu0 %v2138
    %2177 = vmatprep.subr.mxu0 0.0
    %2178 = vmatpush1.msra.mxu0 %v2139
    %2179 = vmatprep.subr.mxu0 0.0
    %2180 = vmatpush1.msra.mxu0 0.0
    %2181 = vmatprep.subr.mxu0 0.0
    %2182 = vmatpush1.msra.mxu0 0.0
    %2183 = vmatprep.subr.mxu0 0.0
    %2184 = vmatpush1.msra.mxu0 0.0
    %2185 = vmatprep.subr.mxu0 0.0
    %2186 = vmatpush1.msra.mxu0 0.0
    %2187 = vmatprep.subr.mxu0 0.0
    %2188 = vmatpush1.msra.mxu0 0.0
    %2189 = vmatprep.subr.mxu0 0.0
    %2190 = vmatpush1.msra.mxu0 0.0
    %2191 = vmatprep.subr.mxu0 0.0
    %2192 = vmatpush1.msra.mxu0 0.0
    %2193 = vmatprep.subr.mxu0 0.0
    %2194 = vmatpush1.msra.mxu0 0.0
    %2195 = vmatprep.subr.mxu0 0.0
    %2196 = vmatpush1.msra.mxu0 0.0
    %2197 = vmatprep.subr.mxu0 0.0
    %2198 = vmatpush1.msra.mxu0 0.0
    %2199 = vmatprep.subr.mxu0 0.0
    %2200 = vmatpush1.msra.mxu0 0.0
    %2201 = vmatprep.subr.mxu0 0.0
    %2202 = vmatpush1.msra.mxu0 0.0
    %2203 = vmatprep.subr.mxu0 0.0
    %2204 = vmatpush1.msra.mxu0 0.0
    %2205 = vmatprep.subr.mxu0 0.0
    %2206 = vmatpush1.msra.mxu0 0.0
    %2207 = vmatprep.subr.mxu0 0.0
    %2208 = vmatpush1.msra.mxu0 0.0
    %2209 = vmatprep.subr.mxu0 0.0
    %2210 = vmatpush1.msra.mxu0 0.0
    %2211 = vmatprep.subr.mxu0 0.0
    %2212 = vmatpush1.msra.mxu0 0.0
    %2213 = vmatprep.subr.mxu0 0.0
    %2214 = vmatpush1.msra.mxu0 0.0
    %2215 = vmatprep.subr.mxu0 0.0
    %2216 = vmatpush1.msra.mxu0 0.0
    %2217 = vmatprep.subr.mxu0 0.0
    %2218 = vmatpush1.msra.mxu0 0.0
    %2219 = vmatprep.subr.mxu0 0.0
    %2220 = vmatpush1.msra.mxu0 0.0
    %2221 = vmatprep.subr.mxu0 0.0
    %2222 = vmatpush1.msra.mxu0 0.0
    %2223 = vmatprep.subr.mxu0 0.0
    %2224 = vmatpush1.msra.mxu0 0.0
    %2225 = vmatprep.subr.mxu0 0.0
    %2226 = vmatpush1.msra.mxu0 0.0
    %2227 = vmatprep.subr.mxu0 0.0
    %2228 = vmatpush1.msra.mxu0 0.0
    %2229 = vmatprep.subr.mxu0 0.0
    %2230 = vmatpush1.msra.mxu0 0.0
    %2231 = vmatprep.subr.mxu0 0.0
    %2232 = vmatpush1.msra.mxu0 0.0
    %2233 = vmatprep.subr.mxu0 0.0
    %2234 = vmatpush1.msra.mxu0 0.0
    %2235 = vmatprep.mubr.f32.mxu0 0.0
    %2236 = vmatmul.mubr.f32.gmra.mrb[0].mxu0 %v2148
    %v2237 = vpop.f32.mrb[0].mxu0
    %v2238 = vadd.f32 %v2145, %v2237
    %v2239 = vpop.f32.mrb[0].mxu0
    %2240 = vmatprep.mubr.f32.mxu0 0.0
    %2241 = vmatmul.mubr.f32.gmra.mrb[0].mxu0 %v2151
    %v2242 = vpop.f32.mrb[0].mxu0
    %v2243 = vadd.f32 %v2145, %v2242
    %v2244 = vpop.f32.mrb[0].mxu0
    %2245 = vmatprep.mubr.f32.mxu0 0.0
    %2246 = vmatmul.mubr.f32.gmra.mrb[0].mxu0 %v2154
    %v2247 = vpop.f32.mrb[0].mxu0
    %v2248 = vadd.f32 %v2145, %v2247
    %v2249 = vpop.f32.mrb[0].mxu0
    %2250 = vmatprep.mubr.f32.mxu0 0.0
    %2251 = vmatmul.mubr.f32.gmra.mrb[0].mxu0 %v2157
    %v2252 = vpop.f32.mrb[0].mxu0
    %v2253 = vadd.f32 %v2145, %v2252
    %v2254 = vpop.f32.mrb[0].mxu0
    %2255 = vmatprep.mubr.f32.mxu0 0.0
    %2256 = vmatmul.mubr.f32.gmra.mrb[0].mxu0 %v2160
    %v2257 = vpop.f32.mrb[0].mxu0
    %v2258 = vadd.f32 %v2145, %v2257
    %v2259 = vpop.f32.mrb[0].mxu0
    %2260 = vmatprep.mubr.f32.mxu0 0.0
    %2261 = vmatmul.mubr.f32.gmra.mrb[0].mxu0 %v2163
    %v2262 = vpop.f32.mrb[0].mxu0
    %v2263 = vadd.f32 %v2145, %v2262
    %v2264 = vpop.f32.mrb[0].mxu0
    %2265 = vmatprep.mubr.f32.mxu0 0.0
    %2266 = vmatmul.mubr.f32.gmra.mrb[0].mxu0 %v2166
    %v2267 = vpop.f32.mrb[0].mxu0
    %v2268 = vadd.f32 %v2145, %v2267
    %v2269 = vpop.f32.mrb[0].mxu0
    %2270 = vmatprep.mubr.f32.mxu0 0.0
    %2271 = vmatmul.mubr.f32.gmra.mrb[0].mxu0 %v2169
    %v2272 = vpop.f32.mrb[0].mxu0
    %v2273 = vadd.f32 %v2145, %v2272
    %v2274 = vpop.f32.mrb[0].mxu0
    %2275 = vdwg.mxu0
    %2276 = vst [vmem:[#allocation12] sm:$0xff] %v2238
    %2277 = vst [vmem:[#allocation12 + $0x8] sm:$0xff] %v2243
    %2278 = vst [vmem:[#allocation12 + $0x10] sm:$0xff] %v2248
    %2279 = vst [vmem:[#allocation12 + $0x18] sm:$0xff] %v2253
    %2280 = vst [vmem:[#allocation12 + $0x20] sm:$0xff] %v2258
    %2281 = vst [vmem:[#allocation12 + $0x28] sm:$0xff] %v2263
    %2282 = vst [vmem:[#allocation12 + $0x30] sm:$0xff] %v2268
    %2283 = vst [vmem:[#allocation12 + $0x38] sm:$0xff] %v2273
    // Predicated region
    $region58: #{tpu_custom_call.1} parent=1 // pred_check
      _
    $region59: #{tpu_custom_call.1} parent=1 // pred_check_branch
      %2285 = sbr.rel (0) target = $region61
    $region60: #{tpu_custom_call.1} parent=1 // pred_region
      %s2287 = ssub.s32 1024, 1024
      %2288 = vsyncadd [#allocation6], %s2287
      %s2289 = sshll.u32 [#allocation12], 4
      %s2290 = int_to_ptr.vmem [resolvable:$true] %s2289
      %2295 = dma.vmem_to_hbm [thread:$0]  %s2290, 1024, %s10, [#allocation6], 128, 128, 8
    $region61: #{tpu_custom_call.1} parent=1 // pred_fallthru
      _
    // Predicated region
    $region62: #{tpu_custom_call.1} parent=1 // pred_check
      _
    $region63: #{tpu_custom_call.1} parent=1 // pred_check_branch
      %2297 = sbr.rel (0) target = $region65
    $region64: #{tpu_custom_call.1} parent=1 // pred_region
      %2298 = dma.done [#allocation6], 1024
    $region65: #{tpu_custom_call.1} parent=1 // pred_fallthru
      _
    %2299 = vsyncpa [#allocation5], 1
    %2300 = vsyncpa [#allocation8], 1
    %2301 = vsyncpa [#allocation11], 1
    %2302 = vsyncpa [#allocation6], 1

</llo_original>
